<compile_context>
chip_gen: v7x
topology: tpu7x:2x2x1
jax: 0.10.0
libtpu: 0.0.40
codegen_flags: <defaults>
</compile_context>

<pallas_src>
import jax
import jax.numpy as jnp
from jax.experimental import pallas as pl
from jax.experimental.pallas import tpu as pltpu

# Small, TPU-friendly hyperparameters consistent with the module structure.
N_EMBD = 128          # hidden size (reference uses 384; scaled down)
N_HEAD = 4            # number of attention heads (reference uses 6)
HEAD_SIZE = N_EMBD // N_HEAD
BLOCK_SIZE = 128      # sequence length used here (reference block_size=256)
LN_EPS = 1e-5
NEG_INF = -1e30       # large finite negative (robust vs. -inf + max-subtract)


def _layer_norm(x, gamma, beta):
    mu = jnp.mean(x, axis=-1, keepdims=True)
    var = jnp.mean((x - mu) ** 2, axis=-1, keepdims=True)
    return (x - mu) * jax.lax.rsqrt(var + LN_EPS) * gamma + beta


def block_kernel(x_ref,                 # (NB, T, C) f32
                 mask_ref,              # (T, T) f32 additive causal mask
                 g1_ref, b1_ref,        # (1, C) f32
                 wqkv_ref,              # (C, 3C) bf16  [Wq*scale | Wk | Wv]
                 wp_ref, bp_ref,        # (C, C) bf16, (1, C) f32
                 g2_ref, b2_ref,        # (1, C) f32
                 w1_ref, bb1_ref,       # (C, 4C) bf16, (1, 4C) f32
                 w2_ref, bb2_ref,       # (4C, C) bf16, (1, C) f32
                 o_ref,                 # (NB, T, C) f32
                 att_scr):              # VMEM (NB*T, C) f32 scratch
    NB, T, C = x_ref.shape
    H = N_HEAD
    hs = C // H
    M = NB * T

    x = x_ref[...].reshape(M, C)                                   # f32

    # ---- LayerNorm 1 (f32) ----
    h1 = _layer_norm(x, g1_ref[0], b1_ref[0])

    # ---- fused QKV projection: one lane-aligned (M, C) @ (C, 3C) matmul ----
    qkv = jnp.dot(h1.astype(jnp.bfloat16), wqkv_ref[...],
                  preferred_element_type=jnp.float32)              # (M, 3C)
    q = qkv[:, 0 * C:1 * C]            # pre-scaled by C**-0.5 (folded into Wq)
    k = qkv[:, 1 * C:2 * C]
    v = qkv[:, 2 * C:3 * C]

    # ---- split heads: (M, C) -> (H*NB, T, hs), head-major ----
    def split_heads(a):
        a3 = a.reshape(NB, T, C)
        return jnp.concatenate(
            [a3[:, :, h * hs:(h + 1) * hs] for h in range(H)], axis=0)

    qh = split_heads(q).astype(jnp.bfloat16)
    kh = split_heads(k).astype(jnp.bfloat16)
    vh = split_heads(v).astype(jnp.bfloat16)

    # ---- causal attention, batched over (head, batch) ----
    wei = jnp.einsum('gtd,gsd->gts', qh, kh,
                     preferred_element_type=jnp.float32)           # (G, T, T)
    wei = wei + mask_ref[...][None, :, :]                          # causal mask
    wei = wei - jnp.max(wei, axis=-1, keepdims=True)
    p = jnp.exp(wei)
    denom = jnp.sum(p, axis=-1, keepdims=True)                     # (G, T, 1)
    att = jnp.einsum('gts,gsd->gtd', p.astype(jnp.bfloat16), vh,
                     preferred_element_type=jnp.float32)           # (G, T, hs)
    # Normalize AFTER the PV matmul (row-wise scalar commutes with the matmul):
    att = att * pl.reciprocal(denom, approx=True)
    # dropout on attention weights: identity (eval mode)

    # ---- merge heads lane-wise into scratch, then one (M,C)@(C,C) matmul ----
    for h in range(H):
        att_scr[:, h * hs:(h + 1) * hs] = att[h * NB:(h + 1) * NB].reshape(M, hs)
    sa = jnp.dot(att_scr[...].astype(jnp.bfloat16), wp_ref[...],
                 preferred_element_type=jnp.float32) + bp_ref[0]
    # dropout after projection: identity (eval mode)
    x1 = x + sa

    # ---- LayerNorm 2 + feed-forward ----
    h2 = _layer_norm(x1, g2_ref[0], b2_ref[0])
    ff = jnp.dot(h2.astype(jnp.bfloat16), w1_ref[...],
                 preferred_element_type=jnp.float32) + bb1_ref[0]
    ff = jnp.maximum(ff, 0.0)
    ff = jnp.dot(ff.astype(jnp.bfloat16), w2_ref[...],
                 preferred_element_type=jnp.float32) + bb2_ref[0]
    # dropout in feed-forward: identity (eval mode)

    o_ref[...] = (x1 + ff).reshape(NB, T, C)


def pack_params(params, T=BLOCK_SIZE):
    """One-time weight packing + mask construction (outside the jitted forward)."""
    (g1, b1, wq, wk, wv, wp, bp, g2, b2, w1, bb1, w2, bb2) = params
    C = wq.shape[0]
    scale = C ** (-0.5)    # matches reference: uses n_embd, not head_size
    # [Q heads | K heads | V heads] packing -> lane-aligned slices in-kernel.
    wqkv = jnp.concatenate([wq * scale, wk, wv], axis=1).astype(jnp.bfloat16)
    wpb = wp.astype(jnp.bfloat16)
    w1b = w1.astype(jnp.bfloat16)
    w2b = w2.astype(jnp.bfloat16)
    idx = jnp.arange(T)
    mask = jnp.where(idx[None, :] <= idx[:, None], 0.0, NEG_INF).astype(jnp.float32)
    return (mask, g1, b1, wqkv, wpb, bp, g2, b2, w1b, bb1, w2b, bb2)


@jax.jit
def transformer_block(x, packed):
    (mask, g1, b1, wqkv, wpb, bp, g2, b2, w1b, bb1, w2b, bb2) = packed
    B, T, C = x.shape
    H = N_HEAD
    hs = C // H

    # Block batch rows per grid step: keep at most 2 "parallel" steps so each
    # of v7x's two TensorCores gets one, while maximizing M = NB*T per matmul.
    # (On single-TC v5e/v6e, num_steps=1 would give M = B*T; kept at 2 here.)
    num_steps = min(B, 2)
    assert B % num_steps == 0
    NB = B // num_steps

    seq_spec = pl.BlockSpec((NB, T, C), lambda s: (s, 0, 0))

    def full(a):
        nd = a.ndim
        return pl.BlockSpec(a.shape, lambda s, _nd=nd: (0,) * _nd)

    weight_args = (mask, g1, b1, wqkv, wpb, bp, g2, b2, w1b, bb1, w2b, bb2)
    in_specs = [seq_spec] + [full(a) for a in weight_args]

    flops = int(
        2 * B * T * (3 * C * C)            # QKV projection
        + 2 * B * H * T * T * hs * 2       # attention scores + PV
        + 2 * B * T * C * C                # output projection
        + 2 * B * T * (2 * 4 * C * C))     # feed-forward (two matmuls)
    bytes_accessed = int(
        2 * x.size * 4
        + sum(int(a.size) * a.dtype.itemsize for a in weight_args))
    transcendentals = int(B * H * T * T)

    return pl.pallas_call(
        block_kernel,
        out_shape=jax.ShapeDtypeStruct((B, T, C), jnp.float32),
        grid_spec=pltpu.PrefetchScalarGridSpec(
            num_scalar_prefetch=0,
            grid=(num_steps,),
            in_specs=in_specs,
            out_specs=seq_spec,
            scratch_shapes=[pltpu.VMEM((NB * T, C), jnp.float32)],
        ),
        compiler_params=pltpu.CompilerParams(
            dimension_semantics=("parallel",)),
        cost_estimate=pl.CostEstimate(
            flops=flops,
            transcendentals=transcendentals,
            bytes_accessed=bytes_accessed),
    )(x, *weight_args)


def init_params(key, C):
    ks = jax.random.split(key, 8)
    std = 0.02
    wq = jax.random.normal(ks[0], (C, C), jnp.float32) * std
    wk = jax.random.normal(ks[1], (C, C), jnp.float32) * std
    wv = jax.random.normal(ks[2], (C, C), jnp.float32) * std
    wp = jax.random.normal(ks[3], (C, C), jnp.float32) * std
    bp = jax.random.normal(ks[4], (1, C), jnp.float32) * std
    w1 = jax.random.normal(ks[5], (C, 4 * C), jnp.float32) * std
    bb1 = jax.random.normal(ks[6], (1, 4 * C), jnp.float32) * std
    w2 = jax.random.normal(ks[7], (4 * C, C), jnp.float32) * std
    bb2 = jnp.zeros((1, C), jnp.float32)
    g1 = jnp.ones((1, C), jnp.float32)
    b1 = jnp.zeros((1, C), jnp.float32)
    g2 = jnp.ones((1, C), jnp.float32)
    b2 = jnp.zeros((1, C), jnp.float32)
    return (g1, b1, wq, wk, wv, wp, bp, g2, b2, w1, bb1, w2, bb2)


def reference_block(x, params):
    """Pure-JAX f32 reference reproducing the PyTorch forward (eval mode)."""
    (g1, b1, wq, wk, wv, wp, bp, g2, b2, w1, bb1, w2, bb2) = params
    B, T, C = x.shape
    hs = C // N_HEAD

    def ln(h, g, b):
        mu = jnp.mean(h, axis=-1, keepdims=True)
        var = jnp.mean((h - mu) ** 2, axis=-1, keepdims=True)
        return (h - mu) / jnp.sqrt(var + LN_EPS) * g[0] + b[0]

    h1 = ln(x, g1, b1)
    q = h1 @ wq
    k = h1 @ wk
    v = h1 @ wv
    mask = jnp.tril(jnp.ones((T, T), bool))
    outs = []
    for h in range(N_HEAD):
        qh, kh, vh = (a[..., h * hs:(h + 1) * hs] for a in (q, k, v))
        wei = jnp.einsum('btd,bsd->bts', qh, kh) * (C ** -0.5)
        wei = jnp.where(mask, wei, -jnp.inf)
        wei = jax.nn.softmax(wei, axis=-1)
        outs.append(jnp.einsum('bts,bsd->btd', wei, vh))
    att = jnp.concatenate(outs, axis=-1)
    x1 = x + att @ wp + bp[0]
    h2 = ln(x1, g2, b2)
    ff = jax.nn.relu(h2 @ w1 + bb1[0]) @ w2 + bb2[0]
    return x1 + ff


if __name__ == "__main__":
    key = jax.random.PRNGKey(0)
    kx, kp = jax.random.split(key)
    B, T, C = 2, BLOCK_SIZE, N_EMBD
    x = jax.random.normal(kx, (B, T, C), jnp.float32)
    params = init_params(kp, C)

    # One-time packing outside the jitted forward (not on the per-call path).
    packed = jax.block_until_ready(pack_params(params, T))

    out = transformer_block(x, packed)
    out = jax.block_until_ready(out)

    ref = reference_block(x, params)
    assert out.shape == (B, T, C)
    max_err = float(jnp.max(jnp.abs(out - ref)))
    # Tolerance reflects bf16 MXU inputs (f32 accumulation) + approx reciprocal.
    assert max_err < 2e-2, f"max err {max_err}"
    print("KERNEL_OK")
</pallas_src>

<mosaic_0001>
module attributes {stable_mosaic.version = 11 : i64} {
  func.func @block_kernel(%arg0: i32, %arg1: memref<1x128x128xf32, #tpu.memory_space<vmem>>, %arg2: memref<128x128xf32, #tpu.memory_space<vmem>>, %arg3: memref<1x128xf32, #tpu.memory_space<vmem>>, %arg4: memref<1x128xf32, #tpu.memory_space<vmem>>, %arg5: memref<128x384xbf16, #tpu.memory_space<vmem>>, %arg6: memref<128x128xbf16, #tpu.memory_space<vmem>>, %arg7: memref<1x128xf32, #tpu.memory_space<vmem>>, %arg8: memref<1x128xf32, #tpu.memory_space<vmem>>, %arg9: memref<1x128xf32, #tpu.memory_space<vmem>>, %arg10: memref<128x512xbf16, #tpu.memory_space<vmem>>, %arg11: memref<1x512xf32, #tpu.memory_space<vmem>>, %arg12: memref<512x128xbf16, #tpu.memory_space<vmem>>, %arg13: memref<1x128xf32, #tpu.memory_space<vmem>>, %arg14: memref<1x128x128xf32, #tpu.memory_space<vmem>>, %arg15: memref<128x128xf32, #tpu.memory_space<vmem>>) attributes {dimension_semantics = [#tpu.dimension_semantics<parallel>], iteration_bounds = array<i64: 2>, scalar_prefetch = 0 : i64, scratch_operands = 1 : i64, tpu.core_type = #tpu.core_type<tc>, window_params = [{transform_indices = @transform_0, window_bounds = array<i64: 1, 128, 128>}, {pipeline_mode = #tpu.pipeline_mode<synchronous>, transform_indices = @transform_1, window_bounds = array<i64: 128, 128>}, {pipeline_mode = #tpu.pipeline_mode<synchronous>, transform_indices = @transform_2, window_bounds = array<i64: 1, 128>}, {pipeline_mode = #tpu.pipeline_mode<synchronous>, transform_indices = @transform_3, window_bounds = array<i64: 1, 128>}, {pipeline_mode = #tpu.pipeline_mode<synchronous>, transform_indices = @transform_4, window_bounds = array<i64: 128, 384>}, {pipeline_mode = #tpu.pipeline_mode<synchronous>, transform_indices = @transform_5, window_bounds = array<i64: 128, 128>}, {pipeline_mode = #tpu.pipeline_mode<synchronous>, transform_indices = @transform_6, window_bounds = array<i64: 1, 128>}, {pipeline_mode = #tpu.pipeline_mode<synchronous>, transform_indices = @transform_7, window_bounds = array<i64: 1, 128>}, {pipeline_mode = #tpu.pipeline_mode<synchronous>, transform_indices = @transform_8, window_bounds = array<i64: 1, 128>}, {pipeline_mode = #tpu.pipeline_mode<synchronous>, transform_indices = @transform_9, window_bounds = array<i64: 128, 512>}, {pipeline_mode = #tpu.pipeline_mode<synchronous>, transform_indices = @transform_10, window_bounds = array<i64: 1, 512>}, {pipeline_mode = #tpu.pipeline_mode<synchronous>, transform_indices = @transform_11, window_bounds = array<i64: 512, 128>}, {pipeline_mode = #tpu.pipeline_mode<synchronous>, transform_indices = @transform_12, window_bounds = array<i64: 1, 128>}, {transform_indices = @transform_13, window_bounds = array<i64: 1, 128, 128>}]} {
    %c0 = arith.constant 0 : index
    %c0_0 = arith.constant 0 : index
    %c0_1 = arith.constant 0 : index
    %0 = vector.load %arg1[%c0, %c0_0, %c0_1] : memref<1x128x128xf32, #tpu.memory_space<vmem>>, vector<1x128x128xf32>
    %1 = vector.shape_cast %0 : vector<1x128x128xf32> to vector<128x128xf32>
    %c0_2 = arith.constant 0 : index
    %c0_3 = arith.constant 0 : index
    %2 = vector.load %arg3[%c0_2, %c0_3] : memref<1x128xf32, #tpu.memory_space<vmem>>, vector<1x128xf32>
    %3 = vector.shape_cast %2 : vector<1x128xf32> to vector<128xf32>
    %c0_4 = arith.constant 0 : index
    %c0_5 = arith.constant 0 : index
    %4 = vector.load %arg4[%c0_4, %c0_5] : memref<1x128xf32, #tpu.memory_space<vmem>>, vector<1x128xf32>
    %5 = vector.shape_cast %4 : vector<1x128xf32> to vector<128xf32>
    %cst = arith.constant dense<0.000000e+00> : vector<128xf32>
    %6 = vector.multi_reduction <add>, %1, %cst [1] : vector<128x128xf32> to vector<128xf32>
    %7 = vector.shape_cast %6 : vector<128xf32> to vector<128x1xf32>
    %cst_6 = arith.constant 1.280000e+02 : f32
    %8 = vector.broadcast %cst_6 : f32 to vector<128x1xf32>
    %9 = arith.divf %7, %8 : vector<128x1xf32>
    %10 = vector.broadcast %9 : vector<128x1xf32> to vector<128x128xf32>
    %11 = arith.subf %1, %10 : vector<128x128xf32>
    %12 = arith.mulf %11, %11 : vector<128x128xf32>
    %cst_7 = arith.constant dense<0.000000e+00> : vector<128xf32>
    %13 = vector.multi_reduction <add>, %12, %cst_7 [1] : vector<128x128xf32> to vector<128xf32>
    %14 = vector.shape_cast %13 : vector<128xf32> to vector<128x1xf32>
    %cst_8 = arith.constant 1.280000e+02 : f32
    %15 = vector.broadcast %cst_8 : f32 to vector<128x1xf32>
    %16 = arith.divf %14, %15 : vector<128x1xf32>
    %17 = vector.broadcast %9 : vector<128x1xf32> to vector<128x128xf32>
    %18 = arith.subf %1, %17 : vector<128x128xf32>
    %cst_9 = arith.constant 9.99999974E-6 : f32
    %19 = vector.broadcast %cst_9 : f32 to vector<128x1xf32>
    %20 = arith.addf %16, %19 : vector<128x1xf32>
    %21 = math.rsqrt %20 : vector<128x1xf32>
    %22 = vector.broadcast %21 : vector<128x1xf32> to vector<128x128xf32>
    %23 = arith.mulf %18, %22 : vector<128x128xf32>
    %24 = vector.shape_cast %3 : vector<128xf32> to vector<1x128xf32>
    %25 = vector.broadcast %24 : vector<1x128xf32> to vector<128x128xf32>
    %26 = arith.mulf %23, %25 : vector<128x128xf32>
    %27 = vector.shape_cast %5 : vector<128xf32> to vector<1x128xf32>
    %28 = vector.broadcast %27 : vector<1x128xf32> to vector<128x128xf32>
    %29 = arith.addf %26, %28 : vector<128x128xf32>
    %30 = arith.truncf %29 : vector<128x128xf32> to vector<128x128xbf16>
    %c0_10 = arith.constant 0 : index
    %c0_11 = arith.constant 0 : index
    %31 = vector.load %arg5[%c0_10, %c0_11] : memref<128x384xbf16, #tpu.memory_space<vmem>>, vector<128x384xbf16>
    %cst_12 = arith.constant dense<0.000000e+00> : vector<128x384xf32>
    %32 = tpu.matmul %30, %31, %cst_12 {dimension_numbers = #tpu.dot_dimension_numbers<[1], [0], [0], [1], [0, 0, 1, 1], [], []>} : vector<128x128xbf16>, vector<128x384xbf16>, vector<128x384xf32> -> vector<128x384xf32>
    %33 = vector.extract_strided_slice %32 {offsets = [0, 0], sizes = [128, 128], strides = [1, 1]} : vector<128x384xf32> to vector<128x128xf32>
    %34 = vector.extract_strided_slice %32 {offsets = [0, 128], sizes = [128, 128], strides = [1, 1]} : vector<128x384xf32> to vector<128x128xf32>
    %35 = vector.extract_strided_slice %32 {offsets = [0, 256], sizes = [128, 128], strides = [1, 1]} : vector<128x384xf32> to vector<128x128xf32>
    %36 = vector.shape_cast %33 : vector<128x128xf32> to vector<1x128x128xf32>
    %37 = vector.extract_strided_slice %36 {offsets = [0, 0, 0], sizes = [1, 128, 32], strides = [1, 1, 1]} : vector<1x128x128xf32> to vector<1x128x32xf32>
    %38 = vector.extract_strided_slice %36 {offsets = [0, 0, 32], sizes = [1, 128, 32], strides = [1, 1, 1]} : vector<1x128x128xf32> to vector<1x128x32xf32>
    %39 = vector.extract_strided_slice %36 {offsets = [0, 0, 64], sizes = [1, 128, 32], strides = [1, 1, 1]} : vector<1x128x128xf32> to vector<1x128x32xf32>
    %40 = vector.extract_strided_slice %36 {offsets = [0, 0, 96], sizes = [1, 128, 32], strides = [1, 1, 1]} : vector<1x128x128xf32> to vector<1x128x32xf32>
    %41 = tpu.concatenate %37, %38, %39, %40 in 0 : vector<1x128x32xf32>, vector<1x128x32xf32>, vector<1x128x32xf32>, vector<1x128x32xf32> -> vector<4x128x32xf32>
    %42 = arith.truncf %41 : vector<4x128x32xf32> to vector<4x128x32xbf16>
    %43 = vector.shape_cast %34 : vector<128x128xf32> to vector<1x128x128xf32>
    %44 = vector.extract_strided_slice %43 {offsets = [0, 0, 0], sizes = [1, 128, 32], strides = [1, 1, 1]} : vector<1x128x128xf32> to vector<1x128x32xf32>
    %45 = vector.extract_strided_slice %43 {offsets = [0, 0, 32], sizes = [1, 128, 32], strides = [1, 1, 1]} : vector<1x128x128xf32> to vector<1x128x32xf32>
    %46 = vector.extract_strided_slice %43 {offsets = [0, 0, 64], sizes = [1, 128, 32], strides = [1, 1, 1]} : vector<1x128x128xf32> to vector<1x128x32xf32>
    %47 = vector.extract_strided_slice %43 {offsets = [0, 0, 96], sizes = [1, 128, 32], strides = [1, 1, 1]} : vector<1x128x128xf32> to vector<1x128x32xf32>
    %48 = tpu.concatenate %44, %45, %46, %47 in 0 : vector<1x128x32xf32>, vector<1x128x32xf32>, vector<1x128x32xf32>, vector<1x128x32xf32> -> vector<4x128x32xf32>
    %49 = arith.truncf %48 : vector<4x128x32xf32> to vector<4x128x32xbf16>
    %50 = vector.shape_cast %35 : vector<128x128xf32> to vector<1x128x128xf32>
    %51 = vector.extract_strided_slice %50 {offsets = [0, 0, 0], sizes = [1, 128, 32], strides = [1, 1, 1]} : vector<1x128x128xf32> to vector<1x128x32xf32>
    %52 = vector.extract_strided_slice %50 {offsets = [0, 0, 32], sizes = [1, 128, 32], strides = [1, 1, 1]} : vector<1x128x128xf32> to vector<1x128x32xf32>
    %53 = vector.extract_strided_slice %50 {offsets = [0, 0, 64], sizes = [1, 128, 32], strides = [1, 1, 1]} : vector<1x128x128xf32> to vector<1x128x32xf32>
    %54 = vector.extract_strided_slice %50 {offsets = [0, 0, 96], sizes = [1, 128, 32], strides = [1, 1, 1]} : vector<1x128x128xf32> to vector<1x128x32xf32>
    %55 = tpu.concatenate %51, %52, %53, %54 in 0 : vector<1x128x32xf32>, vector<1x128x32xf32>, vector<1x128x32xf32>, vector<1x128x32xf32> -> vector<4x128x32xf32>
    %56 = arith.truncf %55 : vector<4x128x32xf32> to vector<4x128x32xbf16>
    "tpu.trace_start"() <{level = 10 : i32, message = "gtd,gsd->gts"}> : () -> ()
    %cst_13 = arith.constant dense<0.000000e+00> : vector<4x128x128xf32>
    %57 = tpu.matmul %42, %49, %cst_13 {dimension_numbers = #tpu.dot_dimension_numbers<[2], [2], [1], [1], [0, 0, 0, 1, 1, 1], [0], [0]>} : vector<4x128x32xbf16>, vector<4x128x32xbf16>, vector<4x128x128xf32> -> vector<4x128x128xf32>
    "tpu.trace_stop"() : () -> ()
    %c0_14 = arith.constant 0 : index
    %c0_15 = arith.constant 0 : index
    %58 = vector.load %arg2[%c0_14, %c0_15] : memref<128x128xf32, #tpu.memory_space<vmem>>, vector<128x128xf32>
    %59 = vector.shape_cast %58 : vector<128x128xf32> to vector<1x128x128xf32>
    %60 = vector.broadcast %59 : vector<1x128x128xf32> to vector<4x128x128xf32>
    %61 = arith.addf %57, %60 : vector<4x128x128xf32>
    %cst_16 = arith.constant dense<0xFF800000> : vector<4x128xf32>
    %62 = vector.multi_reduction <maximumf>, %61, %cst_16 [2] : vector<4x128x128xf32> to vector<4x128xf32>
    %63 = vector.shape_cast %62 : vector<4x128xf32> to vector<4x128x1xf32>
    %64 = vector.broadcast %63 : vector<4x128x1xf32> to vector<4x128x128xf32>
    %65 = arith.subf %61, %64 : vector<4x128x128xf32>
    %66 = math.exp %65 : vector<4x128x128xf32>
    %cst_17 = arith.constant dense<0.000000e+00> : vector<4x128xf32>
    %67 = vector.multi_reduction <add>, %66, %cst_17 [2] : vector<4x128x128xf32> to vector<4x128xf32>
    %68 = vector.shape_cast %67 : vector<4x128xf32> to vector<4x128x1xf32>
    %69 = arith.truncf %66 : vector<4x128x128xf32> to vector<4x128x128xbf16>
    "tpu.trace_start"() <{level = 10 : i32, message = "gts,gsd->gtd"}> : () -> ()
    %cst_18 = arith.constant dense<0.000000e+00> : vector<4x128x32xf32>
    %70 = tpu.matmul %69, %56, %cst_18 {dimension_numbers = #tpu.dot_dimension_numbers<[2], [1], [1], [2], [0, 0, 0, 1, 1, 2], [0], [0]>} : vector<4x128x128xbf16>, vector<4x128x32xbf16>, vector<4x128x32xf32> -> vector<4x128x32xf32>
    "tpu.trace_stop"() : () -> ()
    %71 = tpu.reciprocal %68 {approx = true} : vector<4x128x1xf32> -> vector<4x128x1xf32>
    %72 = vector.broadcast %71 : vector<4x128x1xf32> to vector<4x128x32xf32>
    %73 = arith.mulf %70, %72 : vector<4x128x32xf32>
    %74 = vector.extract_strided_slice %73 {offsets = [0, 0, 0], sizes = [1, 128, 32], strides = [1, 1, 1]} : vector<4x128x32xf32> to vector<1x128x32xf32>
    %75 = vector.shape_cast %74 : vector<1x128x32xf32> to vector<128x32xf32>
    %c0_19 = arith.constant 0 : index
    %c0_20 = arith.constant 0 : index
    %76 = vector.load %arg15[%c0_19, %c0_20] : memref<128x128xf32, #tpu.memory_space<vmem>>, vector<128x32xf32>
    tpu.vector_store %arg15[%c0_19, %c0_20], %75 {strides = array<i32>} : memref<128x128xf32, #tpu.memory_space<vmem>>, vector<128x32xf32>,
    %77 = vector.extract_strided_slice %73 {offsets = [1, 0, 0], sizes = [1, 128, 32], strides = [1, 1, 1]} : vector<4x128x32xf32> to vector<1x128x32xf32>
    %78 = vector.shape_cast %77 : vector<1x128x32xf32> to vector<128x32xf32>
    %c0_21 = arith.constant 0 : index
    %c32 = arith.constant 32 : index
    %79 = vector.load %arg15[%c0_21, %c32] : memref<128x128xf32, #tpu.memory_space<vmem>>, vector<128x32xf32>
    tpu.vector_store %arg15[%c0_21, %c32], %78 {strides = array<i32>} : memref<128x128xf32, #tpu.memory_space<vmem>>, vector<128x32xf32>,
    %80 = vector.extract_strided_slice %73 {offsets = [2, 0, 0], sizes = [1, 128, 32], strides = [1, 1, 1]} : vector<4x128x32xf32> to vector<1x128x32xf32>
    %81 = vector.shape_cast %80 : vector<1x128x32xf32> to vector<128x32xf32>
    %c0_22 = arith.constant 0 : index
    %c64 = arith.constant 64 : index
    %82 = vector.load %arg15[%c0_22, %c64] : memref<128x128xf32, #tpu.memory_space<vmem>>, vector<128x32xf32>
    tpu.vector_store %arg15[%c0_22, %c64], %81 {strides = array<i32>} : memref<128x128xf32, #tpu.memory_space<vmem>>, vector<128x32xf32>,
    %83 = vector.extract_strided_slice %73 {offsets = [3, 0, 0], sizes = [1, 128, 32], strides = [1, 1, 1]} : vector<4x128x32xf32> to vector<1x128x32xf32>
    %84 = vector.shape_cast %83 : vector<1x128x32xf32> to vector<128x32xf32>
    %c0_23 = arith.constant 0 : index
    %c96 = arith.constant 96 : index
    %85 = vector.load %arg15[%c0_23, %c96] : memref<128x128xf32, #tpu.memory_space<vmem>>, vector<128x32xf32>
    tpu.vector_store %arg15[%c0_23, %c96], %84 {strides = array<i32>} : memref<128x128xf32, #tpu.memory_space<vmem>>, vector<128x32xf32>,
    %c0_24 = arith.constant 0 : index
    %c0_25 = arith.constant 0 : index
    %86 = vector.load %arg15[%c0_24, %c0_25] : memref<128x128xf32, #tpu.memory_space<vmem>>, vector<128x128xf32>
    %87 = arith.truncf %86 : vector<128x128xf32> to vector<128x128xbf16>
    %c0_26 = arith.constant 0 : index
    %c0_27 = arith.constant 0 : index
    %88 = vector.load %arg6[%c0_26, %c0_27] : memref<128x128xbf16, #tpu.memory_space<vmem>>, vector<128x128xbf16>
    %cst_28 = arith.constant dense<0.000000e+00> : vector<128x128xf32>
    %89 = tpu.matmul %87, %88, %cst_28 {dimension_numbers = #tpu.dot_dimension_numbers<[1], [0], [0], [1], [0, 0, 1, 1], [], []>} : vector<128x128xbf16>, vector<128x128xbf16>, vector<128x128xf32> -> vector<128x128xf32>
    %c0_29 = arith.constant 0 : index
    %c0_30 = arith.constant 0 : index
    %90 = vector.load %arg7[%c0_29, %c0_30] : memref<1x128xf32, #tpu.memory_space<vmem>>, vector<1x128xf32>
    %91 = vector.shape_cast %90 : vector<1x128xf32> to vector<128xf32>
    %92 = vector.shape_cast %91 : vector<128xf32> to vector<1x128xf32>
    %93 = vector.broadcast %92 : vector<1x128xf32> to vector<128x128xf32>
    %94 = arith.addf %89, %93 : vector<128x128xf32>
    %95 = arith.addf %1, %94 : vector<128x128xf32>
    %c0_31 = arith.constant 0 : index
    %c0_32 = arith.constant 0 : index
    %96 = vector.load %arg8[%c0_31, %c0_32] : memref<1x128xf32, #tpu.memory_space<vmem>>, vector<1x128xf32>
    %97 = vector.shape_cast %96 : vector<1x128xf32> to vector<128xf32>
    %c0_33 = arith.constant 0 : index
    %c0_34 = arith.constant 0 : index
    %98 = vector.load %arg9[%c0_33, %c0_34] : memref<1x128xf32, #tpu.memory_space<vmem>>, vector<1x128xf32>
    %99 = vector.shape_cast %98 : vector<1x128xf32> to vector<128xf32>
    %cst_35 = arith.constant dense<0.000000e+00> : vector<128xf32>
    %100 = vector.multi_reduction <add>, %95, %cst_35 [1] : vector<128x128xf32> to vector<128xf32>
    %101 = vector.shape_cast %100 : vector<128xf32> to vector<128x1xf32>
    %cst_36 = arith.constant 1.280000e+02 : f32
    %102 = vector.broadcast %cst_36 : f32 to vector<128x1xf32>
    %103 = arith.divf %101, %102 : vector<128x1xf32>
    %104 = vector.broadcast %103 : vector<128x1xf32> to vector<128x128xf32>
    %105 = arith.subf %95, %104 : vector<128x128xf32>
    %106 = arith.mulf %105, %105 : vector<128x128xf32>
    %cst_37 = arith.constant dense<0.000000e+00> : vector<128xf32>
    %107 = vector.multi_reduction <add>, %106, %cst_37 [1] : vector<128x128xf32> to vector<128xf32>
    %108 = vector.shape_cast %107 : vector<128xf32> to vector<128x1xf32>
    %cst_38 = arith.constant 1.280000e+02 : f32
    %109 = vector.broadcast %cst_38 : f32 to vector<128x1xf32>
    %110 = arith.divf %108, %109 : vector<128x1xf32>
    %111 = vector.broadcast %103 : vector<128x1xf32> to vector<128x128xf32>
    %112 = arith.subf %95, %111 : vector<128x128xf32>
    %cst_39 = arith.constant 9.99999974E-6 : f32
    %113 = vector.broadcast %cst_39 : f32 to vector<128x1xf32>
    %114 = arith.addf %110, %113 : vector<128x1xf32>
    %115 = math.rsqrt %114 : vector<128x1xf32>
    %116 = vector.broadcast %115 : vector<128x1xf32> to vector<128x128xf32>
    %117 = arith.mulf %112, %116 : vector<128x128xf32>
    %118 = vector.shape_cast %97 : vector<128xf32> to vector<1x128xf32>
    %119 = vector.broadcast %118 : vector<1x128xf32> to vector<128x128xf32>
    %120 = arith.mulf %117, %119 : vector<128x128xf32>
    %121 = vector.shape_cast %99 : vector<128xf32> to vector<1x128xf32>
    %122 = vector.broadcast %121 : vector<1x128xf32> to vector<128x128xf32>
    %123 = arith.addf %120, %122 : vector<128x128xf32>
    %124 = arith.truncf %123 : vector<128x128xf32> to vector<128x128xbf16>
    %c0_40 = arith.constant 0 : index
    %c0_41 = arith.constant 0 : index
    %125 = vector.load %arg10[%c0_40, %c0_41] : memref<128x512xbf16, #tpu.memory_space<vmem>>, vector<128x512xbf16>
    %cst_42 = arith.constant dense<0.000000e+00> : vector<128x512xf32>
    %126 = tpu.matmul %124, %125, %cst_42 {dimension_numbers = #tpu.dot_dimension_numbers<[1], [0], [0], [1], [0, 0, 1, 1], [], []>} : vector<128x128xbf16>, vector<128x512xbf16>, vector<128x512xf32> -> vector<128x512xf32>
    %c0_43 = arith.constant 0 : index
    %c0_44 = arith.constant 0 : index
    %127 = vector.load %arg11[%c0_43, %c0_44] : memref<1x512xf32, #tpu.memory_space<vmem>>, vector<1x512xf32>
    %128 = vector.shape_cast %127 : vector<1x512xf32> to vector<512xf32>
    %129 = vector.shape_cast %128 : vector<512xf32> to vector<1x512xf32>
    %130 = vector.broadcast %129 : vector<1x512xf32> to vector<128x512xf32>
    %131 = arith.addf %126, %130 : vector<128x512xf32>
    %cst_45 = arith.constant 0.000000e+00 : f32
    %132 = vector.broadcast %cst_45 : f32 to vector<128x512xf32>
    %133 = arith.maximumf %131, %132 : vector<128x512xf32>
    %134 = arith.truncf %133 : vector<128x512xf32> to vector<128x512xbf16>
    %c0_46 = arith.constant 0 : index
    %c0_47 = arith.constant 0 : index
    %135 = vector.load %arg12[%c0_46, %c0_47] : memref<512x128xbf16, #tpu.memory_space<vmem>>, vector<512x128xbf16>
    %cst_48 = arith.constant dense<0.000000e+00> : vector<128x128xf32>
    %136 = tpu.matmul %134, %135, %cst_48 {dimension_numbers = #tpu.dot_dimension_numbers<[1], [0], [0], [1], [0, 0, 1, 1], [], []>} : vector<128x512xbf16>, vector<512x128xbf16>, vector<128x128xf32> -> vector<128x128xf32>
    %c0_49 = arith.constant 0 : index
    %c0_50 = arith.constant 0 : index
    %137 = vector.load %arg13[%c0_49, %c0_50] : memref<1x128xf32, #tpu.memory_space<vmem>>, vector<1x128xf32>
    %138 = vector.shape_cast %137 : vector<1x128xf32> to vector<128xf32>
    %139 = vector.shape_cast %138 : vector<128xf32> to vector<1x128xf32>
    %140 = vector.broadcast %139 : vector<1x128xf32> to vector<128x128xf32>
    %141 = arith.addf %136, %140 : vector<128x128xf32>
    %142 = arith.addf %95, %141 : vector<128x128xf32>
    %143 = vector.shape_cast %142 : vector<128x128xf32> to vector<1x128x128xf32>
    %c0_51 = arith.constant 0 : index
    %c0_52 = arith.constant 0 : index
    %c0_53 = arith.constant 0 : index
    %144 = vector.load %arg14[%c0_51, %c0_52, %c0_53] : memref<1x128x128xf32, #tpu.memory_space<vmem>>, vector<1x128x128xf32>
    tpu.vector_store %arg14[%c0_51, %c0_52, %c0_53], %143 {strides = array<i32>} : memref<1x128x128xf32, #tpu.memory_space<vmem>>, vector<1x128x128xf32>,
    return
  }
  func.func @transform_0(%arg0: i32) -> (i32, i32, i32) {
    %c0_i32 = arith.constant 0 : i32
    %c0_i32_0 = arith.constant 0 : i32
    %c0_i32_1 = arith.constant 0 : i32
    return %arg0, %c0_i32, %c0_i32_0 : i32, i32, i32
  }
  func.func @transform_1(%arg0: i32) -> (i32, i32) {
    %c0_i32 = arith.constant 0 : i32
    %c0_i32_0 = arith.constant 0 : i32
    %c0_i32_1 = arith.constant 0 : i32
    return %c0_i32, %c0_i32_0 : i32, i32
  }
  func.func @transform_2(%arg0: i32) -> (i32, i32) {
    %c0_i32 = arith.constant 0 : i32
    %c0_i32_0 = arith.constant 0 : i32
    %c0_i32_1 = arith.constant 0 : i32
    return %c0_i32, %c0_i32_0 : i32, i32
  }
  func.func @transform_3(%arg0: i32) -> (i32, i32) {
    %c0_i32 = arith.constant 0 : i32
    %c0_i32_0 = arith.constant 0 : i32
    %c0_i32_1 = arith.constant 0 : i32
    return %c0_i32, %c0_i32_0 : i32, i32
  }
  func.func @transform_4(%arg0: i32) -> (i32, i32) {
    %c0_i32 = arith.constant 0 : i32
    %c0_i32_0 = arith.constant 0 : i32
    %c0_i32_1 = arith.constant 0 : i32
    return %c0_i32, %c0_i32_0 : i32, i32
  }
  func.func @transform_5(%arg0: i32) -> (i32, i32) {
    %c0_i32 = arith.constant 0 : i32
    %c0_i32_0 = arith.constant 0 : i32
    %c0_i32_1 = arith.constant 0 : i32
    return %c0_i32, %c0_i32_0 : i32, i32
  }
  func.func @transform_6(%arg0: i32) -> (i32, i32) {
    %c0_i32 = arith.constant 0 : i32
    %c0_i32_0 = arith.constant 0 : i32
    %c0_i32_1 = arith.constant 0 : i32
    return %c0_i32, %c0_i32_0 : i32, i32
  }
  func.func @transform_7(%arg0: i32) -> (i32, i32) {
    %c0_i32 = arith.constant 0 : i32
    %c0_i32_0 = arith.constant 0 : i32
    %c0_i32_1 = arith.constant 0 : i32
    return %c0_i32, %c0_i32_0 : i32, i32
  }
  func.func @transform_8(%arg0: i32) -> (i32, i32) {
    %c0_i32 = arith.constant 0 : i32
    %c0_i32_0 = arith.constant 0 : i32
    %c0_i32_1 = arith.constant 0 : i32
    return %c0_i32, %c0_i32_0 : i32, i32
  }
  func.func @transform_9(%arg0: i32) -> (i32, i32) {
    %c0_i32 = arith.constant 0 : i32
    %c0_i32_0 = arith.constant 0 : i32
    %c0_i32_1 = arith.constant 0 : i32
    return %c0_i32, %c0_i32_0 : i32, i32
  }
  func.func @transform_10(%arg0: i32) -> (i32, i32) {
    %c0_i32 = arith.constant 0 : i32
    %c0_i32_0 = arith.constant 0 : i32
    %c0_i32_1 = arith.constant 0 : i32
    return %c0_i32, %c0_i32_0 : i32, i32
  }
  func.func @transform_11(%arg0: i32) -> (i32, i32) {
    %c0_i32 = arith.constant 0 : i32
    %c0_i32_0 = arith.constant 0 : i32
    %c0_i32_1 = arith.constant 0 : i32
    return %c0_i32, %c0_i32_0 : i32, i32
  }
  func.func @transform_12(%arg0: i32) -> (i32, i32) {
    %c0_i32 = arith.constant 0 : i32
    %c0_i32_0 = arith.constant 0 : i32
    %c0_i32_1 = arith.constant 0 : i32
    return %c0_i32, %c0_i32_0 : i32, i32
  }
  func.func @transform_13(%arg0: i32) -> (i32, i32, i32) {
    %c0_i32 = arith.constant 0 : i32
    %c0_i32_0 = arith.constant 0 : i32
    %c0_i32_1 = arith.constant 0 : i32
    return %arg0, %c0_i32, %c0_i32_0 : i32, i32, i32
  }
}

</mosaic_0001>

<llo_original>
// kernel: transformer_block.1
$region0: #{transformer_block.1}
  #allocation0 [shape = 'u32[]', space=smem, size = 0x4, offset = 0x4, fixed_abs, tag = 'smem constant byte address 0x4 - core index']
  #allocation1 [shape = 'u32[144,128]{1,0:T(1,128)}', space=vmem, size = 0x12000, scoped, tag = 'internal scratch']
  #allocation2 [shape = 'f32[128,128]{1,0:T(8,128)}', space=vmem, size = 0x10000, scoped, tag = 'scratch operand']
  %s0 = inlined_call_operand.hbm [shape: f32[2,128,128], index: 0, kind: input, shape index: {}]
  %s1 = inlined_call_operand.hbm [shape: f32[128,128], index: 1, kind: input, shape index: {}]
  %s2 = inlined_call_operand.vmem [shape: f32[1,128], index: 2, kind: input, shape index: {}]
  %s3 = inlined_call_operand.vmem [shape: f32[1,128], index: 3, kind: input, shape index: {}]
  %s4 = inlined_call_operand.hbm [shape: bf16[128,384], index: 4, kind: input, shape index: {}]
  %s5 = inlined_call_operand.hbm [shape: bf16[128,128], index: 5, kind: input, shape index: {}]
  %s6 = inlined_call_operand.vmem [shape: f32[1,128], index: 6, kind: input, shape index: {}]
  %s7 = inlined_call_operand.vmem [shape: f32[1,128], index: 7, kind: input, shape index: {}]
  %s8 = inlined_call_operand.vmem [shape: f32[1,128], index: 8, kind: input, shape index: {}]
  %s9 = inlined_call_operand.hbm [shape: bf16[128,512], index: 9, kind: input, shape index: {}]
  %s10 = inlined_call_operand.vmem [shape: f32[1,512], index: 10, kind: input, shape index: {}]
  %s11 = inlined_call_operand.hbm [shape: bf16[512,128], index: 11, kind: input, shape index: {}]
  %s12 = inlined_call_operand.vmem [shape: f32[1,128], index: 12, kind: input, shape index: {}]
  %s13 = inlined_call_operand.hbm [shape: f32[2,128,128], index: 13, kind: output, shape index: {}]
  %s14 = sld [smem:[#allocation0]]
  $region109: #{transformer_block.1} parent=0
    _
  %s16 = ssub.s32 1, %s14
  %s17 = scalar_select 0, %s16, %s14
  $region1: #{transformer_block.1} parent=0
    #allocation3 [shape = 'u8[131072]{0}', space=vmem, size = 0x20000, scoped, tag = 'input window, operand 0']
    #allocation4 [shape = 's32[2]{0}', space=sflag, size = 0x8, scoped, tag = 'scoped memory for transformer_block.1']
    #allocation5 [shape = 's32[2]{0}', space=sflag, size = 0x8, scoped, tag = 'scoped memory for transformer_block.1']
    #allocation6 [shape = 'u8[65536]{0}', space=vmem, size = 0x10000, scoped, tag = 'input window, operand 1, single buffered']
    #allocation7 [shape = 's32[1]{0}', space=sflag, size = 0x4, scoped, tag = 'scoped memory for transformer_block.1']
    #allocation8 [shape = 'u8[98304]{0}', space=vmem, size = 0x18000, scoped, tag = 'input window, operand 4, single buffered']
    #allocation9 [shape = 'u8[32768]{0}', space=vmem, size = 0x8000, scoped, tag = 'input window, operand 5, single buffered']
    #allocation10 [shape = 's32[1]{0}', space=sflag, size = 0x4, scoped, tag = 'scoped memory for transformer_block.1']
    #allocation11 [shape = 'u8[131072]{0}', space=vmem, size = 0x20000, scoped, tag = 'input window, operand 9, single buffered']
    #allocation12 [shape = 'u8[131072]{0}', space=vmem, size = 0x20000, scoped, tag = 'input window, operand 11, single buffered']
    #allocation13 [shape = 's32[1]{0}', space=sflag, size = 0x4, scoped, tag = 'scoped memory for transformer_block.1']
    #allocation14 [shape = 'u8[131072]{0}', space=vmem, size = 0x20000, scoped, tag = 'output window, operand 0']
    %18 = vsyncpa [#allocation4], 0
    %s19 = scalar_lea.sflag [#allocation4], 1
    %20 = vsyncpa %s19, 0
    %21 = vsyncpa [#allocation7], 0
    %22 = vsyncpa [#allocation10], 0
    %23 = vsyncpa [#allocation13], 0
    %24 = vsyncpa [#allocation5], 0
    %s25 = scalar_lea.sflag [#allocation5], 1
    %26 = vsyncpa %s25, 0
    loop: start=0, step=1, limit=4
    $region2: #{transformer_block.1} parent=1 // loop_pre_header
      _
    $region3: #{transformer_block.1} parent=1 // loop_header
      %s28 = sphi 0, %s32
      %p29 = scmp.ge.s32.totalorder %s28, 4
      %s38 = sphi 0, %s40
      %s41 = sphi 0, %s38
      %s42 = sphi 0, %s41
      %s58 = sphi 0, %s42
      %s62 = sphi 0, %s62
      %s64 = sphi 0, %s62
      %s65 = sphi 0, %s64
      %s79 = sphi 0, %s65
      %s83 = sphi 0, %s83
      %s85 = sphi 0, %s83
      %s86 = sphi 0, %s85
      %s100 = sphi 0, %s86
      %s104 = sphi 0, %s104
      %s106 = sphi 0, %s104
      %s107 = sphi 0, %s106
      %s121 = sphi 0, %s107
      %s125 = sphi 0, %s125
      %s127 = sphi 0, %s125
      %s128 = sphi 0, %s127
      %s142 = sphi 0, %s128
      %s146 = sphi 0, %s146
      %s148 = sphi 0, %s146
      %s149 = sphi 0, %s148
      %s163 = sphi 0, %s149
      %s167 = sphi 0, %s167
      %s169 = sphi 0, %s167
      %s170 = sphi 0, %s169
      %s184 = sphi 0, %s170
      %s188 = sphi 0, %s188
      %s190 = sphi 0, %s188
      %s191 = sphi 0, %s190
      %s205 = sphi 0, %s191
      %s209 = sphi 0, %s209
      %s211 = sphi 0, %s209
      %s212 = sphi 0, %s211
      %s226 = sphi 0, %s212
      %s230 = sphi 0, %s230
      %s232 = sphi 0, %s230
      %s233 = sphi 0, %s232
      %s247 = sphi 0, %s233
      %s251 = sphi 0, %s251
      %s253 = sphi 0, %s251
      %s254 = sphi 0, %s253
      %s268 = sphi 0, %s254
      %s272 = sphi 0, %s272
      %s274 = sphi 0, %s272
      %s275 = sphi 0, %s274
      %s289 = sphi 0, %s275
      %s293 = sphi 0, %s293
      %s295 = sphi 0, %s293
      %s296 = sphi 0, %s295
      %s310 = sphi 0, %s296
      %s316 = sphi 0, %s318
      %s319 = sphi 0, %s316
      %s320 = sphi 0, %s319
      %s336 = sphi 0, %s320
    $region4: #{transformer_block.1} parent=1 // loop_header_branch
      %31 = sbr.rel (%p29) target = $region8
    $region5: #{transformer_block.1} parent=1 // loop_body
      %s33 = ssub.s32 %s28, 1
      %s34 = ssub.s32 %s28, 2
      %s35 = sadd.s32 %s28, 1
      %s36 = ssub.s32 %s28, %s35
      %p37 = scmp.eq.s32.totalorder %s36, 0
      %s39 = sadd.s32 %s38, 1
      %s40 = scalar_select %p37, %s38, %s39
      %p43 = pneg %p37
      %p44 = scmp.eq.s32.totalorder %s28, 1
      %p45 = por %p43, %p44
      %p46 = scmp.ne.s32.totalorder %s38, %s41
      %p47 = scmp.eq.s32.totalorder %s28, 0
      %p48 = por %p46, %p47
      %p49 = scmp.ne.s32.totalorder %s38, %s41
      %p50 = scmp.eq.s32.totalorder %s33, 1
      %p51 = por %p49, %p50
      %p52 = scmp.ne.s32.totalorder %s41, %s42
      %p53 = scmp.eq.s32.totalorder %s33, 0
      %p54 = por %p52, %p53
      %p55 = scmp.ne.s32.totalorder %s41, %s42
      %p56 = scmp.eq.s32.totalorder %s34, 1
      %p57 = por %p55, %p56
      %p59 = scmp.ne.s32.totalorder %s42, %s58
      %p60 = scmp.eq.s32.totalorder %s34, 0
      %p61 = por %p59, %p60
      %s63 = sadd.s32 %s62, 1
      %p66 = scmp.eq.s32.totalorder %s28, 1
      %p67 = scmp.ne.s32.totalorder %s62, %s64
      %p68 = scmp.eq.s32.totalorder %s28, 0
      %p69 = por %p67, %p68
      %p70 = scmp.ne.s32.totalorder %s62, %s64
      %p71 = scmp.eq.s32.totalorder %s33, 1
      %p72 = por %p70, %p71
      %p73 = scmp.ne.s32.totalorder %s64, %s65
      %p74 = scmp.eq.s32.totalorder %s33, 0
      %p75 = por %p73, %p74
      %p76 = scmp.ne.s32.totalorder %s64, %s65
      %p77 = scmp.eq.s32.totalorder %s34, 1
      %p78 = por %p76, %p77
      %p80 = scmp.ne.s32.totalorder %s65, %s79
      %p81 = scmp.eq.s32.totalorder %s34, 0
      %p82 = por %p80, %p81
      %s84 = sadd.s32 %s83, 1
      %p87 = scmp.eq.s32.totalorder %s28, 1
      %p88 = scmp.ne.s32.totalorder %s83, %s85
      %p89 = scmp.eq.s32.totalorder %s28, 0
      %p90 = por %p88, %p89
      %p91 = scmp.ne.s32.totalorder %s83, %s85
      %p92 = scmp.eq.s32.totalorder %s33, 1
      %p93 = por %p91, %p92
      %p94 = scmp.ne.s32.totalorder %s85, %s86
      %p95 = scmp.eq.s32.totalorder %s33, 0
      %p96 = por %p94, %p95
      %p97 = scmp.ne.s32.totalorder %s85, %s86
      %p98 = scmp.eq.s32.totalorder %s34, 1
      %p99 = por %p97, %p98
      %p101 = scmp.ne.s32.totalorder %s86, %s100
      %p102 = scmp.eq.s32.totalorder %s34, 0
      %p103 = por %p101, %p102
      %s105 = sadd.s32 %s104, 1
      %p108 = scmp.eq.s32.totalorder %s28, 1
      %p109 = scmp.ne.s32.totalorder %s104, %s106
      %p110 = scmp.eq.s32.totalorder %s28, 0
      %p111 = por %p109, %p110
      %p112 = scmp.ne.s32.totalorder %s104, %s106
      %p113 = scmp.eq.s32.totalorder %s33, 1
      %p114 = por %p112, %p113
      %p115 = scmp.ne.s32.totalorder %s106, %s107
      %p116 = scmp.eq.s32.totalorder %s33, 0
      %p117 = por %p115, %p116
      %p118 = scmp.ne.s32.totalorder %s106, %s107
      %p119 = scmp.eq.s32.totalorder %s34, 1
      %p120 = por %p118, %p119
      %p122 = scmp.ne.s32.totalorder %s107, %s121
      %p123 = scmp.eq.s32.totalorder %s34, 0
      %p124 = por %p122, %p123
      %s126 = sadd.s32 %s125, 1
      %p129 = scmp.eq.s32.totalorder %s28, 1
      %p130 = scmp.ne.s32.totalorder %s125, %s127
      %p131 = scmp.eq.s32.totalorder %s28, 0
      %p132 = por %p130, %p131
      %p133 = scmp.ne.s32.totalorder %s125, %s127
      %p134 = scmp.eq.s32.totalorder %s33, 1
      %p135 = por %p133, %p134
      %p136 = scmp.ne.s32.totalorder %s127, %s128
      %p137 = scmp.eq.s32.totalorder %s33, 0
      %p138 = por %p136, %p137
      %p139 = scmp.ne.s32.totalorder %s127, %s128
      %p140 = scmp.eq.s32.totalorder %s34, 1
      %p141 = por %p139, %p140
      %p143 = scmp.ne.s32.totalorder %s128, %s142
      %p144 = scmp.eq.s32.totalorder %s34, 0
      %p145 = por %p143, %p144
      %s147 = sadd.s32 %s146, 1
      %p150 = scmp.eq.s32.totalorder %s28, 1
      %p151 = scmp.ne.s32.totalorder %s146, %s148
      %p152 = scmp.eq.s32.totalorder %s28, 0
      %p153 = por %p151, %p152
      %p154 = scmp.ne.s32.totalorder %s146, %s148
      %p155 = scmp.eq.s32.totalorder %s33, 1
      %p156 = por %p154, %p155
      %p157 = scmp.ne.s32.totalorder %s148, %s149
      %p158 = scmp.eq.s32.totalorder %s33, 0
      %p159 = por %p157, %p158
      %p160 = scmp.ne.s32.totalorder %s148, %s149
      %p161 = scmp.eq.s32.totalorder %s34, 1
      %p162 = por %p160, %p161
      %p164 = scmp.ne.s32.totalorder %s149, %s163
      %p165 = scmp.eq.s32.totalorder %s34, 0
      %p166 = por %p164, %p165
      %s168 = sadd.s32 %s167, 1
      %p171 = scmp.eq.s32.totalorder %s28, 1
      %p172 = scmp.ne.s32.totalorder %s167, %s169
      %p173 = scmp.eq.s32.totalorder %s28, 0
      %p174 = por %p172, %p173
      %p175 = scmp.ne.s32.totalorder %s167, %s169
      %p176 = scmp.eq.s32.totalorder %s33, 1
      %p177 = por %p175, %p176
      %p178 = scmp.ne.s32.totalorder %s169, %s170
      %p179 = scmp.eq.s32.totalorder %s33, 0
      %p180 = por %p178, %p179
      %p181 = scmp.ne.s32.totalorder %s169, %s170
      %p182 = scmp.eq.s32.totalorder %s34, 1
      %p183 = por %p181, %p182
      %p185 = scmp.ne.s32.totalorder %s170, %s184
      %p186 = scmp.eq.s32.totalorder %s34, 0
      %p187 = por %p185, %p186
      %s189 = sadd.s32 %s188, 1
      %p192 = scmp.eq.s32.totalorder %s28, 1
      %p193 = scmp.ne.s32.totalorder %s188, %s190
      %p194 = scmp.eq.s32.totalorder %s28, 0
      %p195 = por %p193, %p194
      %p196 = scmp.ne.s32.totalorder %s188, %s190
      %p197 = scmp.eq.s32.totalorder %s33, 1
      %p198 = por %p196, %p197
      %p199 = scmp.ne.s32.totalorder %s190, %s191
      %p200 = scmp.eq.s32.totalorder %s33, 0
      %p201 = por %p199, %p200
      %p202 = scmp.ne.s32.totalorder %s190, %s191
      %p203 = scmp.eq.s32.totalorder %s34, 1
      %p204 = por %p202, %p203
      %p206 = scmp.ne.s32.totalorder %s191, %s205
      %p207 = scmp.eq.s32.totalorder %s34, 0
      %p208 = por %p206, %p207
      %s210 = sadd.s32 %s209, 1
      %p213 = scmp.eq.s32.totalorder %s28, 1
      %p214 = scmp.ne.s32.totalorder %s209, %s211
      %p215 = scmp.eq.s32.totalorder %s28, 0
      %p216 = por %p214, %p215
      %p217 = scmp.ne.s32.totalorder %s209, %s211
      %p218 = scmp.eq.s32.totalorder %s33, 1
      %p219 = por %p217, %p218
      %p220 = scmp.ne.s32.totalorder %s211, %s212
      %p221 = scmp.eq.s32.totalorder %s33, 0
      %p222 = por %p220, %p221
      %p223 = scmp.ne.s32.totalorder %s211, %s212
      %p224 = scmp.eq.s32.totalorder %s34, 1
      %p225 = por %p223, %p224
      %p227 = scmp.ne.s32.totalorder %s212, %s226
      %p228 = scmp.eq.s32.totalorder %s34, 0
      %p229 = por %p227, %p228
      %s231 = sadd.s32 %s230, 1
      %p234 = scmp.eq.s32.totalorder %s28, 1
      %p235 = scmp.ne.s32.totalorder %s230, %s232
      %p236 = scmp.eq.s32.totalorder %s28, 0
      %p237 = por %p235, %p236
      %p238 = scmp.ne.s32.totalorder %s230, %s232
      %p239 = scmp.eq.s32.totalorder %s33, 1
      %p240 = por %p238, %p239
      %p241 = scmp.ne.s32.totalorder %s232, %s233
      %p242 = scmp.eq.s32.totalorder %s33, 0
      %p243 = por %p241, %p242
      %p244 = scmp.ne.s32.totalorder %s232, %s233
      %p245 = scmp.eq.s32.totalorder %s34, 1
      %p246 = por %p244, %p245
      %p248 = scmp.ne.s32.totalorder %s233, %s247
      %p249 = scmp.eq.s32.totalorder %s34, 0
      %p250 = por %p248, %p249
      %s252 = sadd.s32 %s251, 1
      %p255 = scmp.eq.s32.totalorder %s28, 1
      %p256 = scmp.ne.s32.totalorder %s251, %s253
      %p257 = scmp.eq.s32.totalorder %s28, 0
      %p258 = por %p256, %p257
      %p259 = scmp.ne.s32.totalorder %s251, %s253
      %p260 = scmp.eq.s32.totalorder %s33, 1
      %p261 = por %p259, %p260
      %p262 = scmp.ne.s32.totalorder %s253, %s254
      %p263 = scmp.eq.s32.totalorder %s33, 0
      %p264 = por %p262, %p263
      %p265 = scmp.ne.s32.totalorder %s253, %s254
      %p266 = scmp.eq.s32.totalorder %s34, 1
      %p267 = por %p265, %p266
      %p269 = scmp.ne.s32.totalorder %s254, %s268
      %p270 = scmp.eq.s32.totalorder %s34, 0
      %p271 = por %p269, %p270
      %s273 = sadd.s32 %s272, 1
      %p276 = scmp.eq.s32.totalorder %s28, 1
      %p277 = scmp.ne.s32.totalorder %s272, %s274
      %p278 = scmp.eq.s32.totalorder %s28, 0
      %p279 = por %p277, %p278
      %p280 = scmp.ne.s32.totalorder %s272, %s274
      %p281 = scmp.eq.s32.totalorder %s33, 1
      %p282 = por %p280, %p281
      %p283 = scmp.ne.s32.totalorder %s274, %s275
      %p284 = scmp.eq.s32.totalorder %s33, 0
      %p285 = por %p283, %p284
      %p286 = scmp.ne.s32.totalorder %s274, %s275
      %p287 = scmp.eq.s32.totalorder %s34, 1
      %p288 = por %p286, %p287
      %p290 = scmp.ne.s32.totalorder %s275, %s289
      %p291 = scmp.eq.s32.totalorder %s34, 0
      %p292 = por %p290, %p291
      %s294 = sadd.s32 %s293, 1
      %p297 = scmp.eq.s32.totalorder %s28, 1
      %p298 = scmp.ne.s32.totalorder %s293, %s295
      %p299 = scmp.eq.s32.totalorder %s28, 0
      %p300 = por %p298, %p299
      %p301 = scmp.ne.s32.totalorder %s293, %s295
      %p302 = scmp.eq.s32.totalorder %s33, 1
      %p303 = por %p301, %p302
      %p304 = scmp.ne.s32.totalorder %s295, %s296
      %p305 = scmp.eq.s32.totalorder %s33, 0
      %p306 = por %p304, %p305
      %p307 = scmp.ne.s32.totalorder %s295, %s296
      %p308 = scmp.eq.s32.totalorder %s34, 1
      %p309 = por %p307, %p308
      %p311 = scmp.ne.s32.totalorder %s296, %s310
      %p312 = scmp.eq.s32.totalorder %s34, 0
      %p313 = por %p311, %p312
      %s314 = ssub.s32 %s28, %s35
      %p315 = scmp.eq.s32.totalorder %s314, 0
      %s317 = sadd.s32 %s316, 1
      %s318 = scalar_select %p315, %s316, %s317
      %p321 = pneg %p315
      %p322 = scmp.eq.s32.totalorder %s28, 1
      %p323 = por %p321, %p322
      %p324 = scmp.ne.s32.totalorder %s316, %s319
      %p325 = scmp.eq.s32.totalorder %s28, 0
      %p326 = por %p324, %p325
      %p327 = scmp.ne.s32.totalorder %s316, %s319
      %p328 = scmp.eq.s32.totalorder %s33, 1
      %p329 = por %p327, %p328
      %p330 = scmp.ne.s32.totalorder %s319, %s320
      %p331 = scmp.eq.s32.totalorder %s33, 0
      %p332 = por %p330, %p331
      %p333 = scmp.ne.s32.totalorder %s319, %s320
      %p334 = scmp.eq.s32.totalorder %s34, 1
      %p335 = por %p333, %p334
      %p337 = scmp.ne.s32.totalorder %s320, %s336
      %p338 = scmp.eq.s32.totalorder %s34, 0
      %p339 = por %p337, %p338
      %p340 = scmp.le.s32.totalorder 1, %s28
      %p341 = scmp.lt.s32.totalorder %s28, 3
      %p342 = pnand %p340, %p341
      %p343 = pneg %p342
      // Predicated region
      $region9: #{transformer_block.1} parent=5 // pred_check
        _
      $region10: #{transformer_block.1} parent=5 // pred_check_branch
        %345 = sbr.rel (%p342) target = $region12
      $region11: #{transformer_block.1} parent=5 // pred_region
        %s346 = ssub.s32 %s28, 1
        // Predicated region
        $region13: #{transformer_block.1} parent=11 // pred_check
          %p347 = pneg %p75
        $region14: #{transformer_block.1} parent=11 // pred_check_branch
          %349 = sbr.rel (%p347) target = $region16
        $region15: #{transformer_block.1} parent=11 // pred_region
          %s351 = ssub.s32 2048, 2048
          %352 = vsyncadd [#allocation7], %s351
          %s353 = sshll.u32 [#allocation6], 4
          %s354 = int_to_ptr.vmem [resolvable:$true] %s353
          %359 = dma.hbm_to_vmem [thread:$0]  %s1, 2048, %s354, [#allocation7], 128, 128, 8
        $region16: #{transformer_block.1} parent=11 // pred_fallthru
          _
        // Predicated region
        $region17: #{transformer_block.1} parent=11 // pred_check
          %p360 = pneg %p96
        $region18: #{transformer_block.1} parent=11 // pred_check_branch
          %362 = sbr.rel (%p360) target = $region20
        $region19: #{transformer_block.1} parent=11 // pred_region
          _
        $region20: #{transformer_block.1} parent=11 // pred_fallthru
          _
        // Predicated region
        $region21: #{transformer_block.1} parent=11 // pred_check
          %p363 = pneg %p117
        $region22: #{transformer_block.1} parent=11 // pred_check_branch
          %365 = sbr.rel (%p363) target = $region24
        $region23: #{transformer_block.1} parent=11 // pred_region
          _
        $region24: #{transformer_block.1} parent=11 // pred_fallthru
          _
        // Predicated region
        $region25: #{transformer_block.1} parent=11 // pred_check
          %p366 = pneg %p138
        $region26: #{transformer_block.1} parent=11 // pred_check_branch
          %368 = sbr.rel (%p366) target = $region28
        $region27: #{transformer_block.1} parent=11 // pred_region
          %s370 = ssub.s32 3072, 3072
          %371 = vsyncadd [#allocation7], %s370
          %s372 = sshll.u32 [#allocation8], 4
          %s373 = int_to_ptr.vmem [resolvable:$true] %s372
          %378 = dma.hbm_to_vmem [thread:$0]  %s4, 3072, %s373, [#allocation7], 192, 192, 12
        $region28: #{transformer_block.1} parent=11 // pred_fallthru
          _
        // Predicated region
        $region29: #{transformer_block.1} parent=11 // pred_check
          %p379 = pneg %p159
        $region30: #{transformer_block.1} parent=11 // pred_check_branch
          %381 = sbr.rel (%p379) target = $region32
        $region31: #{transformer_block.1} parent=11 // pred_region
          %s383 = ssub.s32 1024, 1024
          %384 = vsyncadd [#allocation10], %s383
          %s385 = sshll.u32 [#allocation9], 4
          %s386 = int_to_ptr.vmem [resolvable:$true] %s385
          %391 = dma.hbm_to_vmem [thread:$0]  %s5, 1024, %s386, [#allocation10], 64, 64, 4
        $region32: #{transformer_block.1} parent=11 // pred_fallthru
          _
        // Predicated region
        $region33: #{transformer_block.1} parent=11 // pred_check
          %p392 = pneg %p180
        $region34: #{transformer_block.1} parent=11 // pred_check_branch
          %394 = sbr.rel (%p392) target = $region36
        $region35: #{transformer_block.1} parent=11 // pred_region
          _
        $region36: #{transformer_block.1} parent=11 // pred_fallthru
          _
        // Predicated region
        $region37: #{transformer_block.1} parent=11 // pred_check
          %p395 = pneg %p201
        $region38: #{transformer_block.1} parent=11 // pred_check_branch
          %397 = sbr.rel (%p395) target = $region40
        $region39: #{transformer_block.1} parent=11 // pred_region
          _
        $region40: #{transformer_block.1} parent=11 // pred_fallthru
          _
        // Predicated region
        $region41: #{transformer_block.1} parent=11 // pred_check
          %p398 = pneg %p222
        $region42: #{transformer_block.1} parent=11 // pred_check_branch
          %400 = sbr.rel (%p398) target = $region44
        $region43: #{transformer_block.1} parent=11 // pred_region
          _
        $region44: #{transformer_block.1} parent=11 // pred_fallthru
          _
        // Predicated region
        $region45: #{transformer_block.1} parent=11 // pred_check
          %p401 = pneg %p243
        $region46: #{transformer_block.1} parent=11 // pred_check_branch
          %403 = sbr.rel (%p401) target = $region48
        $region47: #{transformer_block.1} parent=11 // pred_region
          %s405 = ssub.s32 4096, 4096
          %406 = vsyncadd [#allocation10], %s405
          %s407 = sshll.u32 [#allocation11], 4
          %s408 = int_to_ptr.vmem [resolvable:$true] %s407
          %413 = dma.hbm_to_vmem [thread:$0]  %s9, 4096, %s408, [#allocation10], 256, 256, 16
        $region48: #{transformer_block.1} parent=11 // pred_fallthru
          _
        // Predicated region
        $region49: #{transformer_block.1} parent=11 // pred_check
          %p414 = pneg %p264
        $region50: #{transformer_block.1} parent=11 // pred_check_branch
          %416 = sbr.rel (%p414) target = $region52
        $region51: #{transformer_block.1} parent=11 // pred_region
          _
        $region52: #{transformer_block.1} parent=11 // pred_fallthru
          _
        // Predicated region
        $region53: #{transformer_block.1} parent=11 // pred_check
          %p417 = pneg %p285
        $region54: #{transformer_block.1} parent=11 // pred_check_branch
          %419 = sbr.rel (%p417) target = $region56
        $region55: #{transformer_block.1} parent=11 // pred_region
          %s421 = ssub.s32 4096, 4096
          %422 = vsyncadd [#allocation13], %s421
          %s423 = sshll.u32 [#allocation12], 4
          %s424 = int_to_ptr.vmem [resolvable:$true] %s423
          %429 = dma.hbm_to_vmem [thread:$0]  %s11, 4096, %s424, [#allocation13], 64, 64, 4
        $region56: #{transformer_block.1} parent=11 // pred_fallthru
          _
        // Predicated region
        $region57: #{transformer_block.1} parent=11 // pred_check
          %p430 = pneg %p306
        $region58: #{transformer_block.1} parent=11 // pred_check_branch
          %432 = sbr.rel (%p430) target = $region60
        $region59: #{transformer_block.1} parent=11 // pred_region
          _
        $region60: #{transformer_block.1} parent=11 // pred_fallthru
          _
      $region12: #{transformer_block.1} parent=5 // pred_fallthru
        _
      %p433 = scmp.lt.s32.totalorder %s28, 2
      // Predicated region
      $region61: #{transformer_block.1} parent=5 // pred_check
        %p434 = pneg %p433
      $region62: #{transformer_block.1} parent=5 // pred_check_branch
        %436 = sbr.rel (%p434) target = $region64
      $region63: #{transformer_block.1} parent=5 // pred_region
        // Predicated region
        $region65: #{transformer_block.1} parent=63 // pred_check
          %p437 = pneg %p48
        $region66: #{transformer_block.1} parent=63 // pred_check_branch
          %439 = sbr.rel (%p437) target = $region68
        $region67: #{transformer_block.1} parent=63 // pred_region
          %s440 = sand.u32 %s38, 1
          %s441 = scalar_lea.sflag [#allocation4], %s440
          %s442 = sand.u32 %s38, 1
          %s443 = smul.addr %s442, 128
          %s444 = scalar_lea.vmem [#allocation3], %s443
          %s446 = ssub.s32 2048, 2048
          %447 = vsyncadd %s441, %s446
          %s448 = smul.addr %s28, 16
          %s449 = smul.addr %s448, 128
          %s450 = scalar_lea.hbm %s0, %s449
          %s451 = sshll.u32 %s444, 4
          %s452 = int_to_ptr.vmem [resolvable:$true] %s451
          %457 = dma.hbm_to_vmem [thread:$0]  %s450, 2048, %s452, %s441, 128, 128, 8
        $region68: #{transformer_block.1} parent=63 // pred_fallthru
          _
      $region64: #{transformer_block.1} parent=5 // pred_fallthru
        _
      %p458 = scmp.le.s32.totalorder 1, %s28
      %p459 = scmp.lt.s32.totalorder %s28, 3
      %p460 = pnand %p458, %p459
      %p461 = pneg %p460
      // Predicated region
      $region69: #{transformer_block.1} parent=5 // pred_check
        _
      $region70: #{transformer_block.1} parent=5 // pred_check_branch
        %463 = sbr.rel (%p460) target = $region72
      $region71: #{transformer_block.1} parent=5 // pred_region
        %s464 = ssub.s32 %s28, 1
        %s465 = sand.u32 %s41, 1
        %s466 = scalar_lea.sflag [#allocation4], %s465
        %s467 = sand.u32 %s41, 1
        %s468 = smul.addr %s467, 128
        %s469 = scalar_lea.vmem [#allocation3], %s468
        // Predicated region
        $region73: #{transformer_block.1} parent=71 // pred_check
          %p470 = pneg %p54
        $region74: #{transformer_block.1} parent=71 // pred_check_branch
          %472 = sbr.rel (%p470) target = $region76
        $region75: #{transformer_block.1} parent=71 // pred_region
          %473 = dma.done %s466, 2048
        $region76: #{transformer_block.1} parent=71 // pred_fallthru
          _
        // Predicated region
        $region77: #{transformer_block.1} parent=71 // pred_check
          %p474 = pneg %p75
        $region78: #{transformer_block.1} parent=71 // pred_check_branch
          %476 = sbr.rel (%p474) target = $region80
        $region79: #{transformer_block.1} parent=71 // pred_region
          %477 = dma.done [#allocation7], 2048
        $region80: #{transformer_block.1} parent=71 // pred_fallthru
          _
        // Predicated region
        $region81: #{transformer_block.1} parent=71 // pred_check
          %p478 = pneg %p138
        $region82: #{transformer_block.1} parent=71 // pred_check_branch
          %480 = sbr.rel (%p478) target = $region84
        $region83: #{transformer_block.1} parent=71 // pred_region
          %481 = dma.done [#allocation7], 3072
        $region84: #{transformer_block.1} parent=71 // pred_fallthru
          _
        // Predicated region
        $region85: #{transformer_block.1} parent=71 // pred_check
          %p482 = pneg %p159
        $region86: #{transformer_block.1} parent=71 // pred_check_branch
          %484 = sbr.rel (%p482) target = $region88
        $region87: #{transformer_block.1} parent=71 // pred_region
          %485 = dma.done [#allocation10], 1024
        $region88: #{transformer_block.1} parent=71 // pred_fallthru
          _
        // Predicated region
        $region89: #{transformer_block.1} parent=71 // pred_check
          %p486 = pneg %p243
        $region90: #{transformer_block.1} parent=71 // pred_check_branch
          %488 = sbr.rel (%p486) target = $region92
        $region91: #{transformer_block.1} parent=71 // pred_region
          %489 = dma.done [#allocation10], 4096
        $region92: #{transformer_block.1} parent=71 // pred_fallthru
          _
        // Predicated region
        $region93: #{transformer_block.1} parent=71 // pred_check
          %p490 = pneg %p285
        $region94: #{transformer_block.1} parent=71 // pred_check_branch
          %492 = sbr.rel (%p490) target = $region96
        $region95: #{transformer_block.1} parent=71 // pred_region
          %493 = dma.done [#allocation13], 4096
        $region96: #{transformer_block.1} parent=71 // pred_fallthru
          _
        %s494 = sand.u32 %s41, 1
        %s495 = scalar_lea.sflag [#allocation4], %s494
        %s496 = sand.u32 %s41, 1
        %s497 = smul.addr %s496, 128
        %s498 = scalar_lea.vmem [#allocation3], %s497
        %p499 = pneg %p54
        %p500 = pneg %p51
        %p501 = pneg %p75
        %p502 = pneg %p72
        %p503 = pneg %p96
        %p504 = pneg %p93
        %p505 = pneg %p117
        %p506 = pneg %p114
        %p507 = pneg %p138
        %p508 = pneg %p135
        %p509 = pneg %p159
        %p510 = pneg %p156
        %p511 = pneg %p180
        %p512 = pneg %p177
        %p513 = pneg %p201
        %p514 = pneg %p198
        %p515 = pneg %p222
        %p516 = pneg %p219
        %p517 = pneg %p243
        %p518 = pneg %p240
        %p519 = pneg %p264
        %p520 = pneg %p261
        %p521 = pneg %p285
        %p522 = pneg %p282
        %p523 = pneg %p306
        %p524 = pneg %p303
        %p525 = pneg %p332
        %p526 = pneg %p329
        %s527 = sand.u32 %s319, 1
        %s528 = scalar_lea.sflag [#allocation5], %s527
        %s529 = sand.u32 %s319, 1
        %s530 = smul.addr %s529, 128
        %s531 = scalar_lea.vmem [#allocation14], %s530
        %v533 = vld [vmem:[%s469] sm:$0xff]
        %v534 = vld [vmem:[%s469 + $0x8] sm:$0xff]
        %v535 = vld [vmem:[%s469 + $0x10] sm:$0xff]
        %v536 = vld [vmem:[%s469 + $0x18] sm:$0xff]
        %v537 = vld [vmem:[%s469 + $0x20] sm:$0xff]
        %v538 = vld [vmem:[%s469 + $0x28] sm:$0xff]
        %v539 = vld [vmem:[%s469 + $0x30] sm:$0xff]
        %v540 = vld [vmem:[%s469 + $0x38] sm:$0xff]
        %v541 = vld [vmem:[%s469 + $0x40] sm:$0xff]
        %v542 = vld [vmem:[%s469 + $0x48] sm:$0xff]
        %v543 = vld [vmem:[%s469 + $0x50] sm:$0xff]
        %v544 = vld [vmem:[%s469 + $0x58] sm:$0xff]
        %v545 = vld [vmem:[%s469 + $0x60] sm:$0xff]
        %v546 = vld [vmem:[%s469 + $0x68] sm:$0xff]
        %v547 = vld [vmem:[%s469 + $0x70] sm:$0xff]
        %v548 = vld [vmem:[%s469 + $0x78] sm:$0xff]
        %v549 = vld [vmem:[%s2] sm:$0x1]
        %v550 = vld [vmem:[%s3] sm:$0x1]
        %551 = vadd.xlane.f32.xlu0 %v533
        %v552 = vpop.xlane.xlu0 %551
        %553 = vadd.xlane.f32.xlu0 %v534
        %v554 = vpop.xlane.xlu0 %553
        %555 = vadd.xlane.f32.xlu0 %v535
        %v556 = vpop.xlane.xlu0 %555
        %557 = vadd.xlane.f32.xlu0 %v536
        %v558 = vpop.xlane.xlu0 %557
        %559 = vadd.xlane.f32.xlu0 %v537
        %v560 = vpop.xlane.xlu0 %559
        %561 = vadd.xlane.f32.xlu0 %v538
        %v562 = vpop.xlane.xlu0 %561
        %563 = vadd.xlane.f32.xlu0 %v539
        %v564 = vpop.xlane.xlu0 %563
        %565 = vadd.xlane.f32.xlu0 %v540
        %v566 = vpop.xlane.xlu0 %565
        %567 = vadd.xlane.f32.xlu0 %v541
        %v568 = vpop.xlane.xlu0 %567
        %569 = vadd.xlane.f32.xlu0 %v542
        %v570 = vpop.xlane.xlu0 %569
        %571 = vadd.xlane.f32.xlu0 %v543
        %v572 = vpop.xlane.xlu0 %571
        %573 = vadd.xlane.f32.xlu0 %v544
        %v574 = vpop.xlane.xlu0 %573
        %575 = vadd.xlane.f32.xlu0 %v545
        %v576 = vpop.xlane.xlu0 %575
        %577 = vadd.xlane.f32.xlu0 %v546
        %v578 = vpop.xlane.xlu0 %577
        %579 = vadd.xlane.f32.xlu0 %v547
        %v580 = vpop.xlane.xlu0 %579
        %581 = vadd.xlane.f32.xlu0 %v548
        %v582 = vpop.xlane.xlu0 %581
        %v583 = vrcp.pop 128.0
        %v584 = vmul.f32 %v552, %v583
        %v585 = vmul.f32 %v554, %v583
        %v586 = vmul.f32 %v556, %v583
        %v587 = vmul.f32 %v558, %v583
        %v588 = vmul.f32 %v560, %v583
        %v589 = vmul.f32 %v562, %v583
        %v590 = vmul.f32 %v564, %v583
        %v591 = vmul.f32 %v566, %v583
        %v592 = vmul.f32 %v568, %v583
        %v593 = vmul.f32 %v570, %v583
        %v594 = vmul.f32 %v572, %v583
        %v595 = vmul.f32 %v574, %v583
        %v596 = vmul.f32 %v576, %v583
        %v597 = vmul.f32 %v578, %v583
        %v598 = vmul.f32 %v580, %v583
        %v599 = vmul.f32 %v582, %v583
        %v600 = vsub.f32 %v533, %v584
        %v601 = vsub.f32 %v534, %v585
        %v602 = vsub.f32 %v535, %v586
        %v603 = vsub.f32 %v536, %v587
        %v604 = vsub.f32 %v537, %v588
        %v605 = vsub.f32 %v538, %v589
        %v606 = vsub.f32 %v539, %v590
        %v607 = vsub.f32 %v540, %v591
        %v608 = vsub.f32 %v541, %v592
        %v609 = vsub.f32 %v542, %v593
        %v610 = vsub.f32 %v543, %v594
        %v611 = vsub.f32 %v544, %v595
        %v612 = vsub.f32 %v545, %v596
        %v613 = vsub.f32 %v546, %v597
        %v614 = vsub.f32 %v547, %v598
        %v615 = vsub.f32 %v548, %v599
        %v616 = vmul.f32 %v600, %v600
        %v617 = vmul.f32 %v601, %v601
        %v618 = vmul.f32 %v602, %v602
        %v619 = vmul.f32 %v603, %v603
        %v620 = vmul.f32 %v604, %v604
        %v621 = vmul.f32 %v605, %v605
        %v622 = vmul.f32 %v606, %v606
        %v623 = vmul.f32 %v607, %v607
        %v624 = vmul.f32 %v608, %v608
        %v625 = vmul.f32 %v609, %v609
        %v626 = vmul.f32 %v610, %v610
        %v627 = vmul.f32 %v611, %v611
        %v628 = vmul.f32 %v612, %v612
        %v629 = vmul.f32 %v613, %v613
        %v630 = vmul.f32 %v614, %v614
        %v631 = vmul.f32 %v615, %v615
        %632 = vadd.xlane.f32.xlu0 %v616
        %v633 = vpop.xlane.xlu0 %632
        %634 = vadd.xlane.f32.xlu0 %v617
        %v635 = vpop.xlane.xlu0 %634
        %636 = vadd.xlane.f32.xlu0 %v618
        %v637 = vpop.xlane.xlu0 %636
        %638 = vadd.xlane.f32.xlu0 %v619
        %v639 = vpop.xlane.xlu0 %638
        %640 = vadd.xlane.f32.xlu0 %v620
        %v641 = vpop.xlane.xlu0 %640
        %642 = vadd.xlane.f32.xlu0 %v621
        %v643 = vpop.xlane.xlu0 %642
        %644 = vadd.xlane.f32.xlu0 %v622
        %v645 = vpop.xlane.xlu0 %644
        %646 = vadd.xlane.f32.xlu0 %v623
        %v647 = vpop.xlane.xlu0 %646
        %648 = vadd.xlane.f32.xlu0 %v624
        %v649 = vpop.xlane.xlu0 %648
        %650 = vadd.xlane.f32.xlu0 %v625
        %v651 = vpop.xlane.xlu0 %650
        %652 = vadd.xlane.f32.xlu0 %v626
        %v653 = vpop.xlane.xlu0 %652
        %654 = vadd.xlane.f32.xlu0 %v627
        %v655 = vpop.xlane.xlu0 %654
        %656 = vadd.xlane.f32.xlu0 %v628
        %v657 = vpop.xlane.xlu0 %656
        %658 = vadd.xlane.f32.xlu0 %v629
        %v659 = vpop.xlane.xlu0 %658
        %660 = vadd.xlane.f32.xlu0 %v630
        %v661 = vpop.xlane.xlu0 %660
        %662 = vadd.xlane.f32.xlu0 %v631
        %v663 = vpop.xlane.xlu0 %662
        %v664 = vmul.f32 %v633, %v583
        %v665 = vmul.f32 %v635, %v583
        %v666 = vmul.f32 %v637, %v583
        %v667 = vmul.f32 %v639, %v583
        %v668 = vmul.f32 %v641, %v583
        %v669 = vmul.f32 %v643, %v583
        %v670 = vmul.f32 %v645, %v583
        %v671 = vmul.f32 %v647, %v583
        %v672 = vmul.f32 %v649, %v583
        %v673 = vmul.f32 %v651, %v583
        %v674 = vmul.f32 %v653, %v583
        %v675 = vmul.f32 %v655, %v583
        %v676 = vmul.f32 %v657, %v583
        %v677 = vmul.f32 %v659, %v583
        %v678 = vmul.f32 %v661, %v583
        %v679 = vmul.f32 %v663, %v583
        %v680 = vadd.f32 %v664, 1e-05
        %v681 = vadd.f32 %v665, 1e-05
        %v682 = vadd.f32 %v666, 1e-05
        %v683 = vadd.f32 %v667, 1e-05
        %v684 = vadd.f32 %v668, 1e-05
        %v685 = vadd.f32 %v669, 1e-05
        %v686 = vadd.f32 %v670, 1e-05
        %v687 = vadd.f32 %v671, 1e-05
        %v688 = vadd.f32 %v672, 1e-05
        %v689 = vadd.f32 %v673, 1e-05
        %v690 = vadd.f32 %v674, 1e-05
        %v691 = vadd.f32 %v675, 1e-05
        %v692 = vadd.f32 %v676, 1e-05
        %v693 = vadd.f32 %v677, 1e-05
        %v694 = vadd.f32 %v678, 1e-05
        %v695 = vadd.f32 %v679, 1e-05
        %v696 = vrsqrt.pop %v680
        %v697 = vrsqrt.pop %v681
        %v698 = vrsqrt.pop %v682
        %v699 = vrsqrt.pop %v683
        %v700 = vrsqrt.pop %v684
        %v701 = vrsqrt.pop %v685
        %v702 = vrsqrt.pop %v686
        %v703 = vrsqrt.pop %v687
        %v704 = vrsqrt.pop %v688
        %v705 = vrsqrt.pop %v689
        %v706 = vrsqrt.pop %v690
        %v707 = vrsqrt.pop %v691
        %v708 = vrsqrt.pop %v692
        %v709 = vrsqrt.pop %v693
        %v710 = vrsqrt.pop %v694
        %v711 = vrsqrt.pop %v695
        %v712 = vmul.f32 %v600, %v696
        %v713 = vmul.f32 %v601, %v697
        %v714 = vmul.f32 %v602, %v698
        %v715 = vmul.f32 %v603, %v699
        %v716 = vmul.f32 %v604, %v700
        %v717 = vmul.f32 %v605, %v701
        %v718 = vmul.f32 %v606, %v702
        %v719 = vmul.f32 %v607, %v703
        %v720 = vmul.f32 %v608, %v704
        %v721 = vmul.f32 %v609, %v705
        %v722 = vmul.f32 %v610, %v706
        %v723 = vmul.f32 %v611, %v707
        %v724 = vmul.f32 %v612, %v708
        %v725 = vmul.f32 %v613, %v709
        %v726 = vmul.f32 %v614, %v710
        %v727 = vmul.f32 %v615, %v711
        %v729 = vlaneseq
        %v730 = vshrl.u32 %v729, 7
        %v731 = vsub.s32 0, %v730
        %v732 = vrot.slane %v549, %v731
        %v734 = vmul.f32 %v712, %v732
        %v735 = vmul.f32 %v713, %v732
        %v736 = vmul.f32 %v714, %v732
        %v737 = vmul.f32 %v715, %v732
        %v738 = vmul.f32 %v716, %v732
        %v739 = vmul.f32 %v717, %v732
        %v740 = vmul.f32 %v718, %v732
        %v741 = vmul.f32 %v719, %v732
        %v742 = vmul.f32 %v720, %v732
        %v743 = vmul.f32 %v721, %v732
        %v744 = vmul.f32 %v722, %v732
        %v745 = vmul.f32 %v723, %v732
        %v746 = vmul.f32 %v724, %v732
        %v747 = vmul.f32 %v725, %v732
        %v748 = vmul.f32 %v726, %v732
        %v749 = vmul.f32 %v727, %v732
        %v751 = vlaneseq
        %v752 = vshrl.u32 %v751, 7
        %v753 = vsub.s32 0, %v752
        %v754 = vrot.slane %v550, %v753
        %v756 = vadd.f32 %v734, %v754
        %v757 = vadd.f32 %v735, %v754
        %v758 = vadd.f32 %v736, %v754
        %v759 = vadd.f32 %v737, %v754
        %v760 = vadd.f32 %v738, %v754
        %v761 = vadd.f32 %v739, %v754
        %v762 = vadd.f32 %v740, %v754
        %v763 = vadd.f32 %v741, %v754
        %v764 = vadd.f32 %v742, %v754
        %v765 = vadd.f32 %v743, %v754
        %v766 = vadd.f32 %v744, %v754
        %v767 = vadd.f32 %v745, %v754
        %v768 = vadd.f32 %v746, %v754
        %v769 = vadd.f32 %v747, %v754
        %v770 = vadd.f32 %v748, %v754
        %v771 = vadd.f32 %v749, %v754
        %v772 = vpack.c.bf16 %v757, %v756
        %v773 = vpack.c.bf16 %v759, %v758
        %v774 = vpack.c.bf16 %v761, %v760
        %v775 = vpack.c.bf16 %v763, %v762
        %v776 = vpack.c.bf16 %v765, %v764
        %v777 = vpack.c.bf16 %v767, %v766
        %v778 = vpack.c.bf16 %v769, %v768
        %v779 = vpack.c.bf16 %v771, %v770
        %v780 = vld [vmem:[#allocation8] sm:$0xff]
        %v781 = vld [vmem:[#allocation8 + $0x8] sm:$0xf]
        %v782 = vld [vmem:[#allocation8 + $0xc] sm:$0xff]
        %v783 = vld [vmem:[#allocation8 + $0x14] sm:$0xf]
        %v784 = vld [vmem:[#allocation8 + $0x18] sm:$0xff]
        %v785 = vld [vmem:[#allocation8 + $0x20] sm:$0xf]
        %v786 = vld [vmem:[#allocation8 + $0x24] sm:$0xff]
        %v787 = vld [vmem:[#allocation8 + $0x2c] sm:$0xf]
        %v788 = vld [vmem:[#allocation8 + $0x30] sm:$0xff]
        %v789 = vld [vmem:[#allocation8 + $0x38] sm:$0xf]
        %v790 = vld [vmem:[#allocation8 + $0x3c] sm:$0xff]
        %v791 = vld [vmem:[#allocation8 + $0x44] sm:$0xf]
        %v792 = vld [vmem:[#allocation8 + $0x48] sm:$0xff]
        %v793 = vld [vmem:[#allocation8 + $0x50] sm:$0xf]
        %v794 = vld [vmem:[#allocation8 + $0x54] sm:$0xff]
        %v795 = vld [vmem:[#allocation8 + $0x5c] sm:$0xf]
        %v796 = vld [vmem:[#allocation8 + $0x60] sm:$0xff]
        %v797 = vld [vmem:[#allocation8 + $0x68] sm:$0xf]
        %v798 = vld [vmem:[#allocation8 + $0x6c] sm:$0xff]
        %v799 = vld [vmem:[#allocation8 + $0x74] sm:$0xf]
        %v800 = vld [vmem:[#allocation8 + $0x78] sm:$0xff]
        %v801 = vld [vmem:[#allocation8 + $0x80] sm:$0xf]
        %v802 = vld [vmem:[#allocation8 + $0x84] sm:$0xff]
        %v803 = vld [vmem:[#allocation8 + $0x8c] sm:$0xf]
        %v804 = vld [vmem:[#allocation8 + $0x90] sm:$0xff]
        %v805 = vld [vmem:[#allocation8 + $0x98] sm:$0xf]
        %v806 = vld [vmem:[#allocation8 + $0x9c] sm:$0xff]
        %v807 = vld [vmem:[#allocation8 + $0xa4] sm:$0xf]
        %v808 = vld [vmem:[#allocation8 + $0xa8] sm:$0xff]
        %v809 = vld [vmem:[#allocation8 + $0xb0] sm:$0xf]
        %v810 = vld [vmem:[#allocation8 + $0xb4] sm:$0xff]
        %v811 = vld [vmem:[#allocation8 + $0xbc] sm:$0xf]
        %v844 = vunpack.c.l.b16 %v780
        %v845 = vunpack.c.h.b16 %v780
        %v846 = vunpack.c.l.b16 %v781
        %v847 = vunpack.c.l.b16 %v782
        %v848 = vunpack.c.h.b16 %v782
        %v849 = vunpack.c.l.b16 %v783
        %v850 = vunpack.c.l.b16 %v784
        %v851 = vunpack.c.h.b16 %v784
        %v852 = vunpack.c.l.b16 %v785
        %v853 = vunpack.c.l.b16 %v786
        %v854 = vunpack.c.h.b16 %v786
        %v855 = vunpack.c.l.b16 %v787
        %v856 = vunpack.c.l.b16 %v788
        %v857 = vunpack.c.h.b16 %v788
        %v858 = vunpack.c.l.b16 %v789
        %v859 = vunpack.c.l.b16 %v790
        %v860 = vunpack.c.h.b16 %v790
        %v861 = vunpack.c.l.b16 %v791
        %v862 = vunpack.c.l.b16 %v792
        %v863 = vunpack.c.h.b16 %v792
        %v864 = vunpack.c.l.b16 %v793
        %v865 = vunpack.c.l.b16 %v794
        %v866 = vunpack.c.h.b16 %v794
        %v867 = vunpack.c.l.b16 %v795
        %v868 = vunpack.c.l.b16 %v796
        %v869 = vunpack.c.h.b16 %v796
        %v870 = vunpack.c.l.b16 %v797
        %v871 = vunpack.c.l.b16 %v798
        %v872 = vunpack.c.h.b16 %v798
        %v873 = vunpack.c.l.b16 %v799
        %v874 = vunpack.c.l.b16 %v800
        %v875 = vunpack.c.h.b16 %v800
        %v876 = vunpack.c.l.b16 %v801
        %v877 = vunpack.c.l.b16 %v802
        %v878 = vunpack.c.h.b16 %v802
        %v879 = vunpack.c.l.b16 %v803
        %v880 = vunpack.c.l.b16 %v804
        %v881 = vunpack.c.h.b16 %v804
        %v882 = vunpack.c.l.b16 %v805
        %v883 = vunpack.c.l.b16 %v806
        %v884 = vunpack.c.h.b16 %v806
        %v885 = vunpack.c.l.b16 %v807
        %v886 = vunpack.c.l.b16 %v808
        %v887 = vunpack.c.h.b16 %v808
        %v888 = vunpack.c.l.b16 %v809
        %v889 = vunpack.c.l.b16 %v810
        %v890 = vunpack.c.h.b16 %v810
        %v891 = vunpack.c.l.b16 %v811
        %v892 = vpack.c.b16 %v847, %v844
        %v893 = vpack.c.b16 %v848, %v845
        %v894 = vpack.c.b16 %v849, %v846
        %v895 = vpack.c.b16 %v853, %v850
        %v896 = vpack.c.b16 %v854, %v851
        %v897 = vpack.c.b16 %v855, %v852
        %v898 = vpack.c.b16 %v859, %v856
        %v899 = vpack.c.b16 %v860, %v857
        %v900 = vpack.c.b16 %v861, %v858
        %v901 = vpack.c.b16 %v865, %v862
        %v902 = vpack.c.b16 %v866, %v863
        %v903 = vpack.c.b16 %v867, %v864
        %v904 = vpack.c.b16 %v871, %v868
        %v905 = vpack.c.b16 %v872, %v869
        %v906 = vpack.c.b16 %v873, %v870
        %v907 = vpack.c.b16 %v877, %v874
        %v908 = vpack.c.b16 %v878, %v875
        %v909 = vpack.c.b16 %v879, %v876
        %v910 = vpack.c.b16 %v883, %v880
        %v911 = vpack.c.b16 %v884, %v881
        %v912 = vpack.c.b16 %v885, %v882
        %v913 = vpack.c.b16 %v889, %v886
        %v914 = vpack.c.b16 %v890, %v887
        %v915 = vpack.c.b16 %v891, %v888
        %940 = vmatprep.subr.bf16.mxu0 %v893
        %941 = vmatpush1.bf16.msra.mxu0 %v892
        %942 = vmatprep.subr.bf16.mxu0 %v896
        %943 = vmatpush1.bf16.msra.mxu0 %v895
        %944 = vmatprep.subr.bf16.mxu0 %v899
        %945 = vmatpush1.bf16.msra.mxu0 %v898
        %946 = vmatprep.subr.bf16.mxu0 %v902
        %947 = vmatpush1.bf16.msra.mxu0 %v901
        %948 = vmatprep.subr.bf16.mxu0 %v905
        %949 = vmatpush1.bf16.msra.mxu0 %v904
        %950 = vmatprep.subr.bf16.mxu0 %v908
        %951 = vmatpush1.bf16.msra.mxu0 %v907
        %952 = vmatprep.subr.bf16.mxu0 %v911
        %953 = vmatpush1.bf16.msra.mxu0 %v910
        %954 = vmatprep.subr.bf16.mxu0 %v914
        %955 = vmatpush1.bf16.msra.mxu0 %v913
        %956 = vmatprep.subr.bf16.mxu0 0
        %957 = vmatpush1.bf16.msra.mxu0 0
        %958 = vmatprep.subr.bf16.mxu0 0
        %959 = vmatpush1.bf16.msra.mxu0 0
        %960 = vmatprep.subr.bf16.mxu0 0
        %961 = vmatpush1.bf16.msra.mxu0 0
        %962 = vmatprep.subr.bf16.mxu0 0
        %963 = vmatpush1.bf16.msra.mxu0 0
        %964 = vmatprep.subr.bf16.mxu0 0
        %965 = vmatpush1.bf16.msra.mxu0 0
        %966 = vmatprep.subr.bf16.mxu0 0
        %967 = vmatpush1.bf16.msra.mxu0 0
        %968 = vmatprep.subr.bf16.mxu0 0
        %969 = vmatpush1.bf16.msra.mxu0 0
        %970 = vmatprep.subr.bf16.mxu0 0
        %971 = vmatpush1.bf16.msra.mxu0 0
        %972 = vmatprep.mubr.bf16.mxu0 0
        %973 = vmatmul.mubr.bf16.gmra.mrb[0].mxu0 %v772
        %v974 = vpop.f32.mrb[0].mxu0
        %v975 = vadd.f32 0.0, %v974
        %v976 = vpop.f32.mrb[0].mxu0
        %v977 = vadd.f32 0.0, %v976
        %v978 = vpop.f32.mrb[0].mxu0
        %v979 = vadd.f32 0.0, %v978
        %v980 = vpop.f32.mrb[0].mxu0
        %v981 = vadd.f32 0.0, %v980
        %982 = vmatprep.mubr.bf16.mxu0 0
        %983 = vmatmul.mubr.bf16.gmra.mrb[0].mxu0 %v773
        %v984 = vpop.f32.mrb[0].mxu0
        %v985 = vadd.f32 0.0, %v984
        %v986 = vpop.f32.mrb[0].mxu0
        %v987 = vadd.f32 0.0, %v986
        %v988 = vpop.f32.mrb[0].mxu0
        %v989 = vadd.f32 0.0, %v988
        %v990 = vpop.f32.mrb[0].mxu0
        %v991 = vadd.f32 0.0, %v990
        %992 = vmatprep.mubr.bf16.mxu0 0
        %993 = vmatmul.mubr.bf16.gmra.mrb[0].mxu0 %v774
        %v994 = vpop.f32.mrb[0].mxu0
        %v995 = vadd.f32 0.0, %v994
        %v996 = vpop.f32.mrb[0].mxu0
        %v997 = vadd.f32 0.0, %v996
        %v998 = vpop.f32.mrb[0].mxu0
        %v999 = vadd.f32 0.0, %v998
        %v1000 = vpop.f32.mrb[0].mxu0
        %v1001 = vadd.f32 0.0, %v1000
        %1002 = vmatprep.mubr.bf16.mxu0 0
        %1003 = vmatmul.mubr.bf16.gmra.mrb[0].mxu0 %v775
        %v1004 = vpop.f32.mrb[0].mxu0
        %v1005 = vadd.f32 0.0, %v1004
        %v1006 = vpop.f32.mrb[0].mxu0
        %v1007 = vadd.f32 0.0, %v1006
        %v1008 = vpop.f32.mrb[0].mxu0
        %v1009 = vadd.f32 0.0, %v1008
        %v1010 = vpop.f32.mrb[0].mxu0
        %v1011 = vadd.f32 0.0, %v1010
        %1012 = vmatprep.mubr.bf16.mxu0 0
        %1013 = vmatmul.mubr.bf16.gmra.mrb[0].mxu0 %v776
        %v1014 = vpop.f32.mrb[0].mxu0
        %v1015 = vadd.f32 0.0, %v1014
        %v1016 = vpop.f32.mrb[0].mxu0
        %v1017 = vadd.f32 0.0, %v1016
        %v1018 = vpop.f32.mrb[0].mxu0
        %v1019 = vadd.f32 0.0, %v1018
        %v1020 = vpop.f32.mrb[0].mxu0
        %v1021 = vadd.f32 0.0, %v1020
        %1022 = vmatprep.mubr.bf16.mxu0 0
        %1023 = vmatmul.mubr.bf16.gmra.mrb[0].mxu0 %v777
        %v1024 = vpop.f32.mrb[0].mxu0
        %v1025 = vadd.f32 0.0, %v1024
        %v1026 = vpop.f32.mrb[0].mxu0
        %v1027 = vadd.f32 0.0, %v1026
        %v1028 = vpop.f32.mrb[0].mxu0
        %v1029 = vadd.f32 0.0, %v1028
        %v1030 = vpop.f32.mrb[0].mxu0
        %v1031 = vadd.f32 0.0, %v1030
        %1032 = vmatprep.mubr.bf16.mxu0 0
        %1033 = vmatmul.mubr.bf16.gmra.mrb[0].mxu0 %v778
        %v1034 = vpop.f32.mrb[0].mxu0
        %v1035 = vadd.f32 0.0, %v1034
        %v1036 = vpop.f32.mrb[0].mxu0
        %v1037 = vadd.f32 0.0, %v1036
        %v1038 = vpop.f32.mrb[0].mxu0
        %v1039 = vadd.f32 0.0, %v1038
        %v1040 = vpop.f32.mrb[0].mxu0
        %v1041 = vadd.f32 0.0, %v1040
        %1042 = vmatprep.mubr.bf16.mxu0 0
        %1043 = vmatmul.mubr.bf16.gmra.mrb[0].mxu0 %v779
        %v1044 = vpop.f32.mrb[0].mxu0
        %v1045 = vadd.f32 0.0, %v1044
        %v1046 = vpop.f32.mrb[0].mxu0
        %v1047 = vadd.f32 0.0, %v1046
        %v1048 = vpop.f32.mrb[0].mxu0
        %v1049 = vadd.f32 0.0, %v1048
        %v1050 = vpop.f32.mrb[0].mxu0
        %v1051 = vadd.f32 0.0, %v1050
        %1052 = vdwg.mxu0
        %1053 = vmatprep.subr.bf16.mxu0 0
        %1054 = vmatpush1.bf16.msra.mxu0 %v894
        %1055 = vmatprep.subr.bf16.mxu0 0
        %1056 = vmatpush1.bf16.msra.mxu0 %v897
        %1057 = vmatprep.subr.bf16.mxu0 0
        %1058 = vmatpush1.bf16.msra.mxu0 %v900
        %1059 = vmatprep.subr.bf16.mxu0 0
        %1060 = vmatpush1.bf16.msra.mxu0 %v903
        %1061 = vmatprep.subr.bf16.mxu0 0
        %1062 = vmatpush1.bf16.msra.mxu0 %v906
        %1063 = vmatprep.subr.bf16.mxu0 0
        %1064 = vmatpush1.bf16.msra.mxu0 %v909
        %1065 = vmatprep.subr.bf16.mxu0 0
        %1066 = vmatpush1.bf16.msra.mxu0 %v912
        %1067 = vmatprep.subr.bf16.mxu0 0
        %1068 = vmatpush1.bf16.msra.mxu0 %v915
        %1069 = vmatprep.subr.bf16.mxu0 0
        %1070 = vmatpush1.bf16.msra.mxu0 0
        %1071 = vmatprep.subr.bf16.mxu0 0
        %1072 = vmatpush1.bf16.msra.mxu0 0
        %1073 = vmatprep.subr.bf16.mxu0 0
        %1074 = vmatpush1.bf16.msra.mxu0 0
        %1075 = vmatprep.subr.bf16.mxu0 0
        %1076 = vmatpush1.bf16.msra.mxu0 0
        %1077 = vmatprep.subr.bf16.mxu0 0
        %1078 = vmatpush1.bf16.msra.mxu0 0
        %1079 = vmatprep.subr.bf16.mxu0 0
        %1080 = vmatpush1.bf16.msra.mxu0 0
        %1081 = vmatprep.subr.bf16.mxu0 0
        %1082 = vmatpush1.bf16.msra.mxu0 0
        %1083 = vmatprep.subr.bf16.mxu0 0
        %1084 = vmatpush1.bf16.msra.mxu0 0
        %1085 = vmatprep.mubr.bf16.mxu0 0
        %1086 = vmatmul.mubr.bf16.gmra.mrb[0].mxu0 %v772
        %v1087 = vpop.f32.mrb[0].mxu0
        %v1088 = vadd.f32 0.0, %v1087
        %v1089 = vpop.f32.mrb[0].mxu0
        %v1090 = vpop.f32.mrb[0].mxu0
        %v1091 = vadd.f32 0.0, %v1090
        %v1092 = vpop.f32.mrb[0].mxu0
        %1093 = vmatprep.mubr.bf16.mxu0 0
        %1094 = vmatmul.mubr.bf16.gmra.mrb[0].mxu0 %v773
        %v1095 = vpop.f32.mrb[0].mxu0
        %v1096 = vadd.f32 0.0, %v1095
        %v1097 = vpop.f32.mrb[0].mxu0
        %v1098 = vpop.f32.mrb[0].mxu0
        %v1099 = vadd.f32 0.0, %v1098
        %v1100 = vpop.f32.mrb[0].mxu0
        %1101 = vmatprep.mubr.bf16.mxu0 0
        %1102 = vmatmul.mubr.bf16.gmra.mrb[0].mxu0 %v774
        %v1103 = vpop.f32.mrb[0].mxu0
        %v1104 = vadd.f32 0.0, %v1103
        %v1105 = vpop.f32.mrb[0].mxu0
        %v1106 = vpop.f32.mrb[0].mxu0
        %v1107 = vadd.f32 0.0, %v1106
        %v1108 = vpop.f32.mrb[0].mxu0
        %1109 = vmatprep.mubr.bf16.mxu0 0
        %1110 = vmatmul.mubr.bf16.gmra.mrb[0].mxu0 %v775
        %v1111 = vpop.f32.mrb[0].mxu0
        %v1112 = vadd.f32 0.0, %v1111
        %v1113 = vpop.f32.mrb[0].mxu0
        %v1114 = vpop.f32.mrb[0].mxu0
        %v1115 = vadd.f32 0.0, %v1114
        %v1116 = vpop.f32.mrb[0].mxu0
        %1117 = vmatprep.mubr.bf16.mxu0 0
        %1118 = vmatmul.mubr.bf16.gmra.mrb[0].mxu0 %v776
        %v1119 = vpop.f32.mrb[0].mxu0
        %v1120 = vadd.f32 0.0, %v1119
        %v1121 = vpop.f32.mrb[0].mxu0
        %v1122 = vpop.f32.mrb[0].mxu0
        %v1123 = vadd.f32 0.0, %v1122
        %v1124 = vpop.f32.mrb[0].mxu0
        %1125 = vmatprep.mubr.bf16.mxu0 0
        %1126 = vmatmul.mubr.bf16.gmra.mrb[0].mxu0 %v777
        %v1127 = vpop.f32.mrb[0].mxu0
        %v1128 = vadd.f32 0.0, %v1127
        %v1129 = vpop.f32.mrb[0].mxu0
        %v1130 = vpop.f32.mrb[0].mxu0
        %v1131 = vadd.f32 0.0, %v1130
        %v1132 = vpop.f32.mrb[0].mxu0
        %1133 = vmatprep.mubr.bf16.mxu0 0
        %1134 = vmatmul.mubr.bf16.gmra.mrb[0].mxu0 %v778
        %v1135 = vpop.f32.mrb[0].mxu0
        %v1136 = vadd.f32 0.0, %v1135
        %v1137 = vpop.f32.mrb[0].mxu0
        %v1138 = vpop.f32.mrb[0].mxu0
        %v1139 = vadd.f32 0.0, %v1138
        %v1140 = vpop.f32.mrb[0].mxu0
        %1141 = vmatprep.mubr.bf16.mxu0 0
        %1142 = vmatmul.mubr.bf16.gmra.mrb[0].mxu0 %v779
        %v1143 = vpop.f32.mrb[0].mxu0
        %v1144 = vadd.f32 0.0, %v1143
        %v1145 = vpop.f32.mrb[0].mxu0
        %v1146 = vpop.f32.mrb[0].mxu0
        %v1147 = vadd.f32 0.0, %v1146
        %v1148 = vpop.f32.mrb[0].mxu0
        %1149 = vdwg.mxu0
        %1166 = vrot.lane.b32.xlu0 %v975, 96
        %v1167 = vpop.permute.xlu0 %1166
        %1168 = vrot.lane.b32.xlu0 %v979, 96
        %v1169 = vpop.permute.xlu0 %1168
        %1170 = vrot.lane.b32.xlu0 %v985, 96
        %v1171 = vpop.permute.xlu0 %1170
        %1172 = vrot.lane.b32.xlu0 %v989, 96
        %v1173 = vpop.permute.xlu0 %1172
        %1174 = vrot.lane.b32.xlu0 %v995, 96
        %v1175 = vpop.permute.xlu0 %1174
        %1176 = vrot.lane.b32.xlu0 %v999, 96
        %v1177 = vpop.permute.xlu0 %1176
        %1178 = vrot.lane.b32.xlu0 %v1005, 96
        %v1179 = vpop.permute.xlu0 %1178
        %1180 = vrot.lane.b32.xlu0 %v1009, 96
        %v1181 = vpop.permute.xlu0 %1180
        %1182 = vrot.lane.b32.xlu0 %v1015, 96
        %v1183 = vpop.permute.xlu0 %1182
        %1184 = vrot.lane.b32.xlu0 %v1019, 96
        %v1185 = vpop.permute.xlu0 %1184
        %1186 = vrot.lane.b32.xlu0 %v1025, 96
        %v1187 = vpop.permute.xlu0 %1186
        %1188 = vrot.lane.b32.xlu0 %v1029, 96
        %v1189 = vpop.permute.xlu0 %1188
        %1190 = vrot.lane.b32.xlu0 %v1035, 96
        %v1191 = vpop.permute.xlu0 %1190
        %1192 = vrot.lane.b32.xlu0 %v1039, 96
        %v1193 = vpop.permute.xlu0 %1192
        %1194 = vrot.lane.b32.xlu0 %v1045, 96
        %v1195 = vpop.permute.xlu0 %1194
        %1196 = vrot.lane.b32.xlu0 %v1049, 96
        %v1197 = vpop.permute.xlu0 %1196
        %1214 = vrot.lane.b32.xlu0 %v975, 64
        %v1215 = vpop.permute.xlu0 %1214
        %1216 = vrot.lane.b32.xlu0 %v979, 64
        %v1217 = vpop.permute.xlu0 %1216
        %1218 = vrot.lane.b32.xlu0 %v985, 64
        %v1219 = vpop.permute.xlu0 %1218
        %1220 = vrot.lane.b32.xlu0 %v989, 64
        %v1221 = vpop.permute.xlu0 %1220
        %1222 = vrot.lane.b32.xlu0 %v995, 64
        %v1223 = vpop.permute.xlu0 %1222
        %1224 = vrot.lane.b32.xlu0 %v999, 64
        %v1225 = vpop.permute.xlu0 %1224
        %1226 = vrot.lane.b32.xlu0 %v1005, 64
        %v1227 = vpop.permute.xlu0 %1226
        %1228 = vrot.lane.b32.xlu0 %v1009, 64
        %v1229 = vpop.permute.xlu0 %1228
        %1230 = vrot.lane.b32.xlu0 %v1015, 64
        %v1231 = vpop.permute.xlu0 %1230
        %1232 = vrot.lane.b32.xlu0 %v1019, 64
        %v1233 = vpop.permute.xlu0 %1232
        %1234 = vrot.lane.b32.xlu0 %v1025, 64
        %v1235 = vpop.permute.xlu0 %1234
        %1236 = vrot.lane.b32.xlu0 %v1029, 64
        %v1237 = vpop.permute.xlu0 %1236
        %1238 = vrot.lane.b32.xlu0 %v1035, 64
        %v1239 = vpop.permute.xlu0 %1238
        %1240 = vrot.lane.b32.xlu0 %v1039, 64
        %v1241 = vpop.permute.xlu0 %1240
        %1242 = vrot.lane.b32.xlu0 %v1045, 64
        %v1243 = vpop.permute.xlu0 %1242
        %1244 = vrot.lane.b32.xlu0 %v1049, 64
        %v1245 = vpop.permute.xlu0 %1244
        %1262 = vrot.lane.b32.xlu0 %v975, 32
        %v1263 = vpop.permute.xlu0 %1262
        %1264 = vrot.lane.b32.xlu0 %v979, 32
        %v1265 = vpop.permute.xlu0 %1264
        %1266 = vrot.lane.b32.xlu0 %v985, 32
        %v1267 = vpop.permute.xlu0 %1266
        %1268 = vrot.lane.b32.xlu0 %v989, 32
        %v1269 = vpop.permute.xlu0 %1268
        %1270 = vrot.lane.b32.xlu0 %v995, 32
        %v1271 = vpop.permute.xlu0 %1270
        %1272 = vrot.lane.b32.xlu0 %v999, 32
        %v1273 = vpop.permute.xlu0 %1272
        %1274 = vrot.lane.b32.xlu0 %v1005, 32
        %v1275 = vpop.permute.xlu0 %1274
        %1276 = vrot.lane.b32.xlu0 %v1009, 32
        %v1277 = vpop.permute.xlu0 %1276
        %1278 = vrot.lane.b32.xlu0 %v1015, 32
        %v1279 = vpop.permute.xlu0 %1278
        %1280 = vrot.lane.b32.xlu0 %v1019, 32
        %v1281 = vpop.permute.xlu0 %1280
        %1282 = vrot.lane.b32.xlu0 %v1025, 32
        %v1283 = vpop.permute.xlu0 %1282
        %1284 = vrot.lane.b32.xlu0 %v1029, 32
        %v1285 = vpop.permute.xlu0 %1284
        %1286 = vrot.lane.b32.xlu0 %v1035, 32
        %v1287 = vpop.permute.xlu0 %1286
        %1288 = vrot.lane.b32.xlu0 %v1039, 32
        %v1289 = vpop.permute.xlu0 %1288
        %1290 = vrot.lane.b32.xlu0 %v1045, 32
        %v1291 = vpop.permute.xlu0 %1290
        %1292 = vrot.lane.b32.xlu0 %v1049, 32
        %v1293 = vpop.permute.xlu0 %1292
        %v1310 = vpack.c.bf16 %v979, %v975
        %v1311 = vpack.c.bf16 %v989, %v985
        %v1312 = vpack.c.bf16 %v999, %v995
        %v1313 = vpack.c.bf16 %v1009, %v1005
        %v1314 = vpack.c.bf16 %v1019, %v1015
        %v1315 = vpack.c.bf16 %v1029, %v1025
        %v1316 = vpack.c.bf16 %v1039, %v1035
        %v1317 = vpack.c.bf16 %v1049, %v1045
        %v1318 = vpack.c.bf16 %v1169, %v1167
        %v1319 = vpack.c.bf16 %v1173, %v1171
        %v1320 = vpack.c.bf16 %v1177, %v1175
        %v1321 = vpack.c.bf16 %v1181, %v1179
        %v1322 = vpack.c.bf16 %v1185, %v1183
        %v1323 = vpack.c.bf16 %v1189, %v1187
        %v1324 = vpack.c.bf16 %v1193, %v1191
        %v1325 = vpack.c.bf16 %v1197, %v1195
        %v1326 = vpack.c.bf16 %v1217, %v1215
        %v1327 = vpack.c.bf16 %v1221, %v1219
        %v1328 = vpack.c.bf16 %v1225, %v1223
        %v1329 = vpack.c.bf16 %v1229, %v1227
        %v1330 = vpack.c.bf16 %v1233, %v1231
        %v1331 = vpack.c.bf16 %v1237, %v1235
        %v1332 = vpack.c.bf16 %v1241, %v1239
        %v1333 = vpack.c.bf16 %v1245, %v1243
        %v1334 = vpack.c.bf16 %v1265, %v1263
        %v1335 = vpack.c.bf16 %v1269, %v1267
        %v1336 = vpack.c.bf16 %v1273, %v1271
        %v1337 = vpack.c.bf16 %v1277, %v1275
        %v1338 = vpack.c.bf16 %v1281, %v1279
        %v1339 = vpack.c.bf16 %v1285, %v1283
        %v1340 = vpack.c.bf16 %v1289, %v1287
        %v1341 = vpack.c.bf16 %v1293, %v1291
        %1358 = vrot.lane.b32.xlu0 %v977, 96
        %v1359 = vpop.permute.xlu0 %1358
        %1360 = vrot.lane.b32.xlu0 %v981, 96
        %v1361 = vpop.permute.xlu0 %1360
        %1362 = vrot.lane.b32.xlu0 %v987, 96
        %v1363 = vpop.permute.xlu0 %1362
        %1364 = vrot.lane.b32.xlu0 %v991, 96
        %v1365 = vpop.permute.xlu0 %1364
        %1366 = vrot.lane.b32.xlu0 %v997, 96
        %v1367 = vpop.permute.xlu0 %1366
        %1368 = vrot.lane.b32.xlu0 %v1001, 96
        %v1369 = vpop.permute.xlu0 %1368
        %1370 = vrot.lane.b32.xlu0 %v1007, 96
        %v1371 = vpop.permute.xlu0 %1370
        %1372 = vrot.lane.b32.xlu0 %v1011, 96
        %v1373 = vpop.permute.xlu0 %1372
        %1374 = vrot.lane.b32.xlu0 %v1017, 96
        %v1375 = vpop.permute.xlu0 %1374
        %1376 = vrot.lane.b32.xlu0 %v1021, 96
        %v1377 = vpop.permute.xlu0 %1376
        %1378 = vrot.lane.b32.xlu0 %v1027, 96
        %v1379 = vpop.permute.xlu0 %1378
        %1380 = vrot.lane.b32.xlu0 %v1031, 96
        %v1381 = vpop.permute.xlu0 %1380
        %1382 = vrot.lane.b32.xlu0 %v1037, 96
        %v1383 = vpop.permute.xlu0 %1382
        %1384 = vrot.lane.b32.xlu0 %v1041, 96
        %v1385 = vpop.permute.xlu0 %1384
        %1386 = vrot.lane.b32.xlu0 %v1047, 96
        %v1387 = vpop.permute.xlu0 %1386
        %1388 = vrot.lane.b32.xlu0 %v1051, 96
        %v1389 = vpop.permute.xlu0 %1388
        %1406 = vrot.lane.b32.xlu0 %v977, 64
        %v1407 = vpop.permute.xlu0 %1406
        %1408 = vrot.lane.b32.xlu0 %v981, 64
        %v1409 = vpop.permute.xlu0 %1408
        %1410 = vrot.lane.b32.xlu0 %v987, 64
        %v1411 = vpop.permute.xlu0 %1410
        %1412 = vrot.lane.b32.xlu0 %v991, 64
        %v1413 = vpop.permute.xlu0 %1412
        %1414 = vrot.lane.b32.xlu0 %v997, 64
        %v1415 = vpop.permute.xlu0 %1414
        %1416 = vrot.lane.b32.xlu0 %v1001, 64
        %v1417 = vpop.permute.xlu0 %1416
        %1418 = vrot.lane.b32.xlu0 %v1007, 64
        %v1419 = vpop.permute.xlu0 %1418
        %1420 = vrot.lane.b32.xlu0 %v1011, 64
        %v1421 = vpop.permute.xlu0 %1420
        %1422 = vrot.lane.b32.xlu0 %v1017, 64
        %v1423 = vpop.permute.xlu0 %1422
        %1424 = vrot.lane.b32.xlu0 %v1021, 64
        %v1425 = vpop.permute.xlu0 %1424
        %1426 = vrot.lane.b32.xlu0 %v1027, 64
        %v1427 = vpop.permute.xlu0 %1426
        %1428 = vrot.lane.b32.xlu0 %v1031, 64
        %v1429 = vpop.permute.xlu0 %1428
        %1430 = vrot.lane.b32.xlu0 %v1037, 64
        %v1431 = vpop.permute.xlu0 %1430
        %1432 = vrot.lane.b32.xlu0 %v1041, 64
        %v1433 = vpop.permute.xlu0 %1432
        %1434 = vrot.lane.b32.xlu0 %v1047, 64
        %v1435 = vpop.permute.xlu0 %1434
        %1436 = vrot.lane.b32.xlu0 %v1051, 64
        %v1437 = vpop.permute.xlu0 %1436
        %1454 = vrot.lane.b32.xlu0 %v977, 32
        %v1455 = vpop.permute.xlu0 %1454
        %1456 = vrot.lane.b32.xlu0 %v981, 32
        %v1457 = vpop.permute.xlu0 %1456
        %1458 = vrot.lane.b32.xlu0 %v987, 32
        %v1459 = vpop.permute.xlu0 %1458
        %1460 = vrot.lane.b32.xlu0 %v991, 32
        %v1461 = vpop.permute.xlu0 %1460
        %1462 = vrot.lane.b32.xlu0 %v997, 32
        %v1463 = vpop.permute.xlu0 %1462
        %1464 = vrot.lane.b32.xlu0 %v1001, 32
        %v1465 = vpop.permute.xlu0 %1464
        %1466 = vrot.lane.b32.xlu0 %v1007, 32
        %v1467 = vpop.permute.xlu0 %1466
        %1468 = vrot.lane.b32.xlu0 %v1011, 32
        %v1469 = vpop.permute.xlu0 %1468
        %1470 = vrot.lane.b32.xlu0 %v1017, 32
        %v1471 = vpop.permute.xlu0 %1470
        %1472 = vrot.lane.b32.xlu0 %v1021, 32
        %v1473 = vpop.permute.xlu0 %1472
        %1474 = vrot.lane.b32.xlu0 %v1027, 32
        %v1475 = vpop.permute.xlu0 %1474
        %1476 = vrot.lane.b32.xlu0 %v1031, 32
        %v1477 = vpop.permute.xlu0 %1476
        %1478 = vrot.lane.b32.xlu0 %v1037, 32
        %v1479 = vpop.permute.xlu0 %1478
        %1480 = vrot.lane.b32.xlu0 %v1041, 32
        %v1481 = vpop.permute.xlu0 %1480
        %1482 = vrot.lane.b32.xlu0 %v1047, 32
        %v1483 = vpop.permute.xlu0 %1482
        %1484 = vrot.lane.b32.xlu0 %v1051, 32
        %v1485 = vpop.permute.xlu0 %1484
        %v1502 = vpack.c.bf16 %v981, %v977
        %v1503 = vpack.c.bf16 %v991, %v987
        %v1504 = vpack.c.bf16 %v1001, %v997
        %v1505 = vpack.c.bf16 %v1011, %v1007
        %v1506 = vpack.c.bf16 %v1021, %v1017
        %v1507 = vpack.c.bf16 %v1031, %v1027
        %v1508 = vpack.c.bf16 %v1041, %v1037
        %v1509 = vpack.c.bf16 %v1051, %v1047
        %v1510 = vpack.c.bf16 %v1361, %v1359
        %v1511 = vpack.c.bf16 %v1365, %v1363
        %v1512 = vpack.c.bf16 %v1369, %v1367
        %v1513 = vpack.c.bf16 %v1373, %v1371
        %v1514 = vpack.c.bf16 %v1377, %v1375
        %v1515 = vpack.c.bf16 %v1381, %v1379
        %v1516 = vpack.c.bf16 %v1385, %v1383
        %v1517 = vpack.c.bf16 %v1389, %v1387
        %v1518 = vpack.c.bf16 %v1409, %v1407
        %v1519 = vpack.c.bf16 %v1413, %v1411
        %v1520 = vpack.c.bf16 %v1417, %v1415
        %v1521 = vpack.c.bf16 %v1421, %v1419
        %v1522 = vpack.c.bf16 %v1425, %v1423
        %v1523 = vpack.c.bf16 %v1429, %v1427
        %v1524 = vpack.c.bf16 %v1433, %v1431
        %v1525 = vpack.c.bf16 %v1437, %v1435
        %v1526 = vpack.c.bf16 %v1457, %v1455
        %v1527 = vpack.c.bf16 %v1461, %v1459
        %v1528 = vpack.c.bf16 %v1465, %v1463
        %v1529 = vpack.c.bf16 %v1469, %v1467
        %v1530 = vpack.c.bf16 %v1473, %v1471
        %v1531 = vpack.c.bf16 %v1477, %v1475
        %v1532 = vpack.c.bf16 %v1481, %v1479
        %v1533 = vpack.c.bf16 %v1485, %v1483
        %1550 = vrot.lane.b32.xlu0 %v1088, 96
        %v1551 = vpop.permute.xlu0 %1550
        %1552 = vrot.lane.b32.xlu0 %v1091, 96
        %v1553 = vpop.permute.xlu0 %1552
        %1554 = vrot.lane.b32.xlu0 %v1096, 96
        %v1555 = vpop.permute.xlu0 %1554
        %1556 = vrot.lane.b32.xlu0 %v1099, 96
        %v1557 = vpop.permute.xlu0 %1556
        %1558 = vrot.lane.b32.xlu0 %v1104, 96
        %v1559 = vpop.permute.xlu0 %1558
        %1560 = vrot.lane.b32.xlu0 %v1107, 96
        %v1561 = vpop.permute.xlu0 %1560
        %1562 = vrot.lane.b32.xlu0 %v1112, 96
        %v1563 = vpop.permute.xlu0 %1562
        %1564 = vrot.lane.b32.xlu0 %v1115, 96
        %v1565 = vpop.permute.xlu0 %1564
        %1566 = vrot.lane.b32.xlu0 %v1120, 96
        %v1567 = vpop.permute.xlu0 %1566
        %1568 = vrot.lane.b32.xlu0 %v1123, 96
        %v1569 = vpop.permute.xlu0 %1568
        %1570 = vrot.lane.b32.xlu0 %v1128, 96
        %v1571 = vpop.permute.xlu0 %1570
        %1572 = vrot.lane.b32.xlu0 %v1131, 96
        %v1573 = vpop.permute.xlu0 %1572
        %1574 = vrot.lane.b32.xlu0 %v1136, 96
        %v1575 = vpop.permute.xlu0 %1574
        %1576 = vrot.lane.b32.xlu0 %v1139, 96
        %v1577 = vpop.permute.xlu0 %1576
        %1578 = vrot.lane.b32.xlu0 %v1144, 96
        %v1579 = vpop.permute.xlu0 %1578
        %1580 = vrot.lane.b32.xlu0 %v1147, 96
        %v1581 = vpop.permute.xlu0 %1580
        %1598 = vrot.lane.b32.xlu0 %v1088, 64
        %v1599 = vpop.permute.xlu0 %1598
        %1600 = vrot.lane.b32.xlu0 %v1091, 64
        %v1601 = vpop.permute.xlu0 %1600
        %1602 = vrot.lane.b32.xlu0 %v1096, 64
        %v1603 = vpop.permute.xlu0 %1602
        %1604 = vrot.lane.b32.xlu0 %v1099, 64
        %v1605 = vpop.permute.xlu0 %1604
        %1606 = vrot.lane.b32.xlu0 %v1104, 64
        %v1607 = vpop.permute.xlu0 %1606
        %1608 = vrot.lane.b32.xlu0 %v1107, 64
        %v1609 = vpop.permute.xlu0 %1608
        %1610 = vrot.lane.b32.xlu0 %v1112, 64
        %v1611 = vpop.permute.xlu0 %1610
        %1612 = vrot.lane.b32.xlu0 %v1115, 64
        %v1613 = vpop.permute.xlu0 %1612
        %1614 = vrot.lane.b32.xlu0 %v1120, 64
        %v1615 = vpop.permute.xlu0 %1614
        %1616 = vrot.lane.b32.xlu0 %v1123, 64
        %v1617 = vpop.permute.xlu0 %1616
        %1618 = vrot.lane.b32.xlu0 %v1128, 64
        %v1619 = vpop.permute.xlu0 %1618
        %1620 = vrot.lane.b32.xlu0 %v1131, 64
        %v1621 = vpop.permute.xlu0 %1620
        %1622 = vrot.lane.b32.xlu0 %v1136, 64
        %v1623 = vpop.permute.xlu0 %1622
        %1624 = vrot.lane.b32.xlu0 %v1139, 64
        %v1625 = vpop.permute.xlu0 %1624
        %1626 = vrot.lane.b32.xlu0 %v1144, 64
        %v1627 = vpop.permute.xlu0 %1626
        %1628 = vrot.lane.b32.xlu0 %v1147, 64
        %v1629 = vpop.permute.xlu0 %1628
        %1646 = vrot.lane.b32.xlu0 %v1088, 32
        %v1647 = vpop.permute.xlu0 %1646
        %1648 = vrot.lane.b32.xlu0 %v1091, 32
        %v1649 = vpop.permute.xlu0 %1648
        %1650 = vrot.lane.b32.xlu0 %v1096, 32
        %v1651 = vpop.permute.xlu0 %1650
        %1652 = vrot.lane.b32.xlu0 %v1099, 32
        %v1653 = vpop.permute.xlu0 %1652
        %1654 = vrot.lane.b32.xlu0 %v1104, 32
        %v1655 = vpop.permute.xlu0 %1654
        %1656 = vrot.lane.b32.xlu0 %v1107, 32
        %v1657 = vpop.permute.xlu0 %1656
        %1658 = vrot.lane.b32.xlu0 %v1112, 32
        %v1659 = vpop.permute.xlu0 %1658
        %1660 = vrot.lane.b32.xlu0 %v1115, 32
        %v1661 = vpop.permute.xlu0 %1660
        %1662 = vrot.lane.b32.xlu0 %v1120, 32
        %v1663 = vpop.permute.xlu0 %1662
        %1664 = vrot.lane.b32.xlu0 %v1123, 32
        %v1665 = vpop.permute.xlu0 %1664
        %1666 = vrot.lane.b32.xlu0 %v1128, 32
        %v1667 = vpop.permute.xlu0 %1666
        %1668 = vrot.lane.b32.xlu0 %v1131, 32
        %v1669 = vpop.permute.xlu0 %1668
        %1670 = vrot.lane.b32.xlu0 %v1136, 32
        %v1671 = vpop.permute.xlu0 %1670
        %1672 = vrot.lane.b32.xlu0 %v1139, 32
        %v1673 = vpop.permute.xlu0 %1672
        %1674 = vrot.lane.b32.xlu0 %v1144, 32
        %v1675 = vpop.permute.xlu0 %1674
        %1676 = vrot.lane.b32.xlu0 %v1147, 32
        %v1677 = vpop.permute.xlu0 %1676
        %v1694 = vpack.c.bf16 %v1091, %v1088
        %v1695 = vpack.c.bf16 %v1099, %v1096
        %v1696 = vpack.c.bf16 %v1107, %v1104
        %v1697 = vpack.c.bf16 %v1115, %v1112
        %v1698 = vpack.c.bf16 %v1123, %v1120
        %v1699 = vpack.c.bf16 %v1131, %v1128
        %v1700 = vpack.c.bf16 %v1139, %v1136
        %v1701 = vpack.c.bf16 %v1147, %v1144
        %v1702 = vpack.c.bf16 %v1553, %v1551
        %v1703 = vpack.c.bf16 %v1557, %v1555
        %v1704 = vpack.c.bf16 %v1561, %v1559
        %v1705 = vpack.c.bf16 %v1565, %v1563
        %v1706 = vpack.c.bf16 %v1569, %v1567
        %v1707 = vpack.c.bf16 %v1573, %v1571
        %v1708 = vpack.c.bf16 %v1577, %v1575
        %v1709 = vpack.c.bf16 %v1581, %v1579
        %v1710 = vpack.c.bf16 %v1601, %v1599
        %v1711 = vpack.c.bf16 %v1605, %v1603
        %v1712 = vpack.c.bf16 %v1609, %v1607
        %v1713 = vpack.c.bf16 %v1613, %v1611
        %v1714 = vpack.c.bf16 %v1617, %v1615
        %v1715 = vpack.c.bf16 %v1621, %v1619
        %v1716 = vpack.c.bf16 %v1625, %v1623
        %v1717 = vpack.c.bf16 %v1629, %v1627
        %v1718 = vpack.c.bf16 %v1649, %v1647
        %v1719 = vpack.c.bf16 %v1653, %v1651
        %v1720 = vpack.c.bf16 %v1657, %v1655
        %v1721 = vpack.c.bf16 %v1661, %v1659
        %v1722 = vpack.c.bf16 %v1665, %v1663
        %v1723 = vpack.c.bf16 %v1669, %v1667
        %v1724 = vpack.c.bf16 %v1673, %v1671
        %v1725 = vpack.c.bf16 %v1677, %v1675
        %v1726 = vld [vmem:[#allocation6] sm:$0xff]
        %v1727 = vld [vmem:[#allocation6 + $0x8] sm:$0xff]
        %v1728 = vld [vmem:[#allocation6 + $0x10] sm:$0xff]
        %v1729 = vld [vmem:[#allocation6 + $0x18] sm:$0xff]
        %v1730 = vld [vmem:[#allocation6 + $0x20] sm:$0xff]
        %v1731 = vld [vmem:[#allocation6 + $0x28] sm:$0xff]
        %v1732 = vld [vmem:[#allocation6 + $0x30] sm:$0xff]
        %v1733 = vld [vmem:[#allocation6 + $0x38] sm:$0xff]
        %v1734 = vld [vmem:[#allocation6 + $0x40] sm:$0xff]
        %v1735 = vld [vmem:[#allocation6 + $0x48] sm:$0xff]
        %v1736 = vld [vmem:[#allocation6 + $0x50] sm:$0xff]
        %v1737 = vld [vmem:[#allocation6 + $0x58] sm:$0xff]
        %v1738 = vld [vmem:[#allocation6 + $0x60] sm:$0xff]
        %v1739 = vld [vmem:[#allocation6 + $0x68] sm:$0xff]
        %v1740 = vld [vmem:[#allocation6 + $0x70] sm:$0xff]
        %v1741 = vld [vmem:[#allocation6 + $0x78] sm:$0xff]
        %vm1742 = vcmask 261120
        %v1744 = vsel %vm1742, %v1310, 0
        %v1747 = vsel %vm1742, %v1311, 0
        %v1750 = vsel %vm1742, %v1312, 0
        %v1753 = vsel %vm1742, %v1313, 0
        %v1756 = vsel %vm1742, %v1314, 0
        %v1759 = vsel %vm1742, %v1315, 0
        %v1762 = vsel %vm1742, %v1316, 0
        %v1765 = vsel %vm1742, %v1317, 0
        %v1768 = vsel %vm1742, %v1502, 0
        %v1771 = vsel %vm1742, %v1503, 0
        %v1774 = vsel %vm1742, %v1504, 0
        %v1777 = vsel %vm1742, %v1505, 0
        %v1780 = vsel %vm1742, %v1506, 0
        %v1783 = vsel %vm1742, %v1507, 0
        %v1786 = vsel %vm1742, %v1508, 0
        %v1789 = vsel %vm1742, %v1509, 0
        %1791 = vmatprep.subr.bf16.mxu0 0
        %1792 = vmatpush1.bf16.xpose.msra.mxu0 %v1768
        %1793 = vmatprep.subr.bf16.mxu0 0
        %1794 = vmatpush1.bf16.xpose.msra.mxu0 %v1771
        %1795 = vmatprep.subr.bf16.mxu0 0
        %1796 = vmatpush1.bf16.xpose.msra.mxu0 %v1774
        %1797 = vmatprep.subr.bf16.mxu0 0
        %1798 = vmatpush1.bf16.xpose.msra.mxu0 %v1777
        %1799 = vmatprep.subr.bf16.mxu0 0
        %1800 = vmatpush1.bf16.xpose.msra.mxu0 %v1780
        %1801 = vmatprep.subr.bf16.mxu0 0
        %1802 = vmatpush1.bf16.xpose.msra.mxu0 %v1783
        %1803 = vmatprep.subr.bf16.mxu0 0
        %1804 = vmatpush1.bf16.xpose.msra.mxu0 %v1786
        %1805 = vmatprep.subr.bf16.mxu0 0
        %1806 = vmatpush1.bf16.xpose.msra.mxu0 %v1789
        %1807 = vmatprep.subr.bf16.mxu0 0
        %1808 = vmatpush1.bf16.xpose.msra.mxu0 0
        %1809 = vmatprep.subr.bf16.mxu0 0
        %1810 = vmatpush1.bf16.xpose.msra.mxu0 0
        %1811 = vmatprep.subr.bf16.mxu0 0
        %1812 = vmatpush1.bf16.xpose.msra.mxu0 0
        %1813 = vmatprep.subr.bf16.mxu0 0
        %1814 = vmatpush1.bf16.xpose.msra.mxu0 0
        %1815 = vmatprep.subr.bf16.mxu0 0
        %1816 = vmatpush1.bf16.xpose.msra.mxu0 0
        %1817 = vmatprep.subr.bf16.mxu0 0
        %1818 = vmatpush1.bf16.xpose.msra.mxu0 0
        %1819 = vmatprep.subr.bf16.mxu0 0
        %1820 = vmatpush1.bf16.xpose.msra.mxu0 0
        %1821 = vmatprep.subr.bf16.mxu0 0
        %1822 = vmatpush1.bf16.xpose.msra.mxu0 0
        %1823 = vmatprep.mubr.bf16.mxu0 0
        %1824 = vmatmul.mubr.bf16.gmra.mrb[0].mxu0 %v1744
        %v1825 = vpop.f32.mrb[0].mxu0
        %v1826 = vadd.f32 %v1726, %v1825
        %v1827 = vpop.f32.mrb[0].mxu0
        %v1828 = vpop.f32.mrb[0].mxu0
        %v1829 = vadd.f32 %v1727, %v1828
        %v1830 = vpop.f32.mrb[0].mxu0
        %1831 = vmatprep.mubr.bf16.mxu0 0
        %1832 = vmatmul.mubr.bf16.gmra.mrb[0].mxu0 %v1747
        %v1833 = vpop.f32.mrb[0].mxu0
        %v1834 = vadd.f32 %v1728, %v1833
        %v1835 = vpop.f32.mrb[0].mxu0
        %v1836 = vpop.f32.mrb[0].mxu0
        %v1837 = vadd.f32 %v1729, %v1836
        %v1838 = vpop.f32.mrb[0].mxu0
        %1839 = vmatprep.mubr.bf16.mxu0 0
        %1840 = vmatmul.mubr.bf16.gmra.mrb[0].mxu0 %v1750
        %v1841 = vpop.f32.mrb[0].mxu0
        %v1842 = vadd.f32 %v1730, %v1841
        %v1843 = vpop.f32.mrb[0].mxu0
        %v1844 = vpop.f32.mrb[0].mxu0
        %v1845 = vadd.f32 %v1731, %v1844
        %v1846 = vpop.f32.mrb[0].mxu0
        %1847 = vmatprep.mubr.bf16.mxu0 0
        %1848 = vmatmul.mubr.bf16.gmra.mrb[0].mxu0 %v1753
        %v1849 = vpop.f32.mrb[0].mxu0
        %v1850 = vadd.f32 %v1732, %v1849
        %v1851 = vpop.f32.mrb[0].mxu0
        %v1852 = vpop.f32.mrb[0].mxu0
        %v1853 = vadd.f32 %v1733, %v1852
        %v1854 = vpop.f32.mrb[0].mxu0
        %1855 = vmatprep.mubr.bf16.mxu0 0
        %1856 = vmatmul.mubr.bf16.gmra.mrb[0].mxu0 %v1756
        %v1857 = vpop.f32.mrb[0].mxu0
        %v1858 = vadd.f32 %v1734, %v1857
        %v1859 = vpop.f32.mrb[0].mxu0
        %v1860 = vpop.f32.mrb[0].mxu0
        %v1861 = vadd.f32 %v1735, %v1860
        %v1862 = vpop.f32.mrb[0].mxu0
        %1863 = vmatprep.mubr.bf16.mxu0 0
        %1864 = vmatmul.mubr.bf16.gmra.mrb[0].mxu0 %v1759
        %v1865 = vpop.f32.mrb[0].mxu0
        %v1866 = vadd.f32 %v1736, %v1865
        %v1867 = vpop.f32.mrb[0].mxu0
        %v1868 = vpop.f32.mrb[0].mxu0
        %v1869 = vadd.f32 %v1737, %v1868
        %v1870 = vpop.f32.mrb[0].mxu0
        %1871 = vmatprep.mubr.bf16.mxu0 0
        %1872 = vmatmul.mubr.bf16.gmra.mrb[0].mxu0 %v1762
        %v1873 = vpop.f32.mrb[0].mxu0
        %v1874 = vadd.f32 %v1738, %v1873
        %v1875 = vpop.f32.mrb[0].mxu0
        %v1876 = vpop.f32.mrb[0].mxu0
        %v1877 = vadd.f32 %v1739, %v1876
        %v1878 = vpop.f32.mrb[0].mxu0
        %1879 = vmatprep.mubr.bf16.mxu0 0
        %1880 = vmatmul.mubr.bf16.gmra.mrb[0].mxu0 %v1765
        %v1881 = vpop.f32.mrb[0].mxu0
        %v1882 = vadd.f32 %v1740, %v1881
        %v1883 = vpop.f32.mrb[0].mxu0
        %v1884 = vpop.f32.mrb[0].mxu0
        %v1885 = vadd.f32 %v1741, %v1884
        %v1886 = vpop.f32.mrb[0].mxu0
        %1887 = vdwg.mxu0
        %v1889 = vsel %vm1742, %v1318, 0
        %v1892 = vsel %vm1742, %v1319, 0
        %v1895 = vsel %vm1742, %v1320, 0
        %v1898 = vsel %vm1742, %v1321, 0
        %v1901 = vsel %vm1742, %v1322, 0
        %v1904 = vsel %vm1742, %v1323, 0
        %v1907 = vsel %vm1742, %v1324, 0
        %v1910 = vsel %vm1742, %v1325, 0
        %v1913 = vsel %vm1742, %v1510, 0
        %v1916 = vsel %vm1742, %v1511, 0
        %v1919 = vsel %vm1742, %v1512, 0
        %v1922 = vsel %vm1742, %v1513, 0
        %v1925 = vsel %vm1742, %v1514, 0
        %v1928 = vsel %vm1742, %v1515, 0
        %v1931 = vsel %vm1742, %v1516, 0
        %v1934 = vsel %vm1742, %v1517, 0
        %1936 = vmatprep.subr.bf16.mxu0 0
        %1937 = vmatpush1.bf16.xpose.msra.mxu0 %v1913
        %1938 = vmatprep.subr.bf16.mxu0 0
        %1939 = vmatpush1.bf16.xpose.msra.mxu0 %v1916
        %1940 = vmatprep.subr.bf16.mxu0 0
        %1941 = vmatpush1.bf16.xpose.msra.mxu0 %v1919
        %1942 = vmatprep.subr.bf16.mxu0 0
        %1943 = vmatpush1.bf16.xpose.msra.mxu0 %v1922
        %1944 = vmatprep.subr.bf16.mxu0 0
        %1945 = vmatpush1.bf16.xpose.msra.mxu0 %v1925
        %1946 = vmatprep.subr.bf16.mxu0 0
        %1947 = vmatpush1.bf16.xpose.msra.mxu0 %v1928
        %1948 = vmatprep.subr.bf16.mxu0 0
        %1949 = vmatpush1.bf16.xpose.msra.mxu0 %v1931
        %1950 = vmatprep.subr.bf16.mxu0 0
        %1951 = vmatpush1.bf16.xpose.msra.mxu0 %v1934
        %1952 = vmatprep.subr.bf16.mxu0 0
        %1953 = vmatpush1.bf16.xpose.msra.mxu0 0
        %1954 = vmatprep.subr.bf16.mxu0 0
        %1955 = vmatpush1.bf16.xpose.msra.mxu0 0
        %1956 = vmatprep.subr.bf16.mxu0 0
        %1957 = vmatpush1.bf16.xpose.msra.mxu0 0
        %1958 = vmatprep.subr.bf16.mxu0 0
        %1959 = vmatpush1.bf16.xpose.msra.mxu0 0
        %1960 = vmatprep.subr.bf16.mxu0 0
        %1961 = vmatpush1.bf16.xpose.msra.mxu0 0
        %1962 = vmatprep.subr.bf16.mxu0 0
        %1963 = vmatpush1.bf16.xpose.msra.mxu0 0
        %1964 = vmatprep.subr.bf16.mxu0 0
        %1965 = vmatpush1.bf16.xpose.msra.mxu0 0
        %1966 = vmatprep.subr.bf16.mxu0 0
        %1967 = vmatpush1.bf16.xpose.msra.mxu0 0
        %1968 = vmatprep.mubr.bf16.mxu0 0
        %1969 = vmatmul.mubr.bf16.gmra.mrb[0].mxu0 %v1889
        %v1970 = vpop.f32.mrb[0].mxu0
        %v1971 = vadd.f32 %v1726, %v1970
        %v1972 = vpop.f32.mrb[0].mxu0
        %v1973 = vpop.f32.mrb[0].mxu0
        %v1974 = vadd.f32 %v1727, %v1973
        %v1975 = vpop.f32.mrb[0].mxu0
        %1976 = vmatprep.mubr.bf16.mxu0 0
        %1977 = vmatmul.mubr.bf16.gmra.mrb[0].mxu0 %v1892
        %v1978 = vpop.f32.mrb[0].mxu0
        %v1979 = vadd.f32 %v1728, %v1978
        %v1980 = vpop.f32.mrb[0].mxu0
        %v1981 = vpop.f32.mrb[0].mxu0
        %v1982 = vadd.f32 %v1729, %v1981
        %v1983 = vpop.f32.mrb[0].mxu0
        %1984 = vmatprep.mubr.bf16.mxu0 0
        %1985 = vmatmul.mubr.bf16.gmra.mrb[0].mxu0 %v1895
        %v1986 = vpop.f32.mrb[0].mxu0
        %v1987 = vadd.f32 %v1730, %v1986
        %v1988 = vpop.f32.mrb[0].mxu0
        %v1989 = vpop.f32.mrb[0].mxu0
        %v1990 = vadd.f32 %v1731, %v1989
        %v1991 = vpop.f32.mrb[0].mxu0
        %1992 = vmatprep.mubr.bf16.mxu0 0
        %1993 = vmatmul.mubr.bf16.gmra.mrb[0].mxu0 %v1898
        %v1994 = vpop.f32.mrb[0].mxu0
        %v1995 = vadd.f32 %v1732, %v1994
        %v1996 = vpop.f32.mrb[0].mxu0
        %v1997 = vpop.f32.mrb[0].mxu0
        %v1998 = vadd.f32 %v1733, %v1997
        %v1999 = vpop.f32.mrb[0].mxu0
        %2000 = vmatprep.mubr.bf16.mxu0 0
        %2001 = vmatmul.mubr.bf16.gmra.mrb[0].mxu0 %v1901
        %v2002 = vpop.f32.mrb[0].mxu0
        %v2003 = vadd.f32 %v1734, %v2002
        %v2004 = vpop.f32.mrb[0].mxu0
        %v2005 = vpop.f32.mrb[0].mxu0
        %v2006 = vadd.f32 %v1735, %v2005
        %v2007 = vpop.f32.mrb[0].mxu0
        %2008 = vmatprep.mubr.bf16.mxu0 0
        %2009 = vmatmul.mubr.bf16.gmra.mrb[0].mxu0 %v1904
        %v2010 = vpop.f32.mrb[0].mxu0
        %v2011 = vadd.f32 %v1736, %v2010
        %v2012 = vpop.f32.mrb[0].mxu0
        %v2013 = vpop.f32.mrb[0].mxu0
        %v2014 = vadd.f32 %v1737, %v2013
        %v2015 = vpop.f32.mrb[0].mxu0
        %2016 = vmatprep.mubr.bf16.mxu0 0
        %2017 = vmatmul.mubr.bf16.gmra.mrb[0].mxu0 %v1907
        %v2018 = vpop.f32.mrb[0].mxu0
        %v2019 = vadd.f32 %v1738, %v2018
        %v2020 = vpop.f32.mrb[0].mxu0
        %v2021 = vpop.f32.mrb[0].mxu0
        %v2022 = vadd.f32 %v1739, %v2021
        %v2023 = vpop.f32.mrb[0].mxu0
        %2024 = vmatprep.mubr.bf16.mxu0 0
        %2025 = vmatmul.mubr.bf16.gmra.mrb[0].mxu0 %v1910
        %v2026 = vpop.f32.mrb[0].mxu0
        %v2027 = vadd.f32 %v1740, %v2026
        %v2028 = vpop.f32.mrb[0].mxu0
        %v2029 = vpop.f32.mrb[0].mxu0
        %v2030 = vadd.f32 %v1741, %v2029
        %v2031 = vpop.f32.mrb[0].mxu0
        %2032 = vdwg.mxu0
        %v2034 = vsel %vm1742, %v1326, 0
        %v2037 = vsel %vm1742, %v1327, 0
        %v2040 = vsel %vm1742, %v1328, 0
        %v2043 = vsel %vm1742, %v1329, 0
        %v2046 = vsel %vm1742, %v1330, 0
        %v2049 = vsel %vm1742, %v1331, 0
        %v2052 = vsel %vm1742, %v1332, 0
        %v2055 = vsel %vm1742, %v1333, 0
        %v2058 = vsel %vm1742, %v1518, 0
        %v2061 = vsel %vm1742, %v1519, 0
        %v2064 = vsel %vm1742, %v1520, 0
        %v2067 = vsel %vm1742, %v1521, 0
        %v2070 = vsel %vm1742, %v1522, 0
        %v2073 = vsel %vm1742, %v1523, 0
        %v2076 = vsel %vm1742, %v1524, 0
        %v2079 = vsel %vm1742, %v1525, 0
        %2081 = vmatprep.subr.bf16.mxu0 0
        %2082 = vmatpush1.bf16.xpose.msra.mxu0 %v2058
        %2083 = vmatprep.subr.bf16.mxu0 0
        %2084 = vmatpush1.bf16.xpose.msra.mxu0 %v2061
        %2085 = vmatprep.subr.bf16.mxu0 0
        %2086 = vmatpush1.bf16.xpose.msra.mxu0 %v2064
        %2087 = vmatprep.subr.bf16.mxu0 0
        %2088 = vmatpush1.bf16.xpose.msra.mxu0 %v2067
        %2089 = vmatprep.subr.bf16.mxu0 0
        %2090 = vmatpush1.bf16.xpose.msra.mxu0 %v2070
        %2091 = vmatprep.subr.bf16.mxu0 0
        %2092 = vmatpush1.bf16.xpose.msra.mxu0 %v2073
        %2093 = vmatprep.subr.bf16.mxu0 0
        %2094 = vmatpush1.bf16.xpose.msra.mxu0 %v2076
        %2095 = vmatprep.subr.bf16.mxu0 0
        %2096 = vmatpush1.bf16.xpose.msra.mxu0 %v2079
        %2097 = vmatprep.subr.bf16.mxu0 0
        %2098 = vmatpush1.bf16.xpose.msra.mxu0 0
        %2099 = vmatprep.subr.bf16.mxu0 0
        %2100 = vmatpush1.bf16.xpose.msra.mxu0 0
        %2101 = vmatprep.subr.bf16.mxu0 0
        %2102 = vmatpush1.bf16.xpose.msra.mxu0 0
        %2103 = vmatprep.subr.bf16.mxu0 0
        %2104 = vmatpush1.bf16.xpose.msra.mxu0 0
        %2105 = vmatprep.subr.bf16.mxu0 0
        %2106 = vmatpush1.bf16.xpose.msra.mxu0 0
        %2107 = vmatprep.subr.bf16.mxu0 0
        %2108 = vmatpush1.bf16.xpose.msra.mxu0 0
        %2109 = vmatprep.subr.bf16.mxu0 0
        %2110 = vmatpush1.bf16.xpose.msra.mxu0 0
        %2111 = vmatprep.subr.bf16.mxu0 0
        %2112 = vmatpush1.bf16.xpose.msra.mxu0 0
        %2113 = vmatprep.mubr.bf16.mxu0 0
        %2114 = vmatmul.mubr.bf16.gmra.mrb[0].mxu0 %v2034
        %v2115 = vpop.f32.mrb[0].mxu0
        %v2116 = vadd.f32 %v1726, %v2115
        %v2117 = vpop.f32.mrb[0].mxu0
        %v2118 = vpop.f32.mrb[0].mxu0
        %v2119 = vadd.f32 %v1727, %v2118
        %v2120 = vpop.f32.mrb[0].mxu0
        %2121 = vmatprep.mubr.bf16.mxu0 0
        %2122 = vmatmul.mubr.bf16.gmra.mrb[0].mxu0 %v2037
        %v2123 = vpop.f32.mrb[0].mxu0
        %v2124 = vadd.f32 %v1728, %v2123
        %v2125 = vpop.f32.mrb[0].mxu0
        %v2126 = vpop.f32.mrb[0].mxu0
        %v2127 = vadd.f32 %v1729, %v2126
        %v2128 = vpop.f32.mrb[0].mxu0
        %2129 = vmatprep.mubr.bf16.mxu0 0
        %2130 = vmatmul.mubr.bf16.gmra.mrb[0].mxu0 %v2040
        %v2131 = vpop.f32.mrb[0].mxu0
        %v2132 = vadd.f32 %v1730, %v2131
        %v2133 = vpop.f32.mrb[0].mxu0
        %v2134 = vpop.f32.mrb[0].mxu0
        %v2135 = vadd.f32 %v1731, %v2134
        %v2136 = vpop.f32.mrb[0].mxu0
        %2137 = vmatprep.mubr.bf16.mxu0 0
        %2138 = vmatmul.mubr.bf16.gmra.mrb[0].mxu0 %v2043
        %v2139 = vpop.f32.mrb[0].mxu0
        %v2140 = vadd.f32 %v1732, %v2139
        %v2141 = vpop.f32.mrb[0].mxu0
        %v2142 = vpop.f32.mrb[0].mxu0
        %v2143 = vadd.f32 %v1733, %v2142
        %v2144 = vpop.f32.mrb[0].mxu0
        %2145 = vmatprep.mubr.bf16.mxu0 0
        %2146 = vmatmul.mubr.bf16.gmra.mrb[0].mxu0 %v2046
        %v2147 = vpop.f32.mrb[0].mxu0
        %v2148 = vadd.f32 %v1734, %v2147
        %v2149 = vpop.f32.mrb[0].mxu0
        %v2150 = vpop.f32.mrb[0].mxu0
        %v2151 = vadd.f32 %v1735, %v2150
        %v2152 = vpop.f32.mrb[0].mxu0
        %2153 = vmatprep.mubr.bf16.mxu0 0
        %2154 = vmatmul.mubr.bf16.gmra.mrb[0].mxu0 %v2049
        %v2155 = vpop.f32.mrb[0].mxu0
        %v2156 = vadd.f32 %v1736, %v2155
        %v2157 = vpop.f32.mrb[0].mxu0
        %v2158 = vpop.f32.mrb[0].mxu0
        %v2159 = vadd.f32 %v1737, %v2158
        %v2160 = vpop.f32.mrb[0].mxu0
        %2161 = vmatprep.mubr.bf16.mxu0 0
        %2162 = vmatmul.mubr.bf16.gmra.mrb[0].mxu0 %v2052
        %v2163 = vpop.f32.mrb[0].mxu0
        %v2164 = vadd.f32 %v1738, %v2163
        %v2165 = vpop.f32.mrb[0].mxu0
        %v2166 = vpop.f32.mrb[0].mxu0
        %v2167 = vadd.f32 %v1739, %v2166
        %v2168 = vpop.f32.mrb[0].mxu0
        %2169 = vmatprep.mubr.bf16.mxu0 0
        %2170 = vmatmul.mubr.bf16.gmra.mrb[0].mxu0 %v2055
        %v2171 = vpop.f32.mrb[0].mxu0
        %v2172 = vadd.f32 %v1740, %v2171
        %v2173 = vpop.f32.mrb[0].mxu0
        %v2174 = vpop.f32.mrb[0].mxu0
        %v2175 = vadd.f32 %v1741, %v2174
        %v2176 = vpop.f32.mrb[0].mxu0
        %2177 = vdwg.mxu0
        %v2179 = vsel %vm1742, %v1334, 0
        %v2182 = vsel %vm1742, %v1335, 0
        %v2185 = vsel %vm1742, %v1336, 0
        %v2188 = vsel %vm1742, %v1337, 0
        %v2191 = vsel %vm1742, %v1338, 0
        %v2194 = vsel %vm1742, %v1339, 0
        %v2197 = vsel %vm1742, %v1340, 0
        %v2200 = vsel %vm1742, %v1341, 0
        %v2203 = vsel %vm1742, %v1526, 0
        %v2206 = vsel %vm1742, %v1527, 0
        %v2209 = vsel %vm1742, %v1528, 0
        %v2212 = vsel %vm1742, %v1529, 0
        %v2215 = vsel %vm1742, %v1530, 0
        %v2218 = vsel %vm1742, %v1531, 0
        %v2221 = vsel %vm1742, %v1532, 0
        %v2224 = vsel %vm1742, %v1533, 0
        %2226 = vmatprep.subr.bf16.mxu0 0
        %2227 = vmatpush1.bf16.xpose.msra.mxu0 %v2203
        %2228 = vmatprep.subr.bf16.mxu0 0
        %2229 = vmatpush1.bf16.xpose.msra.mxu0 %v2206
        %2230 = vmatprep.subr.bf16.mxu0 0
        %2231 = vmatpush1.bf16.xpose.msra.mxu0 %v2209
        %2232 = vmatprep.subr.bf16.mxu0 0
        %2233 = vmatpush1.bf16.xpose.msra.mxu0 %v2212
        %2234 = vmatprep.subr.bf16.mxu0 0
        %2235 = vmatpush1.bf16.xpose.msra.mxu0 %v2215
        %2236 = vmatprep.subr.bf16.mxu0 0
        %2237 = vmatpush1.bf16.xpose.msra.mxu0 %v2218
        %2238 = vmatprep.subr.bf16.mxu0 0
        %2239 = vmatpush1.bf16.xpose.msra.mxu0 %v2221
        %2240 = vmatprep.subr.bf16.mxu0 0
        %2241 = vmatpush1.bf16.xpose.msra.mxu0 %v2224
        %2242 = vmatprep.subr.bf16.mxu0 0
        %2243 = vmatpush1.bf16.xpose.msra.mxu0 0
        %2244 = vmatprep.subr.bf16.mxu0 0
        %2245 = vmatpush1.bf16.xpose.msra.mxu0 0
        %2246 = vmatprep.subr.bf16.mxu0 0
        %2247 = vmatpush1.bf16.xpose.msra.mxu0 0
        %2248 = vmatprep.subr.bf16.mxu0 0
        %2249 = vmatpush1.bf16.xpose.msra.mxu0 0
        %2250 = vmatprep.subr.bf16.mxu0 0
        %2251 = vmatpush1.bf16.xpose.msra.mxu0 0
        %2252 = vmatprep.subr.bf16.mxu0 0
        %2253 = vmatpush1.bf16.xpose.msra.mxu0 0
        %2254 = vmatprep.subr.bf16.mxu0 0
        %2255 = vmatpush1.bf16.xpose.msra.mxu0 0
        %2256 = vmatprep.subr.bf16.mxu0 0
        %2257 = vmatpush1.bf16.xpose.msra.mxu0 0
        %2258 = vmatprep.mubr.bf16.mxu0 0
        %2259 = vmatmul.mubr.bf16.gmra.mrb[0].mxu0 %v2179
        %v2260 = vpop.f32.mrb[0].mxu0
        %v2261 = vadd.f32 %v1726, %v2260
        %v2262 = vpop.f32.mrb[0].mxu0
        %v2263 = vpop.f32.mrb[0].mxu0
        %v2264 = vadd.f32 %v1727, %v2263
        %v2265 = vpop.f32.mrb[0].mxu0
        %2266 = vmatprep.mubr.bf16.mxu0 0
        %2267 = vmatmul.mubr.bf16.gmra.mrb[0].mxu0 %v2182
        %v2268 = vpop.f32.mrb[0].mxu0
        %v2269 = vadd.f32 %v1728, %v2268
        %v2270 = vpop.f32.mrb[0].mxu0
        %v2271 = vpop.f32.mrb[0].mxu0
        %v2272 = vadd.f32 %v1729, %v2271
        %v2273 = vpop.f32.mrb[0].mxu0
        %2274 = vmatprep.mubr.bf16.mxu0 0
        %2275 = vmatmul.mubr.bf16.gmra.mrb[0].mxu0 %v2185
        %v2276 = vpop.f32.mrb[0].mxu0
        %v2277 = vadd.f32 %v1730, %v2276
        %v2278 = vpop.f32.mrb[0].mxu0
        %v2279 = vpop.f32.mrb[0].mxu0
        %v2280 = vadd.f32 %v1731, %v2279
        %v2281 = vpop.f32.mrb[0].mxu0
        %2282 = vmatprep.mubr.bf16.mxu0 0
        %2283 = vmatmul.mubr.bf16.gmra.mrb[0].mxu0 %v2188
        %v2284 = vpop.f32.mrb[0].mxu0
        %v2285 = vadd.f32 %v1732, %v2284
        %v2286 = vpop.f32.mrb[0].mxu0
        %v2287 = vpop.f32.mrb[0].mxu0
        %v2288 = vadd.f32 %v1733, %v2287
        %v2289 = vpop.f32.mrb[0].mxu0
        %2290 = vmatprep.mubr.bf16.mxu0 0
        %2291 = vmatmul.mubr.bf16.gmra.mrb[0].mxu0 %v2191
        %v2292 = vpop.f32.mrb[0].mxu0
        %v2293 = vadd.f32 %v1734, %v2292
        %v2294 = vpop.f32.mrb[0].mxu0
        %v2295 = vpop.f32.mrb[0].mxu0
        %v2296 = vadd.f32 %v1735, %v2295
        %v2297 = vpop.f32.mrb[0].mxu0
        %2298 = vmatprep.mubr.bf16.mxu0 0
        %2299 = vmatmul.mubr.bf16.gmra.mrb[0].mxu0 %v2194
        %v2300 = vpop.f32.mrb[0].mxu0
        %v2301 = vadd.f32 %v1736, %v2300
        %v2302 = vpop.f32.mrb[0].mxu0
        %v2303 = vpop.f32.mrb[0].mxu0
        %v2304 = vadd.f32 %v1737, %v2303
        %v2305 = vpop.f32.mrb[0].mxu0
        %2306 = vmatprep.mubr.bf16.mxu0 0
        %2307 = vmatmul.mubr.bf16.gmra.mrb[0].mxu0 %v2197
        %v2308 = vpop.f32.mrb[0].mxu0
        %v2309 = vadd.f32 %v1738, %v2308
        %v2310 = vpop.f32.mrb[0].mxu0
        %v2311 = vpop.f32.mrb[0].mxu0
        %v2312 = vadd.f32 %v1739, %v2311
        %v2313 = vpop.f32.mrb[0].mxu0
        %2314 = vmatprep.mubr.bf16.mxu0 0
        %2315 = vmatmul.mubr.bf16.gmra.mrb[0].mxu0 %v2200
        %v2316 = vpop.f32.mrb[0].mxu0
        %v2317 = vadd.f32 %v1740, %v2316
        %v2318 = vpop.f32.mrb[0].mxu0
        %v2319 = vpop.f32.mrb[0].mxu0
        %v2320 = vadd.f32 %v1741, %v2319
        %v2321 = vpop.f32.mrb[0].mxu0
        %2322 = vdwg.mxu0
        %2323 = vmax.xlane.f32.xlu0 %v1826
        %v2324 = vpop.xlane.xlu0 %2323
        %2325 = vmax.xlane.f32.xlu0 %v1829
        %v2326 = vpop.xlane.xlu0 %2325
        %2327 = vmax.xlane.f32.xlu0 %v1834
        %v2328 = vpop.xlane.xlu0 %2327
        %2329 = vmax.xlane.f32.xlu0 %v1837
        %v2330 = vpop.xlane.xlu0 %2329
        %2331 = vmax.xlane.f32.xlu0 %v1842
        %v2332 = vpop.xlane.xlu0 %2331
        %2333 = vmax.xlane.f32.xlu0 %v1845
        %v2334 = vpop.xlane.xlu0 %2333
        %2335 = vmax.xlane.f32.xlu0 %v1850
        %v2336 = vpop.xlane.xlu0 %2335
        %2337 = vmax.xlane.f32.xlu0 %v1853
        %v2338 = vpop.xlane.xlu0 %2337
        %2339 = vmax.xlane.f32.xlu0 %v1858
        %v2340 = vpop.xlane.xlu0 %2339
        %2341 = vmax.xlane.f32.xlu0 %v1861
        %v2342 = vpop.xlane.xlu0 %2341
        %2343 = vmax.xlane.f32.xlu0 %v1866
        %v2344 = vpop.xlane.xlu0 %2343
        %2345 = vmax.xlane.f32.xlu0 %v1869
        %v2346 = vpop.xlane.xlu0 %2345
        %2347 = vmax.xlane.f32.xlu0 %v1874
        %v2348 = vpop.xlane.xlu0 %2347
        %2349 = vmax.xlane.f32.xlu0 %v1877
        %v2350 = vpop.xlane.xlu0 %2349
        %2351 = vmax.xlane.f32.xlu0 %v1882
        %v2352 = vpop.xlane.xlu0 %2351
        %2353 = vmax.xlane.f32.xlu0 %v1885
        %v2354 = vpop.xlane.xlu0 %2353
        %2355 = vmax.xlane.f32.xlu0 %v1971
        %v2356 = vpop.xlane.xlu0 %2355
        %2357 = vmax.xlane.f32.xlu0 %v1974
        %v2358 = vpop.xlane.xlu0 %2357
        %2359 = vmax.xlane.f32.xlu0 %v1979
        %v2360 = vpop.xlane.xlu0 %2359
        %2361 = vmax.xlane.f32.xlu0 %v1982
        %v2362 = vpop.xlane.xlu0 %2361
        %2363 = vmax.xlane.f32.xlu0 %v1987
        %v2364 = vpop.xlane.xlu0 %2363
        %2365 = vmax.xlane.f32.xlu0 %v1990
        %v2366 = vpop.xlane.xlu0 %2365
        %2367 = vmax.xlane.f32.xlu0 %v1995
        %v2368 = vpop.xlane.xlu0 %2367
        %2369 = vmax.xlane.f32.xlu0 %v1998
        %v2370 = vpop.xlane.xlu0 %2369
        %2371 = vmax.xlane.f32.xlu0 %v2003
        %v2372 = vpop.xlane.xlu0 %2371
        %2373 = vmax.xlane.f32.xlu0 %v2006
        %v2374 = vpop.xlane.xlu0 %2373
        %2375 = vmax.xlane.f32.xlu0 %v2011
        %v2376 = vpop.xlane.xlu0 %2375
        %2377 = vmax.xlane.f32.xlu0 %v2014
        %v2378 = vpop.xlane.xlu0 %2377
        %2379 = vmax.xlane.f32.xlu0 %v2019
        %v2380 = vpop.xlane.xlu0 %2379
        %2381 = vmax.xlane.f32.xlu0 %v2022
        %v2382 = vpop.xlane.xlu0 %2381
        %2383 = vmax.xlane.f32.xlu0 %v2027
        %v2384 = vpop.xlane.xlu0 %2383
        %2385 = vmax.xlane.f32.xlu0 %v2030
        %v2386 = vpop.xlane.xlu0 %2385
        %2387 = vmax.xlane.f32.xlu0 %v2116
        %v2388 = vpop.xlane.xlu0 %2387
        %2389 = vmax.xlane.f32.xlu0 %v2119
        %v2390 = vpop.xlane.xlu0 %2389
        %2391 = vmax.xlane.f32.xlu0 %v2124
        %v2392 = vpop.xlane.xlu0 %2391
        %2393 = vmax.xlane.f32.xlu0 %v2127
        %v2394 = vpop.xlane.xlu0 %2393
        %2395 = vmax.xlane.f32.xlu0 %v2132
        %v2396 = vpop.xlane.xlu0 %2395
        %2397 = vmax.xlane.f32.xlu0 %v2135
        %v2398 = vpop.xlane.xlu0 %2397
        %2399 = vmax.xlane.f32.xlu0 %v2140
        %v2400 = vpop.xlane.xlu0 %2399
        %2401 = vmax.xlane.f32.xlu0 %v2143
        %v2402 = vpop.xlane.xlu0 %2401
        %2403 = vmax.xlane.f32.xlu0 %v2148
        %v2404 = vpop.xlane.xlu0 %2403
        %2405 = vmax.xlane.f32.xlu0 %v2151
        %v2406 = vpop.xlane.xlu0 %2405
        %2407 = vmax.xlane.f32.xlu0 %v2156
        %v2408 = vpop.xlane.xlu0 %2407
        %2409 = vmax.xlane.f32.xlu0 %v2159
        %v2410 = vpop.xlane.xlu0 %2409
        %2411 = vmax.xlane.f32.xlu0 %v2164
        %v2412 = vpop.xlane.xlu0 %2411
        %2413 = vmax.xlane.f32.xlu0 %v2167
        %v2414 = vpop.xlane.xlu0 %2413
        %2415 = vmax.xlane.f32.xlu0 %v2172
        %v2416 = vpop.xlane.xlu0 %2415
        %2417 = vmax.xlane.f32.xlu0 %v2175
        %v2418 = vpop.xlane.xlu0 %2417
        %2419 = vmax.xlane.f32.xlu0 %v2261
        %v2420 = vpop.xlane.xlu0 %2419
        %2421 = vmax.xlane.f32.xlu0 %v2264
        %v2422 = vpop.xlane.xlu0 %2421
        %2423 = vmax.xlane.f32.xlu0 %v2269
        %v2424 = vpop.xlane.xlu0 %2423
        %2425 = vmax.xlane.f32.xlu0 %v2272
        %v2426 = vpop.xlane.xlu0 %2425
        %2427 = vmax.xlane.f32.xlu0 %v2277
        %v2428 = vpop.xlane.xlu0 %2427
        %2429 = vmax.xlane.f32.xlu0 %v2280
        %v2430 = vpop.xlane.xlu0 %2429
        %2431 = vmax.xlane.f32.xlu0 %v2285
        %v2432 = vpop.xlane.xlu0 %2431
        %2433 = vmax.xlane.f32.xlu0 %v2288
        %v2434 = vpop.xlane.xlu0 %2433
        %2435 = vmax.xlane.f32.xlu0 %v2293
        %v2436 = vpop.xlane.xlu0 %2435
        %2437 = vmax.xlane.f32.xlu0 %v2296
        %v2438 = vpop.xlane.xlu0 %2437
        %2439 = vmax.xlane.f32.xlu0 %v2301
        %v2440 = vpop.xlane.xlu0 %2439
        %2441 = vmax.xlane.f32.xlu0 %v2304
        %v2442 = vpop.xlane.xlu0 %2441
        %2443 = vmax.xlane.f32.xlu0 %v2309
        %v2444 = vpop.xlane.xlu0 %2443
        %2445 = vmax.xlane.f32.xlu0 %v2312
        %v2446 = vpop.xlane.xlu0 %2445
        %2447 = vmax.xlane.f32.xlu0 %v2317
        %v2448 = vpop.xlane.xlu0 %2447
        %2449 = vmax.xlane.f32.xlu0 %v2320
        %v2450 = vpop.xlane.xlu0 %2449
        %v2451 = vsub.f32 %v1826, %v2324
        %v2452 = vsub.f32 %v1829, %v2326
        %v2453 = vsub.f32 %v1834, %v2328
        %v2454 = vsub.f32 %v1837, %v2330
        %v2455 = vsub.f32 %v1842, %v2332
        %v2456 = vsub.f32 %v1845, %v2334
        %v2457 = vsub.f32 %v1850, %v2336
        %v2458 = vsub.f32 %v1853, %v2338
        %v2459 = vsub.f32 %v1858, %v2340
        %v2460 = vsub.f32 %v1861, %v2342
        %v2461 = vsub.f32 %v1866, %v2344
        %v2462 = vsub.f32 %v1869, %v2346
        %v2463 = vsub.f32 %v1874, %v2348
        %v2464 = vsub.f32 %v1877, %v2350
        %v2465 = vsub.f32 %v1882, %v2352
        %v2466 = vsub.f32 %v1885, %v2354
        %v2467 = vsub.f32 %v1971, %v2356
        %v2468 = vsub.f32 %v1974, %v2358
        %v2469 = vsub.f32 %v1979, %v2360
        %v2470 = vsub.f32 %v1982, %v2362
        %v2471 = vsub.f32 %v1987, %v2364
        %v2472 = vsub.f32 %v1990, %v2366
        %v2473 = vsub.f32 %v1995, %v2368
        %v2474 = vsub.f32 %v1998, %v2370
        %v2475 = vsub.f32 %v2003, %v2372
        %v2476 = vsub.f32 %v2006, %v2374
        %v2477 = vsub.f32 %v2011, %v2376
        %v2478 = vsub.f32 %v2014, %v2378
        %v2479 = vsub.f32 %v2019, %v2380
        %v2480 = vsub.f32 %v2022, %v2382
        %v2481 = vsub.f32 %v2027, %v2384
        %v2482 = vsub.f32 %v2030, %v2386
        %v2483 = vsub.f32 %v2116, %v2388
        %v2484 = vsub.f32 %v2119, %v2390
        %v2485 = vsub.f32 %v2124, %v2392
        %v2486 = vsub.f32 %v2127, %v2394
        %v2487 = vsub.f32 %v2132, %v2396
        %v2488 = vsub.f32 %v2135, %v2398
        %v2489 = vsub.f32 %v2140, %v2400
        %v2490 = vsub.f32 %v2143, %v2402
        %v2491 = vsub.f32 %v2148, %v2404
        %v2492 = vsub.f32 %v2151, %v2406
        %v2493 = vsub.f32 %v2156, %v2408
        %v2494 = vsub.f32 %v2159, %v2410
        %v2495 = vsub.f32 %v2164, %v2412
        %v2496 = vsub.f32 %v2167, %v2414
        %v2497 = vsub.f32 %v2172, %v2416
        %v2498 = vsub.f32 %v2175, %v2418
        %v2499 = vsub.f32 %v2261, %v2420
        %v2500 = vsub.f32 %v2264, %v2422
        %v2501 = vsub.f32 %v2269, %v2424
        %v2502 = vsub.f32 %v2272, %v2426
        %v2503 = vsub.f32 %v2277, %v2428
        %v2504 = vsub.f32 %v2280, %v2430
        %v2505 = vsub.f32 %v2285, %v2432
        %v2506 = vsub.f32 %v2288, %v2434
        %v2507 = vsub.f32 %v2293, %v2436
        %v2508 = vsub.f32 %v2296, %v2438
        %v2509 = vsub.f32 %v2301, %v2440
        %v2510 = vsub.f32 %v2304, %v2442
        %v2511 = vsub.f32 %v2309, %v2444
        %v2512 = vsub.f32 %v2312, %v2446
        %v2513 = vsub.f32 %v2317, %v2448
        %v2514 = vsub.f32 %v2320, %v2450
        %v2515 = vmul.f32 %v2451, 1.442695
        %v2516 = vpow.pop %v2515
        %v2517 = vmul.f32 %v2452, 1.442695
        %v2518 = vpow.pop %v2517
        %v2519 = vmul.f32 %v2453, 1.442695
        %v2520 = vpow.pop %v2519
        %v2521 = vmul.f32 %v2454, 1.442695
        %v2522 = vpow.pop %v2521
        %v2523 = vmul.f32 %v2455, 1.442695
        %v2524 = vpow.pop %v2523
        %v2525 = vmul.f32 %v2456, 1.442695
        %v2526 = vpow.pop %v2525
        %v2527 = vmul.f32 %v2457, 1.442695
        %v2528 = vpow.pop %v2527
        %v2529 = vmul.f32 %v2458, 1.442695
        %v2530 = vpow.pop %v2529
        %v2531 = vmul.f32 %v2459, 1.442695
        %v2532 = vpow.pop %v2531
        %v2533 = vmul.f32 %v2460, 1.442695
        %v2534 = vpow.pop %v2533
        %v2535 = vmul.f32 %v2461, 1.442695
        %v2536 = vpow.pop %v2535
        %v2537 = vmul.f32 %v2462, 1.442695
        %v2538 = vpow.pop %v2537
        %v2539 = vmul.f32 %v2463, 1.442695
        %v2540 = vpow.pop %v2539
        %v2541 = vmul.f32 %v2464, 1.442695
        %v2542 = vpow.pop %v2541
        %v2543 = vmul.f32 %v2465, 1.442695
        %v2544 = vpow.pop %v2543
        %v2545 = vmul.f32 %v2466, 1.442695
        %v2546 = vpow.pop %v2545
        %v2547 = vmul.f32 %v2467, 1.442695
        %v2548 = vpow.pop %v2547
        %v2549 = vmul.f32 %v2468, 1.442695
        %v2550 = vpow.pop %v2549
        %v2551 = vmul.f32 %v2469, 1.442695
        %v2552 = vpow.pop %v2551
        %v2553 = vmul.f32 %v2470, 1.442695
        %v2554 = vpow.pop %v2553
        %v2555 = vmul.f32 %v2471, 1.442695
        %v2556 = vpow.pop %v2555
        %v2557 = vmul.f32 %v2472, 1.442695
        %v2558 = vpow.pop %v2557
        %v2559 = vmul.f32 %v2473, 1.442695
        %v2560 = vpow.pop %v2559
        %v2561 = vmul.f32 %v2474, 1.442695
        %v2562 = vpow.pop %v2561
        %v2563 = vmul.f32 %v2475, 1.442695
        %v2564 = vpow.pop %v2563
        %v2565 = vmul.f32 %v2476, 1.442695
        %v2566 = vpow.pop %v2565
        %v2567 = vmul.f32 %v2477, 1.442695
        %v2568 = vpow.pop %v2567
        %v2569 = vmul.f32 %v2478, 1.442695
        %v2570 = vpow.pop %v2569
        %v2571 = vmul.f32 %v2479, 1.442695
        %v2572 = vpow.pop %v2571
        %v2573 = vmul.f32 %v2480, 1.442695
        %v2574 = vpow.pop %v2573
        %v2575 = vmul.f32 %v2481, 1.442695
        %v2576 = vpow.pop %v2575
        %v2577 = vmul.f32 %v2482, 1.442695
        %v2578 = vpow.pop %v2577
        %v2579 = vmul.f32 %v2483, 1.442695
        %v2580 = vpow.pop %v2579
        %v2581 = vmul.f32 %v2484, 1.442695
        %v2582 = vpow.pop %v2581
        %v2583 = vmul.f32 %v2485, 1.442695
        %v2584 = vpow.pop %v2583
        %v2585 = vmul.f32 %v2486, 1.442695
        %v2586 = vpow.pop %v2585
        %v2587 = vmul.f32 %v2487, 1.442695
        %v2588 = vpow.pop %v2587
        %v2589 = vmul.f32 %v2488, 1.442695
        %v2590 = vpow.pop %v2589
        %v2591 = vmul.f32 %v2489, 1.442695
        %v2592 = vpow.pop %v2591
        %v2593 = vmul.f32 %v2490, 1.442695
        %v2594 = vpow.pop %v2593
        %v2595 = vmul.f32 %v2491, 1.442695
        %v2596 = vpow.pop %v2595
        %v2597 = vmul.f32 %v2492, 1.442695
        %v2598 = vpow.pop %v2597
        %v2599 = vmul.f32 %v2493, 1.442695
        %v2600 = vpow.pop %v2599
        %v2601 = vmul.f32 %v2494, 1.442695
        %v2602 = vpow.pop %v2601
        %v2603 = vmul.f32 %v2495, 1.442695
        %v2604 = vpow.pop %v2603
        %v2605 = vmul.f32 %v2496, 1.442695
        %v2606 = vpow.pop %v2605
        %v2607 = vmul.f32 %v2497, 1.442695
        %v2608 = vpow.pop %v2607
        %v2609 = vmul.f32 %v2498, 1.442695
        %v2610 = vpow.pop %v2609
        %v2611 = vmul.f32 %v2499, 1.442695
        %v2612 = vpow.pop %v2611
        %v2613 = vmul.f32 %v2500, 1.442695
        %v2614 = vpow.pop %v2613
        %v2615 = vmul.f32 %v2501, 1.442695
        %v2616 = vpow.pop %v2615
        %v2617 = vmul.f32 %v2502, 1.442695
        %v2618 = vpow.pop %v2617
        %v2619 = vmul.f32 %v2503, 1.442695
        %v2620 = vpow.pop %v2619
        %v2621 = vmul.f32 %v2504, 1.442695
        %v2622 = vpow.pop %v2621
        %v2623 = vmul.f32 %v2505, 1.442695
        %v2624 = vpow.pop %v2623
        %v2625 = vmul.f32 %v2506, 1.442695
        %v2626 = vpow.pop %v2625
        %v2627 = vmul.f32 %v2507, 1.442695
        %v2628 = vpow.pop %v2627
        %v2629 = vmul.f32 %v2508, 1.442695
        %v2630 = vpow.pop %v2629
        %v2631 = vmul.f32 %v2509, 1.442695
        %v2632 = vpow.pop %v2631
        %v2633 = vmul.f32 %v2510, 1.442695
        %v2634 = vpow.pop %v2633
        %v2635 = vmul.f32 %v2511, 1.442695
        %v2636 = vpow.pop %v2635
        %v2637 = vmul.f32 %v2512, 1.442695
        %v2638 = vpow.pop %v2637
        %v2639 = vmul.f32 %v2513, 1.442695
        %v2640 = vpow.pop %v2639
        %v2641 = vmul.f32 %v2514, 1.442695
        %v2642 = vpow.pop %v2641
        %2643 = vadd.xlane.f32.xlu0 %v2516
        %v2644 = vpop.xlane.xlu0 %2643
        %2645 = vadd.xlane.f32.xlu0 %v2518
        %v2646 = vpop.xlane.xlu0 %2645
        %2647 = vadd.xlane.f32.xlu0 %v2520
        %v2648 = vpop.xlane.xlu0 %2647
        %2649 = vadd.xlane.f32.xlu0 %v2522
        %v2650 = vpop.xlane.xlu0 %2649
        %2651 = vadd.xlane.f32.xlu0 %v2524
        %v2652 = vpop.xlane.xlu0 %2651
        %2653 = vadd.xlane.f32.xlu0 %v2526
        %v2654 = vpop.xlane.xlu0 %2653
        %2655 = vadd.xlane.f32.xlu0 %v2528
        %v2656 = vpop.xlane.xlu0 %2655
        %2657 = vadd.xlane.f32.xlu0 %v2530
        %v2658 = vpop.xlane.xlu0 %2657
        %2659 = vadd.xlane.f32.xlu0 %v2532
        %v2660 = vpop.xlane.xlu0 %2659
        %2661 = vadd.xlane.f32.xlu0 %v2534
        %v2662 = vpop.xlane.xlu0 %2661
        %2663 = vadd.xlane.f32.xlu0 %v2536
        %v2664 = vpop.xlane.xlu0 %2663
        %2665 = vadd.xlane.f32.xlu0 %v2538
        %v2666 = vpop.xlane.xlu0 %2665
        %2667 = vadd.xlane.f32.xlu0 %v2540
        %v2668 = vpop.xlane.xlu0 %2667
        %2669 = vadd.xlane.f32.xlu0 %v2542
        %v2670 = vpop.xlane.xlu0 %2669
        %2671 = vadd.xlane.f32.xlu0 %v2544
        %v2672 = vpop.xlane.xlu0 %2671
        %2673 = vadd.xlane.f32.xlu0 %v2546
        %v2674 = vpop.xlane.xlu0 %2673
        %2675 = vadd.xlane.f32.xlu0 %v2548
        %v2676 = vpop.xlane.xlu0 %2675
        %2677 = vadd.xlane.f32.xlu0 %v2550
        %v2678 = vpop.xlane.xlu0 %2677
        %2679 = vadd.xlane.f32.xlu0 %v2552
        %v2680 = vpop.xlane.xlu0 %2679
        %2681 = vadd.xlane.f32.xlu0 %v2554
        %v2682 = vpop.xlane.xlu0 %2681
        %2683 = vadd.xlane.f32.xlu0 %v2556
        %v2684 = vpop.xlane.xlu0 %2683
        %2685 = vadd.xlane.f32.xlu0 %v2558
        %v2686 = vpop.xlane.xlu0 %2685
        %2687 = vadd.xlane.f32.xlu0 %v2560
        %v2688 = vpop.xlane.xlu0 %2687
        %2689 = vadd.xlane.f32.xlu0 %v2562
        %v2690 = vpop.xlane.xlu0 %2689
        %2691 = vadd.xlane.f32.xlu0 %v2564
        %v2692 = vpop.xlane.xlu0 %2691
        %2693 = vadd.xlane.f32.xlu0 %v2566
        %v2694 = vpop.xlane.xlu0 %2693
        %2695 = vadd.xlane.f32.xlu0 %v2568
        %v2696 = vpop.xlane.xlu0 %2695
        %2697 = vadd.xlane.f32.xlu0 %v2570
        %v2698 = vpop.xlane.xlu0 %2697
        %2699 = vadd.xlane.f32.xlu0 %v2572
        %v2700 = vpop.xlane.xlu0 %2699
        %2701 = vadd.xlane.f32.xlu0 %v2574
        %v2702 = vpop.xlane.xlu0 %2701
        %2703 = vadd.xlane.f32.xlu0 %v2576
        %v2704 = vpop.xlane.xlu0 %2703
        %2705 = vadd.xlane.f32.xlu0 %v2578
        %v2706 = vpop.xlane.xlu0 %2705
        %2707 = vadd.xlane.f32.xlu0 %v2580
        %v2708 = vpop.xlane.xlu0 %2707
        %2709 = vadd.xlane.f32.xlu0 %v2582
        %v2710 = vpop.xlane.xlu0 %2709
        %2711 = vadd.xlane.f32.xlu0 %v2584
        %v2712 = vpop.xlane.xlu0 %2711
        %2713 = vadd.xlane.f32.xlu0 %v2586
        %v2714 = vpop.xlane.xlu0 %2713
        %2715 = vadd.xlane.f32.xlu0 %v2588
        %v2716 = vpop.xlane.xlu0 %2715
        %2717 = vadd.xlane.f32.xlu0 %v2590
        %v2718 = vpop.xlane.xlu0 %2717
        %2719 = vadd.xlane.f32.xlu0 %v2592
        %v2720 = vpop.xlane.xlu0 %2719
        %2721 = vadd.xlane.f32.xlu0 %v2594
        %v2722 = vpop.xlane.xlu0 %2721
        %2723 = vadd.xlane.f32.xlu0 %v2596
        %v2724 = vpop.xlane.xlu0 %2723
        %2725 = vadd.xlane.f32.xlu0 %v2598
        %v2726 = vpop.xlane.xlu0 %2725
        %2727 = vadd.xlane.f32.xlu0 %v2600
        %v2728 = vpop.xlane.xlu0 %2727
        %2729 = vadd.xlane.f32.xlu0 %v2602
        %v2730 = vpop.xlane.xlu0 %2729
        %2731 = vadd.xlane.f32.xlu0 %v2604
        %v2732 = vpop.xlane.xlu0 %2731
        %2733 = vadd.xlane.f32.xlu0 %v2606
        %v2734 = vpop.xlane.xlu0 %2733
        %2735 = vadd.xlane.f32.xlu0 %v2608
        %v2736 = vpop.xlane.xlu0 %2735
        %2737 = vadd.xlane.f32.xlu0 %v2610
        %v2738 = vpop.xlane.xlu0 %2737
        %2739 = vadd.xlane.f32.xlu0 %v2612
        %v2740 = vpop.xlane.xlu0 %2739
        %2741 = vadd.xlane.f32.xlu0 %v2614
        %v2742 = vpop.xlane.xlu0 %2741
        %2743 = vadd.xlane.f32.xlu0 %v2616
        %v2744 = vpop.xlane.xlu0 %2743
        %2745 = vadd.xlane.f32.xlu0 %v2618
        %v2746 = vpop.xlane.xlu0 %2745
        %2747 = vadd.xlane.f32.xlu0 %v2620
        %v2748 = vpop.xlane.xlu0 %2747
        %2749 = vadd.xlane.f32.xlu0 %v2622
        %v2750 = vpop.xlane.xlu0 %2749
        %2751 = vadd.xlane.f32.xlu0 %v2624
        %v2752 = vpop.xlane.xlu0 %2751
        %2753 = vadd.xlane.f32.xlu0 %v2626
        %v2754 = vpop.xlane.xlu0 %2753
        %2755 = vadd.xlane.f32.xlu0 %v2628
        %v2756 = vpop.xlane.xlu0 %2755
        %2757 = vadd.xlane.f32.xlu0 %v2630
        %v2758 = vpop.xlane.xlu0 %2757
        %2759 = vadd.xlane.f32.xlu0 %v2632
        %v2760 = vpop.xlane.xlu0 %2759
        %2761 = vadd.xlane.f32.xlu0 %v2634
        %v2762 = vpop.xlane.xlu0 %2761
        %2763 = vadd.xlane.f32.xlu0 %v2636
        %v2764 = vpop.xlane.xlu0 %2763
        %2765 = vadd.xlane.f32.xlu0 %v2638
        %v2766 = vpop.xlane.xlu0 %2765
        %2767 = vadd.xlane.f32.xlu0 %v2640
        %v2768 = vpop.xlane.xlu0 %2767
        %2769 = vadd.xlane.f32.xlu0 %v2642
        %v2770 = vpop.xlane.xlu0 %2769
        %v2771 = vpack.c.bf16 %v2518, %v2516
        %v2772 = vpack.c.bf16 %v2522, %v2520
        %v2773 = vpack.c.bf16 %v2526, %v2524
        %v2774 = vpack.c.bf16 %v2530, %v2528
        %v2775 = vpack.c.bf16 %v2534, %v2532
        %v2776 = vpack.c.bf16 %v2538, %v2536
        %v2777 = vpack.c.bf16 %v2542, %v2540
        %v2778 = vpack.c.bf16 %v2546, %v2544
        %v2779 = vpack.c.bf16 %v2550, %v2548
        %v2780 = vpack.c.bf16 %v2554, %v2552
        %v2781 = vpack.c.bf16 %v2558, %v2556
        %v2782 = vpack.c.bf16 %v2562, %v2560
        %v2783 = vpack.c.bf16 %v2566, %v2564
        %v2784 = vpack.c.bf16 %v2570, %v2568
        %v2785 = vpack.c.bf16 %v2574, %v2572
        %v2786 = vpack.c.bf16 %v2578, %v2576
        %v2787 = vpack.c.bf16 %v2582, %v2580
        %v2788 = vpack.c.bf16 %v2586, %v2584
        %v2789 = vpack.c.bf16 %v2590, %v2588
        %v2790 = vpack.c.bf16 %v2594, %v2592
        %v2791 = vpack.c.bf16 %v2598, %v2596
        %v2792 = vpack.c.bf16 %v2602, %v2600
        %v2793 = vpack.c.bf16 %v2606, %v2604
        %v2794 = vpack.c.bf16 %v2610, %v2608
        %v2795 = vpack.c.bf16 %v2614, %v2612
        %v2796 = vpack.c.bf16 %v2618, %v2616
        %v2797 = vpack.c.bf16 %v2622, %v2620
        %v2798 = vpack.c.bf16 %v2626, %v2624
        %v2799 = vpack.c.bf16 %v2630, %v2628
        %v2800 = vpack.c.bf16 %v2634, %v2632
        %v2801 = vpack.c.bf16 %v2638, %v2636
        %v2802 = vpack.c.bf16 %v2642, %v2640
        %2803 = vmatprep.subr.bf16.mxu0 0
        %2804 = vmatpush1.bf16.msra.mxu0 %v1694
        %2805 = vmatprep.subr.bf16.mxu0 0
        %2806 = vmatpush1.bf16.msra.mxu0 %v1695
        %2807 = vmatprep.subr.bf16.mxu0 0
        %2808 = vmatpush1.bf16.msra.mxu0 %v1696
        %2809 = vmatprep.subr.bf16.mxu0 0
        %2810 = vmatpush1.bf16.msra.mxu0 %v1697
        %2811 = vmatprep.subr.bf16.mxu0 0
        %2812 = vmatpush1.bf16.msra.mxu0 %v1698
        %2813 = vmatprep.subr.bf16.mxu0 0
        %2814 = vmatpush1.bf16.msra.mxu0 %v1699
        %2815 = vmatprep.subr.bf16.mxu0 0
        %2816 = vmatpush1.bf16.msra.mxu0 %v1700
        %2817 = vmatprep.subr.bf16.mxu0 0
        %2818 = vmatpush1.bf16.msra.mxu0 %v1701
        %2819 = vmatprep.subr.bf16.mxu0 0
        %2820 = vmatpush1.bf16.msra.mxu0 0
        %2821 = vmatprep.subr.bf16.mxu0 0
        %2822 = vmatpush1.bf16.msra.mxu0 0
        %2823 = vmatprep.subr.bf16.mxu0 0
        %2824 = vmatpush1.bf16.msra.mxu0 0
        %2825 = vmatprep.subr.bf16.mxu0 0
        %2826 = vmatpush1.bf16.msra.mxu0 0
        %2827 = vmatprep.subr.bf16.mxu0 0
        %2828 = vmatpush1.bf16.msra.mxu0 0
        %2829 = vmatprep.subr.bf16.mxu0 0
        %2830 = vmatpush1.bf16.msra.mxu0 0
        %2831 = vmatprep.subr.bf16.mxu0 0
        %2832 = vmatpush1.bf16.msra.mxu0 0
        %2833 = vmatprep.subr.bf16.mxu0 0
        %2834 = vmatpush1.bf16.msra.mxu0 0
        %2835 = vmatprep.mubr.bf16.mxu0 0
        %2836 = vmatmul.mubr.bf16.gmra.mrb[0].mxu0 %v2771
        %v2837 = vpop.f32.mrb[0].mxu0
        %v2838 = vadd.f32 0.0, %v2837
        %v2839 = vpop.f32.mrb[0].mxu0
        %v2840 = vpop.f32.mrb[0].mxu0
        %v2841 = vadd.f32 0.0, %v2840
        %v2842 = vpop.f32.mrb[0].mxu0
        %2843 = vmatprep.mubr.bf16.mxu0 0
        %2844 = vmatmul.mubr.bf16.gmra.mrb[0].mxu0 %v2772
        %v2845 = vpop.f32.mrb[0].mxu0
        %v2846 = vadd.f32 0.0, %v2845
        %v2847 = vpop.f32.mrb[0].mxu0
        %v2848 = vpop.f32.mrb[0].mxu0
        %v2849 = vadd.f32 0.0, %v2848
        %v2850 = vpop.f32.mrb[0].mxu0
        %2851 = vmatprep.mubr.bf16.mxu0 0
        %2852 = vmatmul.mubr.bf16.gmra.mrb[0].mxu0 %v2773
        %v2853 = vpop.f32.mrb[0].mxu0
        %v2854 = vadd.f32 0.0, %v2853
        %v2855 = vpop.f32.mrb[0].mxu0
        %v2856 = vpop.f32.mrb[0].mxu0
        %v2857 = vadd.f32 0.0, %v2856
        %v2858 = vpop.f32.mrb[0].mxu0
        %2859 = vmatprep.mubr.bf16.mxu0 0
        %2860 = vmatmul.mubr.bf16.gmra.mrb[0].mxu0 %v2774
        %v2861 = vpop.f32.mrb[0].mxu0
        %v2862 = vadd.f32 0.0, %v2861
        %v2863 = vpop.f32.mrb[0].mxu0
        %v2864 = vpop.f32.mrb[0].mxu0
        %v2865 = vadd.f32 0.0, %v2864
        %v2866 = vpop.f32.mrb[0].mxu0
        %2867 = vmatprep.mubr.bf16.mxu0 0
        %2868 = vmatmul.mubr.bf16.gmra.mrb[0].mxu0 %v2775
        %v2869 = vpop.f32.mrb[0].mxu0
        %v2870 = vadd.f32 0.0, %v2869
        %v2871 = vpop.f32.mrb[0].mxu0
        %v2872 = vpop.f32.mrb[0].mxu0
        %v2873 = vadd.f32 0.0, %v2872
        %v2874 = vpop.f32.mrb[0].mxu0
        %2875 = vmatprep.mubr.bf16.mxu0 0
        %2876 = vmatmul.mubr.bf16.gmra.mrb[0].mxu0 %v2776
        %v2877 = vpop.f32.mrb[0].mxu0
        %v2878 = vadd.f32 0.0, %v2877
        %v2879 = vpop.f32.mrb[0].mxu0
        %v2880 = vpop.f32.mrb[0].mxu0
        %v2881 = vadd.f32 0.0, %v2880
        %v2882 = vpop.f32.mrb[0].mxu0
        %2883 = vmatprep.mubr.bf16.mxu0 0
        %2884 = vmatmul.mubr.bf16.gmra.mrb[0].mxu0 %v2777
        %v2885 = vpop.f32.mrb[0].mxu0
        %v2886 = vadd.f32 0.0, %v2885
        %v2887 = vpop.f32.mrb[0].mxu0
        %v2888 = vpop.f32.mrb[0].mxu0
        %v2889 = vadd.f32 0.0, %v2888
        %v2890 = vpop.f32.mrb[0].mxu0
        %2891 = vmatprep.mubr.bf16.mxu0 0
        %2892 = vmatmul.mubr.bf16.gmra.mrb[0].mxu0 %v2778
        %v2893 = vpop.f32.mrb[0].mxu0
        %v2894 = vadd.f32 0.0, %v2893
        %v2895 = vpop.f32.mrb[0].mxu0
        %v2896 = vpop.f32.mrb[0].mxu0
        %v2897 = vadd.f32 0.0, %v2896
        %v2898 = vpop.f32.mrb[0].mxu0
        %2899 = vdwg.mxu0
        %2900 = vmatprep.subr.bf16.mxu0 0
        %2901 = vmatpush1.bf16.msra.mxu0 %v1702
        %2902 = vmatprep.subr.bf16.mxu0 0
        %2903 = vmatpush1.bf16.msra.mxu0 %v1703
        %2904 = vmatprep.subr.bf16.mxu0 0
        %2905 = vmatpush1.bf16.msra.mxu0 %v1704
        %2906 = vmatprep.subr.bf16.mxu0 0
        %2907 = vmatpush1.bf16.msra.mxu0 %v1705
        %2908 = vmatprep.subr.bf16.mxu0 0
        %2909 = vmatpush1.bf16.msra.mxu0 %v1706
        %2910 = vmatprep.subr.bf16.mxu0 0
        %2911 = vmatpush1.bf16.msra.mxu0 %v1707
        %2912 = vmatprep.subr.bf16.mxu0 0
        %2913 = vmatpush1.bf16.msra.mxu0 %v1708
        %2914 = vmatprep.subr.bf16.mxu0 0
        %2915 = vmatpush1.bf16.msra.mxu0 %v1709
        %2916 = vmatprep.subr.bf16.mxu0 0
        %2917 = vmatpush1.bf16.msra.mxu0 0
        %2918 = vmatprep.subr.bf16.mxu0 0
        %2919 = vmatpush1.bf16.msra.mxu0 0
        %2920 = vmatprep.subr.bf16.mxu0 0
        %2921 = vmatpush1.bf16.msra.mxu0 0
        %2922 = vmatprep.subr.bf16.mxu0 0
        %2923 = vmatpush1.bf16.msra.mxu0 0
        %2924 = vmatprep.subr.bf16.mxu0 0
        %2925 = vmatpush1.bf16.msra.mxu0 0
        %2926 = vmatprep.subr.bf16.mxu0 0
        %2927 = vmatpush1.bf16.msra.mxu0 0
        %2928 = vmatprep.subr.bf16.mxu0 0
        %2929 = vmatpush1.bf16.msra.mxu0 0
        %2930 = vmatprep.subr.bf16.mxu0 0
        %2931 = vmatpush1.bf16.msra.mxu0 0
        %2932 = vmatprep.mubr.bf16.mxu0 0
        %2933 = vmatmul.mubr.bf16.gmra.mrb[0].mxu0 %v2779
        %v2934 = vpop.f32.mrb[0].mxu0
        %v2935 = vadd.f32 0.0, %v2934
        %v2936 = vpop.f32.mrb[0].mxu0
        %v2937 = vpop.f32.mrb[0].mxu0
        %v2938 = vadd.f32 0.0, %v2937
        %v2939 = vpop.f32.mrb[0].mxu0
        %2940 = vmatprep.mubr.bf16.mxu0 0
        %2941 = vmatmul.mubr.bf16.gmra.mrb[0].mxu0 %v2780
        %v2942 = vpop.f32.mrb[0].mxu0
        %v2943 = vadd.f32 0.0, %v2942
        %v2944 = vpop.f32.mrb[0].mxu0
        %v2945 = vpop.f32.mrb[0].mxu0
        %v2946 = vadd.f32 0.0, %v2945
        %v2947 = vpop.f32.mrb[0].mxu0
        %2948 = vmatprep.mubr.bf16.mxu0 0
        %2949 = vmatmul.mubr.bf16.gmra.mrb[0].mxu0 %v2781
        %v2950 = vpop.f32.mrb[0].mxu0
        %v2951 = vadd.f32 0.0, %v2950
        %v2952 = vpop.f32.mrb[0].mxu0
        %v2953 = vpop.f32.mrb[0].mxu0
        %v2954 = vadd.f32 0.0, %v2953
        %v2955 = vpop.f32.mrb[0].mxu0
        %2956 = vmatprep.mubr.bf16.mxu0 0
        %2957 = vmatmul.mubr.bf16.gmra.mrb[0].mxu0 %v2782
        %v2958 = vpop.f32.mrb[0].mxu0
        %v2959 = vadd.f32 0.0, %v2958
        %v2960 = vpop.f32.mrb[0].mxu0
        %v2961 = vpop.f32.mrb[0].mxu0
        %v2962 = vadd.f32 0.0, %v2961
        %v2963 = vpop.f32.mrb[0].mxu0
        %2964 = vmatprep.mubr.bf16.mxu0 0
        %2965 = vmatmul.mubr.bf16.gmra.mrb[0].mxu0 %v2783
        %v2966 = vpop.f32.mrb[0].mxu0
        %v2967 = vadd.f32 0.0, %v2966
        %v2968 = vpop.f32.mrb[0].mxu0
        %v2969 = vpop.f32.mrb[0].mxu0
        %v2970 = vadd.f32 0.0, %v2969
        %v2971 = vpop.f32.mrb[0].mxu0
        %2972 = vmatprep.mubr.bf16.mxu0 0
        %2973 = vmatmul.mubr.bf16.gmra.mrb[0].mxu0 %v2784
        %v2974 = vpop.f32.mrb[0].mxu0
        %v2975 = vadd.f32 0.0, %v2974
        %v2976 = vpop.f32.mrb[0].mxu0
        %v2977 = vpop.f32.mrb[0].mxu0
        %v2978 = vadd.f32 0.0, %v2977
        %v2979 = vpop.f32.mrb[0].mxu0
        %2980 = vmatprep.mubr.bf16.mxu0 0
        %2981 = vmatmul.mubr.bf16.gmra.mrb[0].mxu0 %v2785
        %v2982 = vpop.f32.mrb[0].mxu0
        %v2983 = vadd.f32 0.0, %v2982
        %v2984 = vpop.f32.mrb[0].mxu0
        %v2985 = vpop.f32.mrb[0].mxu0
        %v2986 = vadd.f32 0.0, %v2985
        %v2987 = vpop.f32.mrb[0].mxu0
        %2988 = vmatprep.mubr.bf16.mxu0 0
        %2989 = vmatmul.mubr.bf16.gmra.mrb[0].mxu0 %v2786
        %v2990 = vpop.f32.mrb[0].mxu0
        %v2991 = vadd.f32 0.0, %v2990
        %v2992 = vpop.f32.mrb[0].mxu0
        %v2993 = vpop.f32.mrb[0].mxu0
        %v2994 = vadd.f32 0.0, %v2993
        %v2995 = vpop.f32.mrb[0].mxu0
        %2996 = vdwg.mxu0
        %2997 = vmatprep.subr.bf16.mxu0 0
        %2998 = vmatpush1.bf16.msra.mxu0 %v1710
        %2999 = vmatprep.subr.bf16.mxu0 0
        %3000 = vmatpush1.bf16.msra.mxu0 %v1711
        %3001 = vmatprep.subr.bf16.mxu0 0
        %3002 = vmatpush1.bf16.msra.mxu0 %v1712
        %3003 = vmatprep.subr.bf16.mxu0 0
        %3004 = vmatpush1.bf16.msra.mxu0 %v1713
        %3005 = vmatprep.subr.bf16.mxu0 0
        %3006 = vmatpush1.bf16.msra.mxu0 %v1714
        %3007 = vmatprep.subr.bf16.mxu0 0
        %3008 = vmatpush1.bf16.msra.mxu0 %v1715
        %3009 = vmatprep.subr.bf16.mxu0 0
        %3010 = vmatpush1.bf16.msra.mxu0 %v1716
        %3011 = vmatprep.subr.bf16.mxu0 0
        %3012 = vmatpush1.bf16.msra.mxu0 %v1717
        %3013 = vmatprep.subr.bf16.mxu0 0
        %3014 = vmatpush1.bf16.msra.mxu0 0
        %3015 = vmatprep.subr.bf16.mxu0 0
        %3016 = vmatpush1.bf16.msra.mxu0 0
        %3017 = vmatprep.subr.bf16.mxu0 0
        %3018 = vmatpush1.bf16.msra.mxu0 0
        %3019 = vmatprep.subr.bf16.mxu0 0
        %3020 = vmatpush1.bf16.msra.mxu0 0
        %3021 = vmatprep.subr.bf16.mxu0 0
        %3022 = vmatpush1.bf16.msra.mxu0 0
        %3023 = vmatprep.subr.bf16.mxu0 0
        %3024 = vmatpush1.bf16.msra.mxu0 0
        %3025 = vmatprep.subr.bf16.mxu0 0
        %3026 = vmatpush1.bf16.msra.mxu0 0
        %3027 = vmatprep.subr.bf16.mxu0 0
        %3028 = vmatpush1.bf16.msra.mxu0 0
        %3029 = vmatprep.mubr.bf16.mxu0 0
        %3030 = vmatmul.mubr.bf16.gmra.mrb[0].mxu0 %v2787
        %v3031 = vpop.f32.mrb[0].mxu0
        %v3032 = vadd.f32 0.0, %v3031
        %v3033 = vpop.f32.mrb[0].mxu0
        %v3034 = vpop.f32.mrb[0].mxu0
        %v3035 = vadd.f32 0.0, %v3034
        %v3036 = vpop.f32.mrb[0].mxu0
        %3037 = vmatprep.mubr.bf16.mxu0 0
        %3038 = vmatmul.mubr.bf16.gmra.mrb[0].mxu0 %v2788
        %v3039 = vpop.f32.mrb[0].mxu0
        %v3040 = vadd.f32 0.0, %v3039
        %v3041 = vpop.f32.mrb[0].mxu0
        %v3042 = vpop.f32.mrb[0].mxu0
        %v3043 = vadd.f32 0.0, %v3042
        %v3044 = vpop.f32.mrb[0].mxu0
        %3045 = vmatprep.mubr.bf16.mxu0 0
        %3046 = vmatmul.mubr.bf16.gmra.mrb[0].mxu0 %v2789
        %v3047 = vpop.f32.mrb[0].mxu0
        %v3048 = vadd.f32 0.0, %v3047
        %v3049 = vpop.f32.mrb[0].mxu0
        %v3050 = vpop.f32.mrb[0].mxu0
        %v3051 = vadd.f32 0.0, %v3050
        %v3052 = vpop.f32.mrb[0].mxu0
        %3053 = vmatprep.mubr.bf16.mxu0 0
        %3054 = vmatmul.mubr.bf16.gmra.mrb[0].mxu0 %v2790
        %v3055 = vpop.f32.mrb[0].mxu0
        %v3056 = vadd.f32 0.0, %v3055
        %v3057 = vpop.f32.mrb[0].mxu0
        %v3058 = vpop.f32.mrb[0].mxu0
        %v3059 = vadd.f32 0.0, %v3058
        %v3060 = vpop.f32.mrb[0].mxu0
        %3061 = vmatprep.mubr.bf16.mxu0 0
        %3062 = vmatmul.mubr.bf16.gmra.mrb[0].mxu0 %v2791
        %v3063 = vpop.f32.mrb[0].mxu0
        %v3064 = vadd.f32 0.0, %v3063
        %v3065 = vpop.f32.mrb[0].mxu0
        %v3066 = vpop.f32.mrb[0].mxu0
        %v3067 = vadd.f32 0.0, %v3066
        %v3068 = vpop.f32.mrb[0].mxu0
        %3069 = vmatprep.mubr.bf16.mxu0 0
        %3070 = vmatmul.mubr.bf16.gmra.mrb[0].mxu0 %v2792
        %v3071 = vpop.f32.mrb[0].mxu0
        %v3072 = vadd.f32 0.0, %v3071
        %v3073 = vpop.f32.mrb[0].mxu0
        %v3074 = vpop.f32.mrb[0].mxu0
        %v3075 = vadd.f32 0.0, %v3074
        %v3076 = vpop.f32.mrb[0].mxu0
        %3077 = vmatprep.mubr.bf16.mxu0 0
        %3078 = vmatmul.mubr.bf16.gmra.mrb[0].mxu0 %v2793
        %v3079 = vpop.f32.mrb[0].mxu0
        %v3080 = vadd.f32 0.0, %v3079
        %v3081 = vpop.f32.mrb[0].mxu0
        %v3082 = vpop.f32.mrb[0].mxu0
        %v3083 = vadd.f32 0.0, %v3082
        %v3084 = vpop.f32.mrb[0].mxu0
        %3085 = vmatprep.mubr.bf16.mxu0 0
        %3086 = vmatmul.mubr.bf16.gmra.mrb[0].mxu0 %v2794
        %v3087 = vpop.f32.mrb[0].mxu0
        %v3088 = vadd.f32 0.0, %v3087
        %v3089 = vpop.f32.mrb[0].mxu0
        %v3090 = vpop.f32.mrb[0].mxu0
        %v3091 = vadd.f32 0.0, %v3090
        %v3092 = vpop.f32.mrb[0].mxu0
        %3093 = vdwg.mxu0
        %3094 = vmatprep.subr.bf16.mxu0 0
        %3095 = vmatpush1.bf16.msra.mxu0 %v1718
        %3096 = vmatprep.subr.bf16.mxu0 0
        %3097 = vmatpush1.bf16.msra.mxu0 %v1719
        %3098 = vmatprep.subr.bf16.mxu0 0
        %3099 = vmatpush1.bf16.msra.mxu0 %v1720
        %3100 = vmatprep.subr.bf16.mxu0 0
        %3101 = vmatpush1.bf16.msra.mxu0 %v1721
        %3102 = vmatprep.subr.bf16.mxu0 0
        %3103 = vmatpush1.bf16.msra.mxu0 %v1722
        %3104 = vmatprep.subr.bf16.mxu0 0
        %3105 = vmatpush1.bf16.msra.mxu0 %v1723
        %3106 = vmatprep.subr.bf16.mxu0 0
        %3107 = vmatpush1.bf16.msra.mxu0 %v1724
        %3108 = vmatprep.subr.bf16.mxu0 0
        %3109 = vmatpush1.bf16.msra.mxu0 %v1725
        %3110 = vmatprep.subr.bf16.mxu0 0
        %3111 = vmatpush1.bf16.msra.mxu0 0
        %3112 = vmatprep.subr.bf16.mxu0 0
        %3113 = vmatpush1.bf16.msra.mxu0 0
        %3114 = vmatprep.subr.bf16.mxu0 0
        %3115 = vmatpush1.bf16.msra.mxu0 0
        %3116 = vmatprep.subr.bf16.mxu0 0
        %3117 = vmatpush1.bf16.msra.mxu0 0
        %3118 = vmatprep.subr.bf16.mxu0 0
        %3119 = vmatpush1.bf16.msra.mxu0 0
        %3120 = vmatprep.subr.bf16.mxu0 0
        %3121 = vmatpush1.bf16.msra.mxu0 0
        %3122 = vmatprep.subr.bf16.mxu0 0
        %3123 = vmatpush1.bf16.msra.mxu0 0
        %3124 = vmatprep.subr.bf16.mxu0 0
        %3125 = vmatpush1.bf16.msra.mxu0 0
        %3126 = vmatprep.mubr.bf16.mxu0 0
        %3127 = vmatmul.mubr.bf16.gmra.mrb[0].mxu0 %v2795
        %v3128 = vpop.f32.mrb[0].mxu0
        %v3129 = vadd.f32 0.0, %v3128
        %v3130 = vpop.f32.mrb[0].mxu0
        %v3131 = vpop.f32.mrb[0].mxu0
        %v3132 = vadd.f32 0.0, %v3131
        %v3133 = vpop.f32.mrb[0].mxu0
        %3134 = vmatprep.mubr.bf16.mxu0 0
        %3135 = vmatmul.mubr.bf16.gmra.mrb[0].mxu0 %v2796
        %v3136 = vpop.f32.mrb[0].mxu0
        %v3137 = vadd.f32 0.0, %v3136
        %v3138 = vpop.f32.mrb[0].mxu0
        %v3139 = vpop.f32.mrb[0].mxu0
        %v3140 = vadd.f32 0.0, %v3139
        %v3141 = vpop.f32.mrb[0].mxu0
        %3142 = vmatprep.mubr.bf16.mxu0 0
        %3143 = vmatmul.mubr.bf16.gmra.mrb[0].mxu0 %v2797
        %v3144 = vpop.f32.mrb[0].mxu0
        %v3145 = vadd.f32 0.0, %v3144
        %v3146 = vpop.f32.mrb[0].mxu0
        %v3147 = vpop.f32.mrb[0].mxu0
        %v3148 = vadd.f32 0.0, %v3147
        %v3149 = vpop.f32.mrb[0].mxu0
        %3150 = vmatprep.mubr.bf16.mxu0 0
        %3151 = vmatmul.mubr.bf16.gmra.mrb[0].mxu0 %v2798
        %v3152 = vpop.f32.mrb[0].mxu0
        %v3153 = vadd.f32 0.0, %v3152
        %v3154 = vpop.f32.mrb[0].mxu0
        %v3155 = vpop.f32.mrb[0].mxu0
        %v3156 = vadd.f32 0.0, %v3155
        %v3157 = vpop.f32.mrb[0].mxu0
        %3158 = vmatprep.mubr.bf16.mxu0 0
        %3159 = vmatmul.mubr.bf16.gmra.mrb[0].mxu0 %v2799
        %v3160 = vpop.f32.mrb[0].mxu0
        %v3161 = vadd.f32 0.0, %v3160
        %v3162 = vpop.f32.mrb[0].mxu0
        %v3163 = vpop.f32.mrb[0].mxu0
        %v3164 = vadd.f32 0.0, %v3163
        %v3165 = vpop.f32.mrb[0].mxu0
        %3166 = vmatprep.mubr.bf16.mxu0 0
        %3167 = vmatmul.mubr.bf16.gmra.mrb[0].mxu0 %v2800
        %v3168 = vpop.f32.mrb[0].mxu0
        %v3169 = vadd.f32 0.0, %v3168
        %v3170 = vpop.f32.mrb[0].mxu0
        %v3171 = vpop.f32.mrb[0].mxu0
        %v3172 = vadd.f32 0.0, %v3171
        %v3173 = vpop.f32.mrb[0].mxu0
        %3174 = vmatprep.mubr.bf16.mxu0 0
        %3175 = vmatmul.mubr.bf16.gmra.mrb[0].mxu0 %v2801
        %v3176 = vpop.f32.mrb[0].mxu0
        %v3177 = vadd.f32 0.0, %v3176
        %v3178 = vpop.f32.mrb[0].mxu0
        %v3179 = vpop.f32.mrb[0].mxu0
        %v3180 = vadd.f32 0.0, %v3179
        %v3181 = vpop.f32.mrb[0].mxu0
        %3182 = vmatprep.mubr.bf16.mxu0 0
        %3183 = vmatmul.mubr.bf16.gmra.mrb[0].mxu0 %v2802
        %v3184 = vpop.f32.mrb[0].mxu0
        %v3185 = vadd.f32 0.0, %v3184
        %v3186 = vpop.f32.mrb[0].mxu0
        %v3187 = vpop.f32.mrb[0].mxu0
        %v3188 = vadd.f32 0.0, %v3187
        %v3189 = vpop.f32.mrb[0].mxu0
        %3190 = vdwg.mxu0
        %v3191 = vrcp.pop %v2644
        %v3192 = vrcp.pop %v2646
        %v3193 = vrcp.pop %v2648
        %v3194 = vrcp.pop %v2650
        %v3195 = vrcp.pop %v2652
        %v3196 = vrcp.pop %v2654
        %v3197 = vrcp.pop %v2656
        %v3198 = vrcp.pop %v2658
        %v3199 = vrcp.pop %v2660
        %v3200 = vrcp.pop %v2662
        %v3201 = vrcp.pop %v2664
        %v3202 = vrcp.pop %v2666
        %v3203 = vrcp.pop %v2668
        %v3204 = vrcp.pop %v2670
        %v3205 = vrcp.pop %v2672
        %v3206 = vrcp.pop %v2674
        %v3207 = vrcp.pop %v2676
        %v3208 = vrcp.pop %v2678
        %v3209 = vrcp.pop %v2680
        %v3210 = vrcp.pop %v2682
        %v3211 = vrcp.pop %v2684
        %v3212 = vrcp.pop %v2686
        %v3213 = vrcp.pop %v2688
        %v3214 = vrcp.pop %v2690
        %v3215 = vrcp.pop %v2692
        %v3216 = vrcp.pop %v2694
        %v3217 = vrcp.pop %v2696
        %v3218 = vrcp.pop %v2698
        %v3219 = vrcp.pop %v2700
        %v3220 = vrcp.pop %v2702
        %v3221 = vrcp.pop %v2704
        %v3222 = vrcp.pop %v2706
        %v3223 = vrcp.pop %v2708
        %v3224 = vrcp.pop %v2710
        %v3225 = vrcp.pop %v2712
        %v3226 = vrcp.pop %v2714
        %v3227 = vrcp.pop %v2716
        %v3228 = vrcp.pop %v2718
        %v3229 = vrcp.pop %v2720
        %v3230 = vrcp.pop %v2722
        %v3231 = vrcp.pop %v2724
        %v3232 = vrcp.pop %v2726
        %v3233 = vrcp.pop %v2728
        %v3234 = vrcp.pop %v2730
        %v3235 = vrcp.pop %v2732
        %v3236 = vrcp.pop %v2734
        %v3237 = vrcp.pop %v2736
        %v3238 = vrcp.pop %v2738
        %v3239 = vrcp.pop %v2740
        %v3240 = vrcp.pop %v2742
        %v3241 = vrcp.pop %v2744
        %v3242 = vrcp.pop %v2746
        %v3243 = vrcp.pop %v2748
        %v3244 = vrcp.pop %v2750
        %v3245 = vrcp.pop %v2752
        %v3246 = vrcp.pop %v2754
        %v3247 = vrcp.pop %v2756
        %v3248 = vrcp.pop %v2758
        %v3249 = vrcp.pop %v2760
        %v3250 = vrcp.pop %v2762
        %v3251 = vrcp.pop %v2764
        %v3252 = vrcp.pop %v2766
        %v3253 = vrcp.pop %v2768
        %v3254 = vrcp.pop %v2770
        %v3255 = vmul.f32 %v2838, %v3191
        %v3256 = vmul.f32 %v2841, %v3192
        %v3257 = vmul.f32 %v2846, %v3193
        %v3258 = vmul.f32 %v2849, %v3194
        %v3259 = vmul.f32 %v2854, %v3195
        %v3260 = vmul.f32 %v2857, %v3196
        %v3261 = vmul.f32 %v2862, %v3197
        %v3262 = vmul.f32 %v2865, %v3198
        %v3263 = vmul.f32 %v2870, %v3199
        %v3264 = vmul.f32 %v2873, %v3200
        %v3265 = vmul.f32 %v2878, %v3201
        %v3266 = vmul.f32 %v2881, %v3202
        %v3267 = vmul.f32 %v2886, %v3203
        %v3268 = vmul.f32 %v2889, %v3204
        %v3269 = vmul.f32 %v2894, %v3205
        %v3270 = vmul.f32 %v2897, %v3206
        %v3271 = vmul.f32 %v2935, %v3207
        %v3272 = vmul.f32 %v2938, %v3208
        %v3273 = vmul.f32 %v2943, %v3209
        %v3274 = vmul.f32 %v2946, %v3210
        %v3275 = vmul.f32 %v2951, %v3211
        %v3276 = vmul.f32 %v2954, %v3212
        %v3277 = vmul.f32 %v2959, %v3213
        %v3278 = vmul.f32 %v2962, %v3214
        %v3279 = vmul.f32 %v2967, %v3215
        %v3280 = vmul.f32 %v2970, %v3216
        %v3281 = vmul.f32 %v2975, %v3217
        %v3282 = vmul.f32 %v2978, %v3218
        %v3283 = vmul.f32 %v2983, %v3219
        %v3284 = vmul.f32 %v2986, %v3220
        %v3285 = vmul.f32 %v2991, %v3221
        %v3286 = vmul.f32 %v2994, %v3222
        %v3287 = vmul.f32 %v3032, %v3223
        %v3288 = vmul.f32 %v3035, %v3224
        %v3289 = vmul.f32 %v3040, %v3225
        %v3290 = vmul.f32 %v3043, %v3226
        %v3291 = vmul.f32 %v3048, %v3227
        %v3292 = vmul.f32 %v3051, %v3228
        %v3293 = vmul.f32 %v3056, %v3229
        %v3294 = vmul.f32 %v3059, %v3230
        %v3295 = vmul.f32 %v3064, %v3231
        %v3296 = vmul.f32 %v3067, %v3232
        %v3297 = vmul.f32 %v3072, %v3233
        %v3298 = vmul.f32 %v3075, %v3234
        %v3299 = vmul.f32 %v3080, %v3235
        %v3300 = vmul.f32 %v3083, %v3236
        %v3301 = vmul.f32 %v3088, %v3237
        %v3302 = vmul.f32 %v3091, %v3238
        %v3303 = vmul.f32 %v3129, %v3239
        %v3304 = vmul.f32 %v3132, %v3240
        %v3305 = vmul.f32 %v3137, %v3241
        %v3306 = vmul.f32 %v3140, %v3242
        %v3307 = vmul.f32 %v3145, %v3243
        %v3308 = vmul.f32 %v3148, %v3244
        %v3309 = vmul.f32 %v3153, %v3245
        %v3310 = vmul.f32 %v3156, %v3246
        %v3311 = vmul.f32 %v3161, %v3247
        %v3312 = vmul.f32 %v3164, %v3248
        %v3313 = vmul.f32 %v3169, %v3249
        %v3314 = vmul.f32 %v3172, %v3250
        %v3315 = vmul.f32 %v3177, %v3251
        %v3316 = vmul.f32 %v3180, %v3252
        %v3317 = vmul.f32 %v3185, %v3253
        %v3318 = vmul.f32 %v3188, %v3254
        %3319 = vst.msk [vmem:[#allocation2] sm:$0xff] %vm1742, %v3255
        %3320 = vst.msk [vmem:[#allocation2 + $0x8] sm:$0xff] %vm1742, %v3256
        %3321 = vst.msk [vmem:[#allocation2 + $0x10] sm:$0xff] %vm1742, %v3257
        %3322 = vst.msk [vmem:[#allocation2 + $0x18] sm:$0xff] %vm1742, %v3258
        %3323 = vst.msk [vmem:[#allocation2 + $0x20] sm:$0xff] %vm1742, %v3259
        %3324 = vst.msk [vmem:[#allocation2 + $0x28] sm:$0xff] %vm1742, %v3260
        %3325 = vst.msk [vmem:[#allocation2 + $0x30] sm:$0xff] %vm1742, %v3261
        %3326 = vst.msk [vmem:[#allocation2 + $0x38] sm:$0xff] %vm1742, %v3262
        %3327 = vst.msk [vmem:[#allocation2 + $0x40] sm:$0xff] %vm1742, %v3263
        %3328 = vst.msk [vmem:[#allocation2 + $0x48] sm:$0xff] %vm1742, %v3264
        %3329 = vst.msk [vmem:[#allocation2 + $0x50] sm:$0xff] %vm1742, %v3265
        %3330 = vst.msk [vmem:[#allocation2 + $0x58] sm:$0xff] %vm1742, %v3266
        %3331 = vst.msk [vmem:[#allocation2 + $0x60] sm:$0xff] %vm1742, %v3267
        %3332 = vst.msk [vmem:[#allocation2 + $0x68] sm:$0xff] %vm1742, %v3268
        %3333 = vst.msk [vmem:[#allocation2 + $0x70] sm:$0xff] %vm1742, %v3269
        %3334 = vst.msk [vmem:[#allocation2 + $0x78] sm:$0xff] %vm1742, %v3270
        %3351 = vrot.lane.b32.xlu0 %v3271, 32
        %v3352 = vpop.permute.xlu0 %3351
        %3353 = vrot.lane.b32.xlu0 %v3272, 32
        %v3354 = vpop.permute.xlu0 %3353
        %3355 = vrot.lane.b32.xlu0 %v3273, 32
        %v3356 = vpop.permute.xlu0 %3355
        %3357 = vrot.lane.b32.xlu0 %v3274, 32
        %v3358 = vpop.permute.xlu0 %3357
        %3359 = vrot.lane.b32.xlu0 %v3275, 32
        %v3360 = vpop.permute.xlu0 %3359
        %3361 = vrot.lane.b32.xlu0 %v3276, 32
        %v3362 = vpop.permute.xlu0 %3361
        %3363 = vrot.lane.b32.xlu0 %v3277, 32
        %v3364 = vpop.permute.xlu0 %3363
        %3365 = vrot.lane.b32.xlu0 %v3278, 32
        %v3366 = vpop.permute.xlu0 %3365
        %3367 = vrot.lane.b32.xlu0 %v3279, 32
        %v3368 = vpop.permute.xlu0 %3367
        %3369 = vrot.lane.b32.xlu0 %v3280, 32
        %v3370 = vpop.permute.xlu0 %3369
        %3371 = vrot.lane.b32.xlu0 %v3281, 32
        %v3372 = vpop.permute.xlu0 %3371
        %3373 = vrot.lane.b32.xlu0 %v3282, 32
        %v3374 = vpop.permute.xlu0 %3373
        %3375 = vrot.lane.b32.xlu0 %v3283, 32
        %v3376 = vpop.permute.xlu0 %3375
        %3377 = vrot.lane.b32.xlu0 %v3284, 32
        %v3378 = vpop.permute.xlu0 %3377
        %3379 = vrot.lane.b32.xlu0 %v3285, 32
        %v3380 = vpop.permute.xlu0 %3379
        %3381 = vrot.lane.b32.xlu0 %v3286, 32
        %v3382 = vpop.permute.xlu0 %3381
        %vm3399 = vcmask 523520
        %3400 = vst.msk [vmem:[#allocation2] sm:$0xff] %vm3399, %v3352
        %3401 = vst.msk [vmem:[#allocation2 + $0x8] sm:$0xff] %vm3399, %v3354
        %3402 = vst.msk [vmem:[#allocation2 + $0x10] sm:$0xff] %vm3399, %v3356
        %3403 = vst.msk [vmem:[#allocation2 + $0x18] sm:$0xff] %vm3399, %v3358
        %3404 = vst.msk [vmem:[#allocation2 + $0x20] sm:$0xff] %vm3399, %v3360
        %3405 = vst.msk [vmem:[#allocation2 + $0x28] sm:$0xff] %vm3399, %v3362
        %3406 = vst.msk [vmem:[#allocation2 + $0x30] sm:$0xff] %vm3399, %v3364
        %3407 = vst.msk [vmem:[#allocation2 + $0x38] sm:$0xff] %vm3399, %v3366
        %3408 = vst.msk [vmem:[#allocation2 + $0x40] sm:$0xff] %vm3399, %v3368
        %3409 = vst.msk [vmem:[#allocation2 + $0x48] sm:$0xff] %vm3399, %v3370
        %3410 = vst.msk [vmem:[#allocation2 + $0x50] sm:$0xff] %vm3399, %v3372
        %3411 = vst.msk [vmem:[#allocation2 + $0x58] sm:$0xff] %vm3399, %v3374
        %3412 = vst.msk [vmem:[#allocation2 + $0x60] sm:$0xff] %vm3399, %v3376
        %3413 = vst.msk [vmem:[#allocation2 + $0x68] sm:$0xff] %vm3399, %v3378
        %3414 = vst.msk [vmem:[#allocation2 + $0x70] sm:$0xff] %vm3399, %v3380
        %3415 = vst.msk [vmem:[#allocation2 + $0x78] sm:$0xff] %vm3399, %v3382
        %3432 = vrot.lane.b32.xlu0 %v3287, 64
        %v3433 = vpop.permute.xlu0 %3432
        %3434 = vrot.lane.b32.xlu0 %v3288, 64
        %v3435 = vpop.permute.xlu0 %3434
        %3436 = vrot.lane.b32.xlu0 %v3289, 64
        %v3437 = vpop.permute.xlu0 %3436
        %3438 = vrot.lane.b32.xlu0 %v3290, 64
        %v3439 = vpop.permute.xlu0 %3438
        %3440 = vrot.lane.b32.xlu0 %v3291, 64
        %v3441 = vpop.permute.xlu0 %3440
        %3442 = vrot.lane.b32.xlu0 %v3292, 64
        %v3443 = vpop.permute.xlu0 %3442
        %3444 = vrot.lane.b32.xlu0 %v3293, 64
        %v3445 = vpop.permute.xlu0 %3444
        %3446 = vrot.lane.b32.xlu0 %v3294, 64
        %v3447 = vpop.permute.xlu0 %3446
        %3448 = vrot.lane.b32.xlu0 %v3295, 64
        %v3449 = vpop.permute.xlu0 %3448
        %3450 = vrot.lane.b32.xlu0 %v3296, 64
        %v3451 = vpop.permute.xlu0 %3450
        %3452 = vrot.lane.b32.xlu0 %v3297, 64
        %v3453 = vpop.permute.xlu0 %3452
        %3454 = vrot.lane.b32.xlu0 %v3298, 64
        %v3455 = vpop.permute.xlu0 %3454
        %3456 = vrot.lane.b32.xlu0 %v3299, 64
        %v3457 = vpop.permute.xlu0 %3456
        %3458 = vrot.lane.b32.xlu0 %v3300, 64
        %v3459 = vpop.permute.xlu0 %3458
        %3460 = vrot.lane.b32.xlu0 %v3301, 64
        %v3461 = vpop.permute.xlu0 %3460
        %3462 = vrot.lane.b32.xlu0 %v3302, 64
        %v3463 = vpop.permute.xlu0 %3462
        %vm3480 = vcmask 785920
        %3481 = vst.msk [vmem:[#allocation2] sm:$0xff] %vm3480, %v3433
        %3482 = vst.msk [vmem:[#allocation2 + $0x8] sm:$0xff] %vm3480, %v3435
        %3483 = vst.msk [vmem:[#allocation2 + $0x10] sm:$0xff] %vm3480, %v3437
        %3484 = vst.msk [vmem:[#allocation2 + $0x18] sm:$0xff] %vm3480, %v3439
        %3485 = vst.msk [vmem:[#allocation2 + $0x20] sm:$0xff] %vm3480, %v3441
        %3486 = vst.msk [vmem:[#allocation2 + $0x28] sm:$0xff] %vm3480, %v3443
        %3487 = vst.msk [vmem:[#allocation2 + $0x30] sm:$0xff] %vm3480, %v3445
        %3488 = vst.msk [vmem:[#allocation2 + $0x38] sm:$0xff] %vm3480, %v3447
        %3489 = vst.msk [vmem:[#allocation2 + $0x40] sm:$0xff] %vm3480, %v3449
        %3490 = vst.msk [vmem:[#allocation2 + $0x48] sm:$0xff] %vm3480, %v3451
        %3491 = vst.msk [vmem:[#allocation2 + $0x50] sm:$0xff] %vm3480, %v3453
        %3492 = vst.msk [vmem:[#allocation2 + $0x58] sm:$0xff] %vm3480, %v3455
        %3493 = vst.msk [vmem:[#allocation2 + $0x60] sm:$0xff] %vm3480, %v3457
        %3494 = vst.msk [vmem:[#allocation2 + $0x68] sm:$0xff] %vm3480, %v3459
        %3495 = vst.msk [vmem:[#allocation2 + $0x70] sm:$0xff] %vm3480, %v3461
        %3496 = vst.msk [vmem:[#allocation2 + $0x78] sm:$0xff] %vm3480, %v3463
        %3513 = vrot.lane.b32.xlu0 %v3303, 96
        %v3514 = vpop.permute.xlu0 %3513
        %3515 = vrot.lane.b32.xlu0 %v3304, 96
        %v3516 = vpop.permute.xlu0 %3515
        %3517 = vrot.lane.b32.xlu0 %v3305, 96
        %v3518 = vpop.permute.xlu0 %3517
        %3519 = vrot.lane.b32.xlu0 %v3306, 96
        %v3520 = vpop.permute.xlu0 %3519
        %3521 = vrot.lane.b32.xlu0 %v3307, 96
        %v3522 = vpop.permute.xlu0 %3521
        %3523 = vrot.lane.b32.xlu0 %v3308, 96
        %v3524 = vpop.permute.xlu0 %3523
        %3525 = vrot.lane.b32.xlu0 %v3309, 96
        %v3526 = vpop.permute.xlu0 %3525
        %3527 = vrot.lane.b32.xlu0 %v3310, 96
        %v3528 = vpop.permute.xlu0 %3527
        %3529 = vrot.lane.b32.xlu0 %v3311, 96
        %v3530 = vpop.permute.xlu0 %3529
        %3531 = vrot.lane.b32.xlu0 %v3312, 96
        %v3532 = vpop.permute.xlu0 %3531
        %3533 = vrot.lane.b32.xlu0 %v3313, 96
        %v3534 = vpop.permute.xlu0 %3533
        %3535 = vrot.lane.b32.xlu0 %v3314, 96
        %v3536 = vpop.permute.xlu0 %3535
        %3537 = vrot.lane.b32.xlu0 %v3315, 96
        %v3538 = vpop.permute.xlu0 %3537
        %3539 = vrot.lane.b32.xlu0 %v3316, 96
        %v3540 = vpop.permute.xlu0 %3539
        %3541 = vrot.lane.b32.xlu0 %v3317, 96
        %v3542 = vpop.permute.xlu0 %3541
        %3543 = vrot.lane.b32.xlu0 %v3318, 96
        %v3544 = vpop.permute.xlu0 %3543
        %vm3561 = vcmask 1048320
        %3562 = vst.msk [vmem:[#allocation2] sm:$0xff] %vm3561, %v3514
        %3563 = vst.msk [vmem:[#allocation2 + $0x8] sm:$0xff] %vm3561, %v3516
        %3564 = vst.msk [vmem:[#allocation2 + $0x10] sm:$0xff] %vm3561, %v3518
        %3565 = vst.msk [vmem:[#allocation2 + $0x18] sm:$0xff] %vm3561, %v3520
        %3566 = vst.msk [vmem:[#allocation2 + $0x20] sm:$0xff] %vm3561, %v3522
        %3567 = vst.msk [vmem:[#allocation2 + $0x28] sm:$0xff] %vm3561, %v3524
        %3568 = vst.msk [vmem:[#allocation2 + $0x30] sm:$0xff] %vm3561, %v3526
        %3569 = vst.msk [vmem:[#allocation2 + $0x38] sm:$0xff] %vm3561, %v3528
        %3570 = vst.msk [vmem:[#allocation2 + $0x40] sm:$0xff] %vm3561, %v3530
        %3571 = vst.msk [vmem:[#allocation2 + $0x48] sm:$0xff] %vm3561, %v3532
        %3572 = vst.msk [vmem:[#allocation2 + $0x50] sm:$0xff] %vm3561, %v3534
        %3573 = vst.msk [vmem:[#allocation2 + $0x58] sm:$0xff] %vm3561, %v3536
        %3574 = vst.msk [vmem:[#allocation2 + $0x60] sm:$0xff] %vm3561, %v3538
        %3575 = vst.msk [vmem:[#allocation2 + $0x68] sm:$0xff] %vm3561, %v3540
        %3576 = vst.msk [vmem:[#allocation2 + $0x70] sm:$0xff] %vm3561, %v3542
        %3577 = vst.msk [vmem:[#allocation2 + $0x78] sm:$0xff] %vm3561, %v3544
        %v3578 = vld [vmem:[#allocation2] sm:$0xff]
        %v3579 = vld [vmem:[#allocation2 + $0x8] sm:$0xff]
        %v3580 = vld [vmem:[#allocation2 + $0x10] sm:$0xff]
        %v3581 = vld [vmem:[#allocation2 + $0x18] sm:$0xff]
        %v3582 = vld [vmem:[#allocation2 + $0x20] sm:$0xff]
        %v3583 = vld [vmem:[#allocation2 + $0x28] sm:$0xff]
        %v3584 = vld [vmem:[#allocation2 + $0x30] sm:$0xff]
        %v3585 = vld [vmem:[#allocation2 + $0x38] sm:$0xff]
        %v3586 = vld [vmem:[#allocation2 + $0x40] sm:$0xff]
        %v3587 = vld [vmem:[#allocation2 + $0x48] sm:$0xff]
        %v3588 = vld [vmem:[#allocation2 + $0x50] sm:$0xff]
        %v3589 = vld [vmem:[#allocation2 + $0x58] sm:$0xff]
        %v3590 = vld [vmem:[#allocation2 + $0x60] sm:$0xff]
        %v3591 = vld [vmem:[#allocation2 + $0x68] sm:$0xff]
        %v3592 = vld [vmem:[#allocation2 + $0x70] sm:$0xff]
        %v3593 = vld [vmem:[#allocation2 + $0x78] sm:$0xff]
        %v3594 = vpack.c.bf16 %v3579, %v3578
        %v3595 = vpack.c.bf16 %v3581, %v3580
        %v3596 = vpack.c.bf16 %v3583, %v3582
        %v3597 = vpack.c.bf16 %v3585, %v3584
        %v3598 = vpack.c.bf16 %v3587, %v3586
        %v3599 = vpack.c.bf16 %v3589, %v3588
        %v3600 = vpack.c.bf16 %v3591, %v3590
        %v3601 = vpack.c.bf16 %v3593, %v3592
        %v3602 = vld [vmem:[#allocation9] sm:$0xf]
        %v3603 = vld [vmem:[#allocation9 + $0x4] sm:$0xf]
        %v3604 = vld [vmem:[#allocation9 + $0x8] sm:$0xf]
        %v3605 = vld [vmem:[#allocation9 + $0xc] sm:$0xf]
        %v3606 = vld [vmem:[#allocation9 + $0x10] sm:$0xf]
        %v3607 = vld [vmem:[#allocation9 + $0x14] sm:$0xf]
        %v3608 = vld [vmem:[#allocation9 + $0x18] sm:$0xf]
        %v3609 = vld [vmem:[#allocation9 + $0x1c] sm:$0xf]
        %v3610 = vld [vmem:[#allocation9 + $0x20] sm:$0xf]
        %v3611 = vld [vmem:[#allocation9 + $0x24] sm:$0xf]
        %v3612 = vld [vmem:[#allocation9 + $0x28] sm:$0xf]
        %v3613 = vld [vmem:[#allocation9 + $0x2c] sm:$0xf]
        %v3614 = vld [vmem:[#allocation9 + $0x30] sm:$0xf]
        %v3615 = vld [vmem:[#allocation9 + $0x34] sm:$0xf]
        %v3616 = vld [vmem:[#allocation9 + $0x38] sm:$0xf]
        %v3617 = vld [vmem:[#allocation9 + $0x3c] sm:$0xf]
        %v3618 = vld [vmem:[%s6] sm:$0x1]
        %v3620 = vlaneseq
        %v3621 = vshrl.u32 %v3620, 7
        %v3622 = vsub.s32 0, %v3621
        %v3623 = vrot.slane %v3618, %v3622
        %v3641 = vunpack.c.l.b16 %v3602
        %v3642 = vunpack.c.l.b16 %v3603
        %v3643 = vunpack.c.l.b16 %v3604
        %v3644 = vunpack.c.l.b16 %v3605
        %v3645 = vunpack.c.l.b16 %v3606
        %v3646 = vunpack.c.l.b16 %v3607
        %v3647 = vunpack.c.l.b16 %v3608
        %v3648 = vunpack.c.l.b16 %v3609
        %v3649 = vunpack.c.l.b16 %v3610
        %v3650 = vunpack.c.l.b16 %v3611
        %v3651 = vunpack.c.l.b16 %v3612
        %v3652 = vunpack.c.l.b16 %v3613
        %v3653 = vunpack.c.l.b16 %v3614
        %v3654 = vunpack.c.l.b16 %v3615
        %v3655 = vunpack.c.l.b16 %v3616
        %v3656 = vunpack.c.l.b16 %v3617
        %v3657 = vpack.c.b16 %v3642, %v3641
        %v3658 = vpack.c.b16 %v3644, %v3643
        %v3659 = vpack.c.b16 %v3646, %v3645
        %v3660 = vpack.c.b16 %v3648, %v3647
        %v3661 = vpack.c.b16 %v3650, %v3649
        %v3662 = vpack.c.b16 %v3652, %v3651
        %v3663 = vpack.c.b16 %v3654, %v3653
        %v3664 = vpack.c.b16 %v3656, %v3655
        %3673 = vmatprep.subr.bf16.mxu0 0
        %3674 = vmatpush1.bf16.msra.mxu0 %v3657
        %3675 = vmatprep.subr.bf16.mxu0 0
        %3676 = vmatpush1.bf16.msra.mxu0 %v3658
        %3677 = vmatprep.subr.bf16.mxu0 0
        %3678 = vmatpush1.bf16.msra.mxu0 %v3659
        %3679 = vmatprep.subr.bf16.mxu0 0
        %3680 = vmatpush1.bf16.msra.mxu0 %v3660
        %3681 = vmatprep.subr.bf16.mxu0 0
        %3682 = vmatpush1.bf16.msra.mxu0 %v3661
        %3683 = vmatprep.subr.bf16.mxu0 0
        %3684 = vmatpush1.bf16.msra.mxu0 %v3662
        %3685 = vmatprep.subr.bf16.mxu0 0
        %3686 = vmatpush1.bf16.msra.mxu0 %v3663
        %3687 = vmatprep.subr.bf16.mxu0 0
        %3688 = vmatpush1.bf16.msra.mxu0 %v3664
        %3689 = vmatprep.subr.bf16.mxu0 0
        %3690 = vmatpush1.bf16.msra.mxu0 0
        %3691 = vmatprep.subr.bf16.mxu0 0
        %3692 = vmatpush1.bf16.msra.mxu0 0
        %3693 = vmatprep.subr.bf16.mxu0 0
        %3694 = vmatpush1.bf16.msra.mxu0 0
        %3695 = vmatprep.subr.bf16.mxu0 0
        %3696 = vmatpush1.bf16.msra.mxu0 0
        %3697 = vmatprep.subr.bf16.mxu0 0
        %3698 = vmatpush1.bf16.msra.mxu0 0
        %3699 = vmatprep.subr.bf16.mxu0 0
        %3700 = vmatpush1.bf16.msra.mxu0 0
        %3701 = vmatprep.subr.bf16.mxu0 0
        %3702 = vmatpush1.bf16.msra.mxu0 0
        %3703 = vmatprep.subr.bf16.mxu0 0
        %3704 = vmatpush1.bf16.msra.mxu0 0
        %3705 = vmatprep.mubr.bf16.mxu0 0
        %3706 = vmatmul.mubr.bf16.gmra.mrb[0].mxu0 %v3594
        %v3707 = vpop.f32.mrb[0].mxu0
        %v3708 = vadd.f32 %v3623, %v3707
        %v3709 = vpop.f32.mrb[0].mxu0
        %v3710 = vpop.f32.mrb[0].mxu0
        %v3711 = vadd.f32 %v3623, %v3710
        %v3712 = vpop.f32.mrb[0].mxu0
        %3713 = vmatprep.mubr.bf16.mxu0 0
        %3714 = vmatmul.mubr.bf16.gmra.mrb[0].mxu0 %v3595
        %v3715 = vpop.f32.mrb[0].mxu0
        %v3716 = vadd.f32 %v3623, %v3715
        %v3717 = vpop.f32.mrb[0].mxu0
        %v3718 = vpop.f32.mrb[0].mxu0
        %v3719 = vadd.f32 %v3623, %v3718
        %v3720 = vpop.f32.mrb[0].mxu0
        %3721 = vmatprep.mubr.bf16.mxu0 0
        %3722 = vmatmul.mubr.bf16.gmra.mrb[0].mxu0 %v3596
        %v3723 = vpop.f32.mrb[0].mxu0
        %v3724 = vadd.f32 %v3623, %v3723
        %v3725 = vpop.f32.mrb[0].mxu0
        %v3726 = vpop.f32.mrb[0].mxu0
        %v3727 = vadd.f32 %v3623, %v3726
        %v3728 = vpop.f32.mrb[0].mxu0
        %3729 = vmatprep.mubr.bf16.mxu0 0
        %3730 = vmatmul.mubr.bf16.gmra.mrb[0].mxu0 %v3597
        %v3731 = vpop.f32.mrb[0].mxu0
        %v3732 = vadd.f32 %v3623, %v3731
        %v3733 = vpop.f32.mrb[0].mxu0
        %v3734 = vpop.f32.mrb[0].mxu0
        %v3735 = vadd.f32 %v3623, %v3734
        %v3736 = vpop.f32.mrb[0].mxu0
        %3737 = vmatprep.mubr.bf16.mxu0 0
        %3738 = vmatmul.mubr.bf16.gmra.mrb[0].mxu0 %v3598
        %v3739 = vpop.f32.mrb[0].mxu0
        %v3740 = vadd.f32 %v3623, %v3739
        %v3741 = vpop.f32.mrb[0].mxu0
        %v3742 = vpop.f32.mrb[0].mxu0
        %v3743 = vadd.f32 %v3623, %v3742
        %v3744 = vpop.f32.mrb[0].mxu0
        %3745 = vmatprep.mubr.bf16.mxu0 0
        %3746 = vmatmul.mubr.bf16.gmra.mrb[0].mxu0 %v3599
        %v3747 = vpop.f32.mrb[0].mxu0
        %v3748 = vadd.f32 %v3623, %v3747
        %v3749 = vpop.f32.mrb[0].mxu0
        %v3750 = vpop.f32.mrb[0].mxu0
        %v3751 = vadd.f32 %v3623, %v3750
        %v3752 = vpop.f32.mrb[0].mxu0
        %3753 = vmatprep.mubr.bf16.mxu0 0
        %3754 = vmatmul.mubr.bf16.gmra.mrb[0].mxu0 %v3600
        %v3755 = vpop.f32.mrb[0].mxu0
        %v3756 = vadd.f32 %v3623, %v3755
        %v3757 = vpop.f32.mrb[0].mxu0
        %v3758 = vpop.f32.mrb[0].mxu0
        %v3759 = vadd.f32 %v3623, %v3758
        %v3760 = vpop.f32.mrb[0].mxu0
        %3761 = vmatprep.mubr.bf16.mxu0 0
        %3762 = vmatmul.mubr.bf16.gmra.mrb[0].mxu0 %v3601
        %v3763 = vpop.f32.mrb[0].mxu0
        %v3764 = vadd.f32 %v3623, %v3763
        %v3765 = vpop.f32.mrb[0].mxu0
        %v3766 = vpop.f32.mrb[0].mxu0
        %v3767 = vadd.f32 %v3623, %v3766
        %v3768 = vpop.f32.mrb[0].mxu0
        %3769 = vdwg.mxu0
        %v3770 = vadd.f32 %v533, %v3708
        %v3771 = vadd.f32 %v534, %v3711
        %v3772 = vadd.f32 %v535, %v3716
        %v3773 = vadd.f32 %v536, %v3719
        %v3774 = vadd.f32 %v537, %v3724
        %v3775 = vadd.f32 %v538, %v3727
        %v3776 = vadd.f32 %v539, %v3732
        %v3777 = vadd.f32 %v540, %v3735
        %v3778 = vadd.f32 %v541, %v3740
        %v3779 = vadd.f32 %v542, %v3743
        %v3780 = vadd.f32 %v543, %v3748
        %v3781 = vadd.f32 %v544, %v3751
        %v3782 = vadd.f32 %v545, %v3756
        %v3783 = vadd.f32 %v546, %v3759
        %v3784 = vadd.f32 %v547, %v3764
        %v3785 = vadd.f32 %v548, %v3767
        %v3786 = vld [vmem:[%s7] sm:$0x1]
        %v3787 = vld [vmem:[%s8] sm:$0x1]
        %3788 = vadd.xlane.f32.xlu0 %v3770
        %v3789 = vpop.xlane.xlu0 %3788
        %3790 = vadd.xlane.f32.xlu0 %v3771
        %v3791 = vpop.xlane.xlu0 %3790
        %3792 = vadd.xlane.f32.xlu0 %v3772
        %v3793 = vpop.xlane.xlu0 %3792
        %3794 = vadd.xlane.f32.xlu0 %v3773
        %v3795 = vpop.xlane.xlu0 %3794
        %3796 = vadd.xlane.f32.xlu0 %v3774
        %v3797 = vpop.xlane.xlu0 %3796
        %3798 = vadd.xlane.f32.xlu0 %v3775
        %v3799 = vpop.xlane.xlu0 %3798
        %3800 = vadd.xlane.f32.xlu0 %v3776
        %v3801 = vpop.xlane.xlu0 %3800
        %3802 = vadd.xlane.f32.xlu0 %v3777
        %v3803 = vpop.xlane.xlu0 %3802
        %3804 = vadd.xlane.f32.xlu0 %v3778
        %v3805 = vpop.xlane.xlu0 %3804
        %3806 = vadd.xlane.f32.xlu0 %v3779
        %v3807 = vpop.xlane.xlu0 %3806
        %3808 = vadd.xlane.f32.xlu0 %v3780
        %v3809 = vpop.xlane.xlu0 %3808
        %3810 = vadd.xlane.f32.xlu0 %v3781
        %v3811 = vpop.xlane.xlu0 %3810
        %3812 = vadd.xlane.f32.xlu0 %v3782
        %v3813 = vpop.xlane.xlu0 %3812
        %3814 = vadd.xlane.f32.xlu0 %v3783
        %v3815 = vpop.xlane.xlu0 %3814
        %3816 = vadd.xlane.f32.xlu0 %v3784
        %v3817 = vpop.xlane.xlu0 %3816
        %3818 = vadd.xlane.f32.xlu0 %v3785
        %v3819 = vpop.xlane.xlu0 %3818
        %v3820 = vmul.f32 %v3789, %v583
        %v3821 = vmul.f32 %v3791, %v583
        %v3822 = vmul.f32 %v3793, %v583
        %v3823 = vmul.f32 %v3795, %v583
        %v3824 = vmul.f32 %v3797, %v583
        %v3825 = vmul.f32 %v3799, %v583
        %v3826 = vmul.f32 %v3801, %v583
        %v3827 = vmul.f32 %v3803, %v583
        %v3828 = vmul.f32 %v3805, %v583
        %v3829 = vmul.f32 %v3807, %v583
        %v3830 = vmul.f32 %v3809, %v583
        %v3831 = vmul.f32 %v3811, %v583
        %v3832 = vmul.f32 %v3813, %v583
        %v3833 = vmul.f32 %v3815, %v583
        %v3834 = vmul.f32 %v3817, %v583
        %v3835 = vmul.f32 %v3819, %v583
        %v3836 = vsub.f32 %v3770, %v3820
        %v3837 = vsub.f32 %v3771, %v3821
        %v3838 = vsub.f32 %v3772, %v3822
        %v3839 = vsub.f32 %v3773, %v3823
        %v3840 = vsub.f32 %v3774, %v3824
        %v3841 = vsub.f32 %v3775, %v3825
        %v3842 = vsub.f32 %v3776, %v3826
        %v3843 = vsub.f32 %v3777, %v3827
        %v3844 = vsub.f32 %v3778, %v3828
        %v3845 = vsub.f32 %v3779, %v3829
        %v3846 = vsub.f32 %v3780, %v3830
        %v3847 = vsub.f32 %v3781, %v3831
        %v3848 = vsub.f32 %v3782, %v3832
        %v3849 = vsub.f32 %v3783, %v3833
        %v3850 = vsub.f32 %v3784, %v3834
        %v3851 = vsub.f32 %v3785, %v3835
        %v3852 = vmul.f32 %v3836, %v3836
        %v3853 = vmul.f32 %v3837, %v3837
        %v3854 = vmul.f32 %v3838, %v3838
        %v3855 = vmul.f32 %v3839, %v3839
        %v3856 = vmul.f32 %v3840, %v3840
        %v3857 = vmul.f32 %v3841, %v3841
        %v3858 = vmul.f32 %v3842, %v3842
        %v3859 = vmul.f32 %v3843, %v3843
        %v3860 = vmul.f32 %v3844, %v3844
        %v3861 = vmul.f32 %v3845, %v3845
        %v3862 = vmul.f32 %v3846, %v3846
        %v3863 = vmul.f32 %v3847, %v3847
        %v3864 = vmul.f32 %v3848, %v3848
        %v3865 = vmul.f32 %v3849, %v3849
        %v3866 = vmul.f32 %v3850, %v3850
        %v3867 = vmul.f32 %v3851, %v3851
        %3868 = vadd.xlane.f32.xlu0 %v3852
        %v3869 = vpop.xlane.xlu0 %3868
        %3870 = vadd.xlane.f32.xlu0 %v3853
        %v3871 = vpop.xlane.xlu0 %3870
        %3872 = vadd.xlane.f32.xlu0 %v3854
        %v3873 = vpop.xlane.xlu0 %3872
        %3874 = vadd.xlane.f32.xlu0 %v3855
        %v3875 = vpop.xlane.xlu0 %3874
        %3876 = vadd.xlane.f32.xlu0 %v3856
        %v3877 = vpop.xlane.xlu0 %3876
        %3878 = vadd.xlane.f32.xlu0 %v3857
        %v3879 = vpop.xlane.xlu0 %3878
        %3880 = vadd.xlane.f32.xlu0 %v3858
        %v3881 = vpop.xlane.xlu0 %3880
        %3882 = vadd.xlane.f32.xlu0 %v3859
        %v3883 = vpop.xlane.xlu0 %3882
        %3884 = vadd.xlane.f32.xlu0 %v3860
        %v3885 = vpop.xlane.xlu0 %3884
        %3886 = vadd.xlane.f32.xlu0 %v3861
        %v3887 = vpop.xlane.xlu0 %3886
        %3888 = vadd.xlane.f32.xlu0 %v3862
        %v3889 = vpop.xlane.xlu0 %3888
        %3890 = vadd.xlane.f32.xlu0 %v3863
        %v3891 = vpop.xlane.xlu0 %3890
        %3892 = vadd.xlane.f32.xlu0 %v3864
        %v3893 = vpop.xlane.xlu0 %3892
        %3894 = vadd.xlane.f32.xlu0 %v3865
        %v3895 = vpop.xlane.xlu0 %3894
        %3896 = vadd.xlane.f32.xlu0 %v3866
        %v3897 = vpop.xlane.xlu0 %3896
        %3898 = vadd.xlane.f32.xlu0 %v3867
        %v3899 = vpop.xlane.xlu0 %3898
        %v3900 = vmul.f32 %v3869, %v583
        %v3901 = vmul.f32 %v3871, %v583
        %v3902 = vmul.f32 %v3873, %v583
        %v3903 = vmul.f32 %v3875, %v583
        %v3904 = vmul.f32 %v3877, %v583
        %v3905 = vmul.f32 %v3879, %v583
        %v3906 = vmul.f32 %v3881, %v583
        %v3907 = vmul.f32 %v3883, %v583
        %v3908 = vmul.f32 %v3885, %v583
        %v3909 = vmul.f32 %v3887, %v583
        %v3910 = vmul.f32 %v3889, %v583
        %v3911 = vmul.f32 %v3891, %v583
        %v3912 = vmul.f32 %v3893, %v583
        %v3913 = vmul.f32 %v3895, %v583
        %v3914 = vmul.f32 %v3897, %v583
        %v3915 = vmul.f32 %v3899, %v583
        %v3916 = vadd.f32 %v3900, 1e-05
        %v3917 = vadd.f32 %v3901, 1e-05
        %v3918 = vadd.f32 %v3902, 1e-05
        %v3919 = vadd.f32 %v3903, 1e-05
        %v3920 = vadd.f32 %v3904, 1e-05
        %v3921 = vadd.f32 %v3905, 1e-05
        %v3922 = vadd.f32 %v3906, 1e-05
        %v3923 = vadd.f32 %v3907, 1e-05
        %v3924 = vadd.f32 %v3908, 1e-05
        %v3925 = vadd.f32 %v3909, 1e-05
        %v3926 = vadd.f32 %v3910, 1e-05
        %v3927 = vadd.f32 %v3911, 1e-05
        %v3928 = vadd.f32 %v3912, 1e-05
        %v3929 = vadd.f32 %v3913, 1e-05
        %v3930 = vadd.f32 %v3914, 1e-05
        %v3931 = vadd.f32 %v3915, 1e-05
        %v3932 = vrsqrt.pop %v3916
        %v3933 = vrsqrt.pop %v3917
        %v3934 = vrsqrt.pop %v3918
        %v3935 = vrsqrt.pop %v3919
        %v3936 = vrsqrt.pop %v3920
        %v3937 = vrsqrt.pop %v3921
        %v3938 = vrsqrt.pop %v3922
        %v3939 = vrsqrt.pop %v3923
        %v3940 = vrsqrt.pop %v3924
        %v3941 = vrsqrt.pop %v3925
        %v3942 = vrsqrt.pop %v3926
        %v3943 = vrsqrt.pop %v3927
        %v3944 = vrsqrt.pop %v3928
        %v3945 = vrsqrt.pop %v3929
        %v3946 = vrsqrt.pop %v3930
        %v3947 = vrsqrt.pop %v3931
        %v3948 = vmul.f32 %v3836, %v3932
        %v3949 = vmul.f32 %v3837, %v3933
        %v3950 = vmul.f32 %v3838, %v3934
        %v3951 = vmul.f32 %v3839, %v3935
        %v3952 = vmul.f32 %v3840, %v3936
        %v3953 = vmul.f32 %v3841, %v3937
        %v3954 = vmul.f32 %v3842, %v3938
        %v3955 = vmul.f32 %v3843, %v3939
        %v3956 = vmul.f32 %v3844, %v3940
        %v3957 = vmul.f32 %v3845, %v3941
        %v3958 = vmul.f32 %v3846, %v3942
        %v3959 = vmul.f32 %v3847, %v3943
        %v3960 = vmul.f32 %v3848, %v3944
        %v3961 = vmul.f32 %v3849, %v3945
        %v3962 = vmul.f32 %v3850, %v3946
        %v3963 = vmul.f32 %v3851, %v3947
        %v3965 = vlaneseq
        %v3966 = vshrl.u32 %v3965, 7
        %v3967 = vsub.s32 0, %v3966
        %v3968 = vrot.slane %v3786, %v3967
        %v3970 = vmul.f32 %v3948, %v3968
        %v3971 = vmul.f32 %v3949, %v3968
        %v3972 = vmul.f32 %v3950, %v3968
        %v3973 = vmul.f32 %v3951, %v3968
        %v3974 = vmul.f32 %v3952, %v3968
        %v3975 = vmul.f32 %v3953, %v3968
        %v3976 = vmul.f32 %v3954, %v3968
        %v3977 = vmul.f32 %v3955, %v3968
        %v3978 = vmul.f32 %v3956, %v3968
        %v3979 = vmul.f32 %v3957, %v3968
        %v3980 = vmul.f32 %v3958, %v3968
        %v3981 = vmul.f32 %v3959, %v3968
        %v3982 = vmul.f32 %v3960, %v3968
        %v3983 = vmul.f32 %v3961, %v3968
        %v3984 = vmul.f32 %v3962, %v3968
        %v3985 = vmul.f32 %v3963, %v3968
        %v3987 = vlaneseq
        %v3988 = vshrl.u32 %v3987, 7
        %v3989 = vsub.s32 0, %v3988
        %v3990 = vrot.slane %v3787, %v3989
        %v3992 = vadd.f32 %v3970, %v3990
        %v3993 = vadd.f32 %v3971, %v3990
        %v3994 = vadd.f32 %v3972, %v3990
        %v3995 = vadd.f32 %v3973, %v3990
        %v3996 = vadd.f32 %v3974, %v3990
        %v3997 = vadd.f32 %v3975, %v3990
        %v3998 = vadd.f32 %v3976, %v3990
        %v3999 = vadd.f32 %v3977, %v3990
        %v4000 = vadd.f32 %v3978, %v3990
        %v4001 = vadd.f32 %v3979, %v3990
        %v4002 = vadd.f32 %v3980, %v3990
        %v4003 = vadd.f32 %v3981, %v3990
        %v4004 = vadd.f32 %v3982, %v3990
        %v4005 = vadd.f32 %v3983, %v3990
        %v4006 = vadd.f32 %v3984, %v3990
        %v4007 = vadd.f32 %v3985, %v3990
        %v4008 = vpack.c.bf16 %v3993, %v3992
        %v4009 = vpack.c.bf16 %v3995, %v3994
        %v4010 = vpack.c.bf16 %v3997, %v3996
        %v4011 = vpack.c.bf16 %v3999, %v3998
        %v4012 = vpack.c.bf16 %v4001, %v4000
        %v4013 = vpack.c.bf16 %v4003, %v4002
        %v4014 = vpack.c.bf16 %v4005, %v4004
        %v4015 = vpack.c.bf16 %v4007, %v4006
        %v4016 = vld [vmem:[#allocation11] sm:$0xff]
        %v4017 = vld [vmem:[#allocation11 + $0x8] sm:$0xff]
        %v4018 = vld [vmem:[#allocation11 + $0x10] sm:$0xff]
        %v4019 = vld [vmem:[#allocation11 + $0x18] sm:$0xff]
        %v4020 = vld [vmem:[#allocation11 + $0x20] sm:$0xff]
        %v4021 = vld [vmem:[#allocation11 + $0x28] sm:$0xff]
        %v4022 = vld [vmem:[#allocation11 + $0x30] sm:$0xff]
        %v4023 = vld [vmem:[#allocation11 + $0x38] sm:$0xff]
        %v4024 = vld [vmem:[#allocation11 + $0x40] sm:$0xff]
        %v4025 = vld [vmem:[#allocation11 + $0x48] sm:$0xff]
        %v4026 = vld [vmem:[#allocation11 + $0x50] sm:$0xff]
        %v4027 = vld [vmem:[#allocation11 + $0x58] sm:$0xff]
        %v4028 = vld [vmem:[#allocation11 + $0x60] sm:$0xff]
        %v4029 = vld [vmem:[#allocation11 + $0x68] sm:$0xff]
        %v4030 = vld [vmem:[#allocation11 + $0x70] sm:$0xff]
        %v4031 = vld [vmem:[#allocation11 + $0x78] sm:$0xff]
        %v4032 = vld [vmem:[#allocation11 + $0x80] sm:$0xff]
        %v4033 = vld [vmem:[#allocation11 + $0x88] sm:$0xff]
        %v4034 = vld [vmem:[#allocation11 + $0x90] sm:$0xff]
        %v4035 = vld [vmem:[#allocation11 + $0x98] sm:$0xff]
        %v4036 = vld [vmem:[#allocation11 + $0xa0] sm:$0xff]
        %v4037 = vld [vmem:[#allocation11 + $0xa8] sm:$0xff]
        %v4038 = vld [vmem:[#allocation11 + $0xb0] sm:$0xff]
        %v4039 = vld [vmem:[#allocation11 + $0xb8] sm:$0xff]
        %v4040 = vld [vmem:[#allocation11 + $0xc0] sm:$0xff]
        %v4041 = vld [vmem:[#allocation11 + $0xc8] sm:$0xff]
        %v4042 = vld [vmem:[#allocation11 + $0xd0] sm:$0xff]
        %v4043 = vld [vmem:[#allocation11 + $0xd8] sm:$0xff]
        %v4044 = vld [vmem:[#allocation11 + $0xe0] sm:$0xff]
        %v4045 = vld [vmem:[#allocation11 + $0xe8] sm:$0xff]
        %v4046 = vld [vmem:[#allocation11 + $0xf0] sm:$0xff]
        %v4047 = vld [vmem:[#allocation11 + $0xf8] sm:$0xff]
        %v4048 = vld [vmem:[%s10] sm:$0xf]
        %v4050 = vlaneseq
        %v4051 = vshrl.u32 %v4050, 7
        %v4052 = vsub.s32 0, %v4051
        %v4053 = vrot.slane %v4048, %v4052
        %v4054 = vlaneseq
        %v4055 = vshrl.u32 %v4054, 7
        %v4056 = vsub.s32 1, %v4055
        %v4057 = vrot.slane %v4048, %v4056
        %v4058 = vlaneseq
        %v4059 = vshrl.u32 %v4058, 7
        %v4060 = vsub.s32 2, %v4059
        %v4061 = vrot.slane %v4048, %v4060
        %v4062 = vlaneseq
        %v4063 = vshrl.u32 %v4062, 7
        %v4064 = vsub.s32 3, %v4063
        %v4065 = vrot.slane %v4048, %v4064
        %v4102 = vunpack.c.l.b16 %v4016
        %v4103 = vunpack.c.h.b16 %v4016
        %v4104 = vunpack.c.l.b16 %v4017
        %v4105 = vunpack.c.h.b16 %v4017
        %v4106 = vunpack.c.l.b16 %v4018
        %v4107 = vunpack.c.h.b16 %v4018
        %v4108 = vunpack.c.l.b16 %v4019
        %v4109 = vunpack.c.h.b16 %v4019
        %v4110 = vunpack.c.l.b16 %v4020
        %v4111 = vunpack.c.h.b16 %v4020
        %v4112 = vunpack.c.l.b16 %v4021
        %v4113 = vunpack.c.h.b16 %v4021
        %v4114 = vunpack.c.l.b16 %v4022
        %v4115 = vunpack.c.h.b16 %v4022
        %v4116 = vunpack.c.l.b16 %v4023
        %v4117 = vunpack.c.h.b16 %v4023
        %v4118 = vunpack.c.l.b16 %v4024
        %v4119 = vunpack.c.h.b16 %v4024
        %v4120 = vunpack.c.l.b16 %v4025
        %v4121 = vunpack.c.h.b16 %v4025
        %v4122 = vunpack.c.l.b16 %v4026
        %v4123 = vunpack.c.h.b16 %v4026
        %v4124 = vunpack.c.l.b16 %v4027
        %v4125 = vunpack.c.h.b16 %v4027
        %v4126 = vunpack.c.l.b16 %v4028
        %v4127 = vunpack.c.h.b16 %v4028
        %v4128 = vunpack.c.l.b16 %v4029
        %v4129 = vunpack.c.h.b16 %v4029
        %v4130 = vunpack.c.l.b16 %v4030
        %v4131 = vunpack.c.h.b16 %v4030
        %v4132 = vunpack.c.l.b16 %v4031
        %v4133 = vunpack.c.h.b16 %v4031
        %v4134 = vunpack.c.l.b16 %v4032
        %v4135 = vunpack.c.h.b16 %v4032
        %v4136 = vunpack.c.l.b16 %v4033
        %v4137 = vunpack.c.h.b16 %v4033
        %v4138 = vunpack.c.l.b16 %v4034
        %v4139 = vunpack.c.h.b16 %v4034
        %v4140 = vunpack.c.l.b16 %v4035
        %v4141 = vunpack.c.h.b16 %v4035
        %v4142 = vunpack.c.l.b16 %v4036
        %v4143 = vunpack.c.h.b16 %v4036
        %v4144 = vunpack.c.l.b16 %v4037
        %v4145 = vunpack.c.h.b16 %v4037
        %v4146 = vunpack.c.l.b16 %v4038
        %v4147 = vunpack.c.h.b16 %v4038
        %v4148 = vunpack.c.l.b16 %v4039
        %v4149 = vunpack.c.h.b16 %v4039
        %v4150 = vunpack.c.l.b16 %v4040
        %v4151 = vunpack.c.h.b16 %v4040
        %v4152 = vunpack.c.l.b16 %v4041
        %v4153 = vunpack.c.h.b16 %v4041
        %v4154 = vunpack.c.l.b16 %v4042
        %v4155 = vunpack.c.h.b16 %v4042
        %v4156 = vunpack.c.l.b16 %v4043
        %v4157 = vunpack.c.h.b16 %v4043
        %v4158 = vunpack.c.l.b16 %v4044
        %v4159 = vunpack.c.h.b16 %v4044
        %v4160 = vunpack.c.l.b16 %v4045
        %v4161 = vunpack.c.h.b16 %v4045
        %v4162 = vunpack.c.l.b16 %v4046
        %v4163 = vunpack.c.h.b16 %v4046
        %v4164 = vunpack.c.l.b16 %v4047
        %v4165 = vunpack.c.h.b16 %v4047
        %v4166 = vpack.c.b16 %v4106, %v4102
        %v4167 = vpack.c.b16 %v4107, %v4103
        %v4168 = vpack.c.b16 %v4108, %v4104
        %v4169 = vpack.c.b16 %v4109, %v4105
        %v4170 = vpack.c.b16 %v4114, %v4110
        %v4171 = vpack.c.b16 %v4115, %v4111
        %v4172 = vpack.c.b16 %v4116, %v4112
        %v4173 = vpack.c.b16 %v4117, %v4113
        %v4174 = vpack.c.b16 %v4122, %v4118
        %v4175 = vpack.c.b16 %v4123, %v4119
        %v4176 = vpack.c.b16 %v4124, %v4120
        %v4177 = vpack.c.b16 %v4125, %v4121
        %v4178 = vpack.c.b16 %v4130, %v4126
        %v4179 = vpack.c.b16 %v4131, %v4127
        %v4180 = vpack.c.b16 %v4132, %v4128
        %v4181 = vpack.c.b16 %v4133, %v4129
        %v4182 = vpack.c.b16 %v4138, %v4134
        %v4183 = vpack.c.b16 %v4139, %v4135
        %v4184 = vpack.c.b16 %v4140, %v4136
        %v4185 = vpack.c.b16 %v4141, %v4137
        %v4186 = vpack.c.b16 %v4146, %v4142
        %v4187 = vpack.c.b16 %v4147, %v4143
        %v4188 = vpack.c.b16 %v4148, %v4144
        %v4189 = vpack.c.b16 %v4149, %v4145
        %v4190 = vpack.c.b16 %v4154, %v4150
        %v4191 = vpack.c.b16 %v4155, %v4151
        %v4192 = vpack.c.b16 %v4156, %v4152
        %v4193 = vpack.c.b16 %v4157, %v4153
        %v4194 = vpack.c.b16 %v4162, %v4158
        %v4195 = vpack.c.b16 %v4163, %v4159
        %v4196 = vpack.c.b16 %v4164, %v4160
        %v4197 = vpack.c.b16 %v4165, %v4161
        %4230 = vmatprep.subr.bf16.mxu0 %v4167
        %4231 = vmatpush1.bf16.msra.mxu0 %v4166
        %4232 = vmatprep.subr.bf16.mxu0 %v4171
        %4233 = vmatpush1.bf16.msra.mxu0 %v4170
        %4234 = vmatprep.subr.bf16.mxu0 %v4175
        %4235 = vmatpush1.bf16.msra.mxu0 %v4174
        %4236 = vmatprep.subr.bf16.mxu0 %v4179
        %4237 = vmatpush1.bf16.msra.mxu0 %v4178
        %4238 = vmatprep.subr.bf16.mxu0 %v4183
        %4239 = vmatpush1.bf16.msra.mxu0 %v4182
        %4240 = vmatprep.subr.bf16.mxu0 %v4187
        %4241 = vmatpush1.bf16.msra.mxu0 %v4186
        %4242 = vmatprep.subr.bf16.mxu0 %v4191
        %4243 = vmatpush1.bf16.msra.mxu0 %v4190
        %4244 = vmatprep.subr.bf16.mxu0 %v4195
        %4245 = vmatpush1.bf16.msra.mxu0 %v4194
        %4246 = vmatprep.subr.bf16.mxu0 0
        %4247 = vmatpush1.bf16.msra.mxu0 0
        %4248 = vmatprep.subr.bf16.mxu0 0
        %4249 = vmatpush1.bf16.msra.mxu0 0
        %4250 = vmatprep.subr.bf16.mxu0 0
        %4251 = vmatpush1.bf16.msra.mxu0 0
        %4252 = vmatprep.subr.bf16.mxu0 0
        %4253 = vmatpush1.bf16.msra.mxu0 0
        %4254 = vmatprep.subr.bf16.mxu0 0
        %4255 = vmatpush1.bf16.msra.mxu0 0
        %4256 = vmatprep.subr.bf16.mxu0 0
        %4257 = vmatpush1.bf16.msra.mxu0 0
        %4258 = vmatprep.subr.bf16.mxu0 0
        %4259 = vmatpush1.bf16.msra.mxu0 0
        %4260 = vmatprep.subr.bf16.mxu0 0
        %4261 = vmatpush1.bf16.msra.mxu0 0
        %4262 = vmatprep.mubr.bf16.mxu0 0
        %4263 = vmatmul.mubr.bf16.gmra.mrb[0].mxu0 %v4008
        %v4264 = vpop.f32.mrb[0].mxu0
        %v4265 = vadd.f32 %v4053, %v4264
        %v4266 = vpop.f32.mrb[0].mxu0
        %v4267 = vadd.f32 %v4057, %v4266
        %v4268 = vpop.f32.mrb[0].mxu0
        %v4269 = vadd.f32 %v4053, %v4268
        %v4270 = vpop.f32.mrb[0].mxu0
        %v4271 = vadd.f32 %v4057, %v4270
        %4272 = vmatprep.mubr.bf16.mxu0 0
        %4273 = vmatmul.mubr.bf16.gmra.mrb[0].mxu0 %v4009
        %v4274 = vpop.f32.mrb[0].mxu0
        %v4275 = vadd.f32 %v4053, %v4274
        %v4276 = vpop.f32.mrb[0].mxu0
        %v4277 = vadd.f32 %v4057, %v4276
        %v4278 = vpop.f32.mrb[0].mxu0
        %v4279 = vadd.f32 %v4053, %v4278
        %v4280 = vpop.f32.mrb[0].mxu0
        %v4281 = vadd.f32 %v4057, %v4280
        %4282 = vmatprep.mubr.bf16.mxu0 0
        %4283 = vmatmul.mubr.bf16.gmra.mrb[0].mxu0 %v4010
        %v4284 = vpop.f32.mrb[0].mxu0
        %v4285 = vadd.f32 %v4053, %v4284
        %v4286 = vpop.f32.mrb[0].mxu0
        %v4287 = vadd.f32 %v4057, %v4286
        %v4288 = vpop.f32.mrb[0].mxu0
        %v4289 = vadd.f32 %v4053, %v4288
        %v4290 = vpop.f32.mrb[0].mxu0
        %v4291 = vadd.f32 %v4057, %v4290
        %4292 = vmatprep.mubr.bf16.mxu0 0
        %4293 = vmatmul.mubr.bf16.gmra.mrb[0].mxu0 %v4011
        %v4294 = vpop.f32.mrb[0].mxu0
        %v4295 = vadd.f32 %v4053, %v4294
        %v4296 = vpop.f32.mrb[0].mxu0
        %v4297 = vadd.f32 %v4057, %v4296
        %v4298 = vpop.f32.mrb[0].mxu0
        %v4299 = vadd.f32 %v4053, %v4298
        %v4300 = vpop.f32.mrb[0].mxu0
        %v4301 = vadd.f32 %v4057, %v4300
        %4302 = vmatprep.mubr.bf16.mxu0 0
        %4303 = vmatmul.mubr.bf16.gmra.mrb[0].mxu0 %v4012
        %v4304 = vpop.f32.mrb[0].mxu0
        %v4305 = vadd.f32 %v4053, %v4304
        %v4306 = vpop.f32.mrb[0].mxu0
        %v4307 = vadd.f32 %v4057, %v4306
        %v4308 = vpop.f32.mrb[0].mxu0
        %v4309 = vadd.f32 %v4053, %v4308
        %v4310 = vpop.f32.mrb[0].mxu0
        %v4311 = vadd.f32 %v4057, %v4310
        %4312 = vmatprep.mubr.bf16.mxu0 0
        %4313 = vmatmul.mubr.bf16.gmra.mrb[0].mxu0 %v4013
        %v4314 = vpop.f32.mrb[0].mxu0
        %v4315 = vadd.f32 %v4053, %v4314
        %v4316 = vpop.f32.mrb[0].mxu0
        %v4317 = vadd.f32 %v4057, %v4316
        %v4318 = vpop.f32.mrb[0].mxu0
        %v4319 = vadd.f32 %v4053, %v4318
        %v4320 = vpop.f32.mrb[0].mxu0
        %v4321 = vadd.f32 %v4057, %v4320
        %4322 = vmatprep.mubr.bf16.mxu0 0
        %4323 = vmatmul.mubr.bf16.gmra.mrb[0].mxu0 %v4014
        %v4324 = vpop.f32.mrb[0].mxu0
        %v4325 = vadd.f32 %v4053, %v4324
        %v4326 = vpop.f32.mrb[0].mxu0
        %v4327 = vadd.f32 %v4057, %v4326
        %v4328 = vpop.f32.mrb[0].mxu0
        %v4329 = vadd.f32 %v4053, %v4328
        %v4330 = vpop.f32.mrb[0].mxu0
        %v4331 = vadd.f32 %v4057, %v4330
        %4332 = vmatprep.mubr.bf16.mxu0 0
        %4333 = vmatmul.mubr.bf16.gmra.mrb[0].mxu0 %v4015
        %v4334 = vpop.f32.mrb[0].mxu0
        %v4335 = vadd.f32 %v4053, %v4334
        %v4336 = vpop.f32.mrb[0].mxu0
        %v4337 = vadd.f32 %v4057, %v4336
        %v4338 = vpop.f32.mrb[0].mxu0
        %v4339 = vadd.f32 %v4053, %v4338
        %v4340 = vpop.f32.mrb[0].mxu0
        %v4341 = vadd.f32 %v4057, %v4340
        %4342 = vdwg.mxu0
        %4343 = vmatprep.subr.bf16.mxu0 %v4169
        %4344 = vmatpush1.bf16.msra.mxu0 %v4168
        %4345 = vmatprep.subr.bf16.mxu0 %v4173
        %4346 = vmatpush1.bf16.msra.mxu0 %v4172
        %4347 = vmatprep.subr.bf16.mxu0 %v4177
        %4348 = vmatpush1.bf16.msra.mxu0 %v4176
        %4349 = vmatprep.subr.bf16.mxu0 %v4181
        %4350 = vmatpush1.bf16.msra.mxu0 %v4180
        %4351 = vmatprep.subr.bf16.mxu0 %v4185
        %4352 = vmatpush1.bf16.msra.mxu0 %v4184
        %4353 = vmatprep.subr.bf16.mxu0 %v4189
        %4354 = vmatpush1.bf16.msra.mxu0 %v4188
        %4355 = vmatprep.subr.bf16.mxu0 %v4193
        %4356 = vmatpush1.bf16.msra.mxu0 %v4192
        %4357 = vmatprep.subr.bf16.mxu0 %v4197
        %4358 = vmatpush1.bf16.msra.mxu0 %v4196
        %4359 = vmatprep.subr.bf16.mxu0 0
        %4360 = vmatpush1.bf16.msra.mxu0 0
        %4361 = vmatprep.subr.bf16.mxu0 0
        %4362 = vmatpush1.bf16.msra.mxu0 0
        %4363 = vmatprep.subr.bf16.mxu0 0
        %4364 = vmatpush1.bf16.msra.mxu0 0
        %4365 = vmatprep.subr.bf16.mxu0 0
        %4366 = vmatpush1.bf16.msra.mxu0 0
        %4367 = vmatprep.subr.bf16.mxu0 0
        %4368 = vmatpush1.bf16.msra.mxu0 0
        %4369 = vmatprep.subr.bf16.mxu0 0
        %4370 = vmatpush1.bf16.msra.mxu0 0
        %4371 = vmatprep.subr.bf16.mxu0 0
        %4372 = vmatpush1.bf16.msra.mxu0 0
        %4373 = vmatprep.subr.bf16.mxu0 0
        %4374 = vmatpush1.bf16.msra.mxu0 0
        %4375 = vmatprep.mubr.bf16.mxu0 0
        %4376 = vmatmul.mubr.bf16.gmra.mrb[0].mxu0 %v4008
        %v4377 = vpop.f32.mrb[0].mxu0
        %v4378 = vadd.f32 %v4061, %v4377
        %v4379 = vpop.f32.mrb[0].mxu0
        %v4380 = vadd.f32 %v4065, %v4379
        %v4381 = vpop.f32.mrb[0].mxu0
        %v4382 = vadd.f32 %v4061, %v4381
        %v4383 = vpop.f32.mrb[0].mxu0
        %v4384 = vadd.f32 %v4065, %v4383
        %4385 = vmatprep.mubr.bf16.mxu0 0
        %4386 = vmatmul.mubr.bf16.gmra.mrb[0].mxu0 %v4009
        %v4387 = vpop.f32.mrb[0].mxu0
        %v4388 = vadd.f32 %v4061, %v4387
        %v4389 = vpop.f32.mrb[0].mxu0
        %v4390 = vadd.f32 %v4065, %v4389
        %v4391 = vpop.f32.mrb[0].mxu0
        %v4392 = vadd.f32 %v4061, %v4391
        %v4393 = vpop.f32.mrb[0].mxu0
        %v4394 = vadd.f32 %v4065, %v4393
        %4395 = vmatprep.mubr.bf16.mxu0 0
        %4396 = vmatmul.mubr.bf16.gmra.mrb[0].mxu0 %v4010
        %v4397 = vpop.f32.mrb[0].mxu0
        %v4398 = vadd.f32 %v4061, %v4397
        %v4399 = vpop.f32.mrb[0].mxu0
        %v4400 = vadd.f32 %v4065, %v4399
        %v4401 = vpop.f32.mrb[0].mxu0
        %v4402 = vadd.f32 %v4061, %v4401
        %v4403 = vpop.f32.mrb[0].mxu0
        %v4404 = vadd.f32 %v4065, %v4403
        %4405 = vmatprep.mubr.bf16.mxu0 0
        %4406 = vmatmul.mubr.bf16.gmra.mrb[0].mxu0 %v4011
        %v4407 = vpop.f32.mrb[0].mxu0
        %v4408 = vadd.f32 %v4061, %v4407
        %v4409 = vpop.f32.mrb[0].mxu0
        %v4410 = vadd.f32 %v4065, %v4409
        %v4411 = vpop.f32.mrb[0].mxu0
        %v4412 = vadd.f32 %v4061, %v4411
        %v4413 = vpop.f32.mrb[0].mxu0
        %v4414 = vadd.f32 %v4065, %v4413
        %4415 = vmatprep.mubr.bf16.mxu0 0
        %4416 = vmatmul.mubr.bf16.gmra.mrb[0].mxu0 %v4012
        %v4417 = vpop.f32.mrb[0].mxu0
        %v4418 = vadd.f32 %v4061, %v4417
        %v4419 = vpop.f32.mrb[0].mxu0
        %v4420 = vadd.f32 %v4065, %v4419
        %v4421 = vpop.f32.mrb[0].mxu0
        %v4422 = vadd.f32 %v4061, %v4421
        %v4423 = vpop.f32.mrb[0].mxu0
        %v4424 = vadd.f32 %v4065, %v4423
        %4425 = vmatprep.mubr.bf16.mxu0 0
        %4426 = vmatmul.mubr.bf16.gmra.mrb[0].mxu0 %v4013
        %v4427 = vpop.f32.mrb[0].mxu0
        %v4428 = vadd.f32 %v4061, %v4427
        %v4429 = vpop.f32.mrb[0].mxu0
        %v4430 = vadd.f32 %v4065, %v4429
        %v4431 = vpop.f32.mrb[0].mxu0
        %v4432 = vadd.f32 %v4061, %v4431
        %v4433 = vpop.f32.mrb[0].mxu0
        %v4434 = vadd.f32 %v4065, %v4433
        %4435 = vmatprep.mubr.bf16.mxu0 0
        %4436 = vmatmul.mubr.bf16.gmra.mrb[0].mxu0 %v4014
        %v4437 = vpop.f32.mrb[0].mxu0
        %v4438 = vadd.f32 %v4061, %v4437
        %v4439 = vpop.f32.mrb[0].mxu0
        %v4440 = vadd.f32 %v4065, %v4439
        %v4441 = vpop.f32.mrb[0].mxu0
        %v4442 = vadd.f32 %v4061, %v4441
        %v4443 = vpop.f32.mrb[0].mxu0
        %v4444 = vadd.f32 %v4065, %v4443
        %4445 = vmatprep.mubr.bf16.mxu0 0
        %4446 = vmatmul.mubr.bf16.gmra.mrb[0].mxu0 %v4015
        %v4447 = vpop.f32.mrb[0].mxu0
        %v4448 = vadd.f32 %v4061, %v4447
        %v4449 = vpop.f32.mrb[0].mxu0
        %v4450 = vadd.f32 %v4065, %v4449
        %v4451 = vpop.f32.mrb[0].mxu0
        %v4452 = vadd.f32 %v4061, %v4451
        %v4453 = vpop.f32.mrb[0].mxu0
        %v4454 = vadd.f32 %v4065, %v4453
        %4455 = vdwg.mxu0
        %v4456 = vmax.f32 %v4265, 0.0
        %v4457 = vmax.f32 %v4267, 0.0
        %v4458 = vmax.f32 %v4378, 0.0
        %v4459 = vmax.f32 %v4380, 0.0
        %v4460 = vmax.f32 %v4269, 0.0
        %v4461 = vmax.f32 %v4271, 0.0
        %v4462 = vmax.f32 %v4382, 0.0
        %v4463 = vmax.f32 %v4384, 0.0
        %v4464 = vmax.f32 %v4275, 0.0
        %v4465 = vmax.f32 %v4277, 0.0
        %v4466 = vmax.f32 %v4388, 0.0
        %v4467 = vmax.f32 %v4390, 0.0
        %v4468 = vmax.f32 %v4279, 0.0
        %v4469 = vmax.f32 %v4281, 0.0
        %v4470 = vmax.f32 %v4392, 0.0
        %v4471 = vmax.f32 %v4394, 0.0
        %v4472 = vmax.f32 %v4285, 0.0
        %v4473 = vmax.f32 %v4287, 0.0
        %v4474 = vmax.f32 %v4398, 0.0
        %v4475 = vmax.f32 %v4400, 0.0
        %v4476 = vmax.f32 %v4289, 0.0
        %v4477 = vmax.f32 %v4291, 0.0
        %v4478 = vmax.f32 %v4402, 0.0
        %v4479 = vmax.f32 %v4404, 0.0
        %v4480 = vmax.f32 %v4295, 0.0
        %v4481 = vmax.f32 %v4297, 0.0
        %v4482 = vmax.f32 %v4408, 0.0
        %v4483 = vmax.f32 %v4410, 0.0
        %v4484 = vmax.f32 %v4299, 0.0
        %v4485 = vmax.f32 %v4301, 0.0
        %v4486 = vmax.f32 %v4412, 0.0
        %v4487 = vmax.f32 %v4414, 0.0
        %v4488 = vmax.f32 %v4305, 0.0
        %v4489 = vmax.f32 %v4307, 0.0
        %v4490 = vmax.f32 %v4418, 0.0
        %v4491 = vmax.f32 %v4420, 0.0
        %v4492 = vmax.f32 %v4309, 0.0
        %v4493 = vmax.f32 %v4311, 0.0
        %v4494 = vmax.f32 %v4422, 0.0
        %v4495 = vmax.f32 %v4424, 0.0
        %v4496 = vmax.f32 %v4315, 0.0
        %v4497 = vmax.f32 %v4317, 0.0
        %v4498 = vmax.f32 %v4428, 0.0
        %v4499 = vmax.f32 %v4430, 0.0
        %v4500 = vmax.f32 %v4319, 0.0
        %v4501 = vmax.f32 %v4321, 0.0
        %v4502 = vmax.f32 %v4432, 0.0
        %v4503 = vmax.f32 %v4434, 0.0
        %v4504 = vmax.f32 %v4325, 0.0
        %v4505 = vmax.f32 %v4327, 0.0
        %v4506 = vmax.f32 %v4438, 0.0
        %v4507 = vmax.f32 %v4440, 0.0
        %v4508 = vmax.f32 %v4329, 0.0
        %v4509 = vmax.f32 %v4331, 0.0
        %v4510 = vmax.f32 %v4442, 0.0
        %v4511 = vmax.f32 %v4444, 0.0
        %v4512 = vmax.f32 %v4335, 0.0
        %v4513 = vmax.f32 %v4337, 0.0
        %v4514 = vmax.f32 %v4448, 0.0
        %v4515 = vmax.f32 %v4450, 0.0
        %v4516 = vmax.f32 %v4339, 0.0
        %v4517 = vmax.f32 %v4341, 0.0
        %v4518 = vmax.f32 %v4452, 0.0
        %v4519 = vmax.f32 %v4454, 0.0
        %v4520 = vpack.c.bf16 %v4460, %v4456
        %v4521 = vpack.c.bf16 %v4461, %v4457
        %v4522 = vpack.c.bf16 %v4462, %v4458
        %v4523 = vpack.c.bf16 %v4463, %v4459
        %v4524 = vpack.c.bf16 %v4468, %v4464
        %v4525 = vpack.c.bf16 %v4469, %v4465
        %v4526 = vpack.c.bf16 %v4470, %v4466
        %v4527 = vpack.c.bf16 %v4471, %v4467
        %v4528 = vpack.c.bf16 %v4476, %v4472
        %v4529 = vpack.c.bf16 %v4477, %v4473
        %v4530 = vpack.c.bf16 %v4478, %v4474
        %v4531 = vpack.c.bf16 %v4479, %v4475
        %v4532 = vpack.c.bf16 %v4484, %v4480
        %v4533 = vpack.c.bf16 %v4485, %v4481
        %v4534 = vpack.c.bf16 %v4486, %v4482
        %v4535 = vpack.c.bf16 %v4487, %v4483
        %v4536 = vpack.c.bf16 %v4492, %v4488
        %v4537 = vpack.c.bf16 %v4493, %v4489
        %v4538 = vpack.c.bf16 %v4494, %v4490
        %v4539 = vpack.c.bf16 %v4495, %v4491
        %v4540 = vpack.c.bf16 %v4500, %v4496
        %v4541 = vpack.c.bf16 %v4501, %v4497
        %v4542 = vpack.c.bf16 %v4502, %v4498
        %v4543 = vpack.c.bf16 %v4503, %v4499
        %v4544 = vpack.c.bf16 %v4508, %v4504
        %v4545 = vpack.c.bf16 %v4509, %v4505
        %v4546 = vpack.c.bf16 %v4510, %v4506
        %v4547 = vpack.c.bf16 %v4511, %v4507
        %v4548 = vpack.c.bf16 %v4516, %v4512
        %v4549 = vpack.c.bf16 %v4517, %v4513
        %v4550 = vpack.c.bf16 %v4518, %v4514
        %v4551 = vpack.c.bf16 %v4519, %v4515
        %v4552 = vld [vmem:[#allocation12] sm:$0xf]
        %v4553 = vld [vmem:[#allocation12 + $0x4] sm:$0xf]
        %v4554 = vld [vmem:[#allocation12 + $0x8] sm:$0xf]
        %v4555 = vld [vmem:[#allocation12 + $0xc] sm:$0xf]
        %v4556 = vld [vmem:[#allocation12 + $0x10] sm:$0xf]
        %v4557 = vld [vmem:[#allocation12 + $0x14] sm:$0xf]
        %v4558 = vld [vmem:[#allocation12 + $0x18] sm:$0xf]
        %v4559 = vld [vmem:[#allocation12 + $0x1c] sm:$0xf]
        %v4560 = vld [vmem:[#allocation12 + $0x20] sm:$0xf]
        %v4561 = vld [vmem:[#allocation12 + $0x24] sm:$0xf]
        %v4562 = vld [vmem:[#allocation12 + $0x28] sm:$0xf]
        %v4563 = vld [vmem:[#allocation12 + $0x2c] sm:$0xf]
        %v4564 = vld [vmem:[#allocation12 + $0x30] sm:$0xf]
        %v4565 = vld [vmem:[#allocation12 + $0x34] sm:$0xf]
        %v4566 = vld [vmem:[#allocation12 + $0x38] sm:$0xf]
        %v4567 = vld [vmem:[#allocation12 + $0x3c] sm:$0xf]
        %v4568 = vld [vmem:[#allocation12 + $0x40] sm:$0xf]
        %v4569 = vld [vmem:[#allocation12 + $0x44] sm:$0xf]
        %v4570 = vld [vmem:[#allocation12 + $0x48] sm:$0xf]
        %v4571 = vld [vmem:[#allocation12 + $0x4c] sm:$0xf]
        %v4572 = vld [vmem:[#allocation12 + $0x50] sm:$0xf]
        %v4573 = vld [vmem:[#allocation12 + $0x54] sm:$0xf]
        %v4574 = vld [vmem:[#allocation12 + $0x58] sm:$0xf]
        %v4575 = vld [vmem:[#allocation12 + $0x5c] sm:$0xf]
        %v4576 = vld [vmem:[#allocation12 + $0x60] sm:$0xf]
        %v4577 = vld [vmem:[#allocation12 + $0x64] sm:$0xf]
        %v4578 = vld [vmem:[#allocation12 + $0x68] sm:$0xf]
        %v4579 = vld [vmem:[#allocation12 + $0x6c] sm:$0xf]
        %v4580 = vld [vmem:[#allocation12 + $0x70] sm:$0xf]
        %v4581 = vld [vmem:[#allocation12 + $0x74] sm:$0xf]
        %v4582 = vld [vmem:[#allocation12 + $0x78] sm:$0xf]
        %v4583 = vld [vmem:[#allocation12 + $0x7c] sm:$0xf]
        %v4584 = vld [vmem:[#allocation12 + $0x80] sm:$0xf]
        %v4585 = vld [vmem:[#allocation12 + $0x84] sm:$0xf]
        %v4586 = vld [vmem:[#allocation12 + $0x88] sm:$0xf]
        %v4587 = vld [vmem:[#allocation12 + $0x8c] sm:$0xf]
        %v4588 = vld [vmem:[#allocation12 + $0x90] sm:$0xf]
        %v4589 = vld [vmem:[#allocation12 + $0x94] sm:$0xf]
        %v4590 = vld [vmem:[#allocation12 + $0x98] sm:$0xf]
        %v4591 = vld [vmem:[#allocation12 + $0x9c] sm:$0xf]
        %v4592 = vld [vmem:[#allocation12 + $0xa0] sm:$0xf]
        %v4593 = vld [vmem:[#allocation12 + $0xa4] sm:$0xf]
        %v4594 = vld [vmem:[#allocation12 + $0xa8] sm:$0xf]
        %v4595 = vld [vmem:[#allocation12 + $0xac] sm:$0xf]
        %v4596 = vld [vmem:[#allocation12 + $0xb0] sm:$0xf]
        %v4597 = vld [vmem:[#allocation12 + $0xb4] sm:$0xf]
        %v4598 = vld [vmem:[#allocation12 + $0xb8] sm:$0xf]
        %v4599 = vld [vmem:[#allocation12 + $0xbc] sm:$0xf]
        %v4600 = vld [vmem:[#allocation12 + $0xc0] sm:$0xf]
        %v4601 = vld [vmem:[#allocation12 + $0xc4] sm:$0xf]
        %v4602 = vld [vmem:[#allocation12 + $0xc8] sm:$0xf]
        %v4603 = vld [vmem:[#allocation12 + $0xcc] sm:$0xf]
        %v4604 = vld [vmem:[#allocation12 + $0xd0] sm:$0xf]
        %v4605 = vld [vmem:[#allocation12 + $0xd4] sm:$0xf]
        %v4606 = vld [vmem:[#allocation12 + $0xd8] sm:$0xf]
        %v4607 = vld [vmem:[#allocation12 + $0xdc] sm:$0xf]
        %v4608 = vld [vmem:[#allocation12 + $0xe0] sm:$0xf]
        %v4609 = vld [vmem:[#allocation12 + $0xe4] sm:$0xf]
        %v4610 = vld [vmem:[#allocation12 + $0xe8] sm:$0xf]
        %v4611 = vld [vmem:[#allocation12 + $0xec] sm:$0xf]
        %v4612 = vld [vmem:[#allocation12 + $0xf0] sm:$0xf]
        %v4613 = vld [vmem:[#allocation12 + $0xf4] sm:$0xf]
        %v4614 = vld [vmem:[#allocation12 + $0xf8] sm:$0xf]
        %v4615 = vld [vmem:[#allocation12 + $0xfc] sm:$0xf]
        %v4616 = vld [vmem:[%s12] sm:$0x1]
        %v4618 = vlaneseq
        %v4619 = vshrl.u32 %v4618, 7
        %v4620 = vsub.s32 0, %v4619
        %v4621 = vrot.slane %v4616, %v4620
        %v4687 = vunpack.c.l.b16 %v4552
        %v4688 = vunpack.c.l.b16 %v4553
        %v4689 = vunpack.c.l.b16 %v4554
        %v4690 = vunpack.c.l.b16 %v4555
        %v4691 = vunpack.c.l.b16 %v4556
        %v4692 = vunpack.c.l.b16 %v4557
        %v4693 = vunpack.c.l.b16 %v4558
        %v4694 = vunpack.c.l.b16 %v4559
        %v4695 = vunpack.c.l.b16 %v4560
        %v4696 = vunpack.c.l.b16 %v4561
        %v4697 = vunpack.c.l.b16 %v4562
        %v4698 = vunpack.c.l.b16 %v4563
        %v4699 = vunpack.c.l.b16 %v4564
        %v4700 = vunpack.c.l.b16 %v4565
        %v4701 = vunpack.c.l.b16 %v4566
        %v4702 = vunpack.c.l.b16 %v4567
        %v4703 = vunpack.c.l.b16 %v4568
        %v4704 = vunpack.c.l.b16 %v4569
        %v4705 = vunpack.c.l.b16 %v4570
        %v4706 = vunpack.c.l.b16 %v4571
        %v4707 = vunpack.c.l.b16 %v4572
        %v4708 = vunpack.c.l.b16 %v4573
        %v4709 = vunpack.c.l.b16 %v4574
        %v4710 = vunpack.c.l.b16 %v4575
        %v4711 = vunpack.c.l.b16 %v4576
        %v4712 = vunpack.c.l.b16 %v4577
        %v4713 = vunpack.c.l.b16 %v4578
        %v4714 = vunpack.c.l.b16 %v4579
        %v4715 = vunpack.c.l.b16 %v4580
        %v4716 = vunpack.c.l.b16 %v4581
        %v4717 = vunpack.c.l.b16 %v4582
        %v4718 = vunpack.c.l.b16 %v4583
        %v4719 = vunpack.c.l.b16 %v4584
        %v4720 = vunpack.c.l.b16 %v4585
        %v4721 = vunpack.c.l.b16 %v4586
        %v4722 = vunpack.c.l.b16 %v4587
        %v4723 = vunpack.c.l.b16 %v4588
        %v4724 = vunpack.c.l.b16 %v4589
        %v4725 = vunpack.c.l.b16 %v4590
        %v4726 = vunpack.c.l.b16 %v4591
        %v4727 = vunpack.c.l.b16 %v4592
        %v4728 = vunpack.c.l.b16 %v4593
        %v4729 = vunpack.c.l.b16 %v4594
        %v4730 = vunpack.c.l.b16 %v4595
        %v4731 = vunpack.c.l.b16 %v4596
        %v4732 = vunpack.c.l.b16 %v4597
        %v4733 = vunpack.c.l.b16 %v4598
        %v4734 = vunpack.c.l.b16 %v4599
        %v4735 = vunpack.c.l.b16 %v4600
        %v4736 = vunpack.c.l.b16 %v4601
        %v4737 = vunpack.c.l.b16 %v4602
        %v4738 = vunpack.c.l.b16 %v4603
        %v4739 = vunpack.c.l.b16 %v4604
        %v4740 = vunpack.c.l.b16 %v4605
        %v4741 = vunpack.c.l.b16 %v4606
        %v4742 = vunpack.c.l.b16 %v4607
        %v4743 = vunpack.c.l.b16 %v4608
        %v4744 = vunpack.c.l.b16 %v4609
        %v4745 = vunpack.c.l.b16 %v4610
        %v4746 = vunpack.c.l.b16 %v4611
        %v4747 = vunpack.c.l.b16 %v4612
        %v4748 = vunpack.c.l.b16 %v4613
        %v4749 = vunpack.c.l.b16 %v4614
        %v4750 = vunpack.c.l.b16 %v4615
        %v4751 = vpack.c.b16 %v4688, %v4687
        %v4752 = vpack.c.b16 %v4690, %v4689
        %v4753 = vpack.c.b16 %v4692, %v4691
        %v4754 = vpack.c.b16 %v4694, %v4693
        %v4755 = vpack.c.b16 %v4696, %v4695
        %v4756 = vpack.c.b16 %v4698, %v4697
        %v4757 = vpack.c.b16 %v4700, %v4699
        %v4758 = vpack.c.b16 %v4702, %v4701
        %v4759 = vpack.c.b16 %v4704, %v4703
        %v4760 = vpack.c.b16 %v4706, %v4705
        %v4761 = vpack.c.b16 %v4708, %v4707
        %v4762 = vpack.c.b16 %v4710, %v4709
        %v4763 = vpack.c.b16 %v4712, %v4711
        %v4764 = vpack.c.b16 %v4714, %v4713
        %v4765 = vpack.c.b16 %v4716, %v4715
        %v4766 = vpack.c.b16 %v4718, %v4717
        %v4767 = vpack.c.b16 %v4720, %v4719
        %v4768 = vpack.c.b16 %v4722, %v4721
        %v4769 = vpack.c.b16 %v4724, %v4723
        %v4770 = vpack.c.b16 %v4726, %v4725
        %v4771 = vpack.c.b16 %v4728, %v4727
        %v4772 = vpack.c.b16 %v4730, %v4729
        %v4773 = vpack.c.b16 %v4732, %v4731
        %v4774 = vpack.c.b16 %v4734, %v4733
        %v4775 = vpack.c.b16 %v4736, %v4735
        %v4776 = vpack.c.b16 %v4738, %v4737
        %v4777 = vpack.c.b16 %v4740, %v4739
        %v4778 = vpack.c.b16 %v4742, %v4741
        %v4779 = vpack.c.b16 %v4744, %v4743
        %v4780 = vpack.c.b16 %v4746, %v4745
        %v4781 = vpack.c.b16 %v4748, %v4747
        %v4782 = vpack.c.b16 %v4750, %v4749
        %4815 = vmatprep.subr.bf16.mxu0 0
        %4816 = vmatpush1.bf16.msra.mxu0 %v4751
        %4817 = vmatprep.subr.bf16.mxu0 0
        %4818 = vmatpush1.bf16.msra.mxu0 %v4752
        %4819 = vmatprep.subr.bf16.mxu0 0
        %4820 = vmatpush1.bf16.msra.mxu0 %v4753
        %4821 = vmatprep.subr.bf16.mxu0 0
        %4822 = vmatpush1.bf16.msra.mxu0 %v4754
        %4823 = vmatprep.subr.bf16.mxu0 0
        %4824 = vmatpush1.bf16.msra.mxu0 %v4755
        %4825 = vmatprep.subr.bf16.mxu0 0
        %4826 = vmatpush1.bf16.msra.mxu0 %v4756
        %4827 = vmatprep.subr.bf16.mxu0 0
        %4828 = vmatpush1.bf16.msra.mxu0 %v4757
        %4829 = vmatprep.subr.bf16.mxu0 0
        %4830 = vmatpush1.bf16.msra.mxu0 %v4758
        %4831 = vmatprep.subr.bf16.mxu0 0
        %4832 = vmatpush1.bf16.msra.mxu0 %v4759
        %4833 = vmatprep.subr.bf16.mxu0 0
        %4834 = vmatpush1.bf16.msra.mxu0 %v4760
        %4835 = vmatprep.subr.bf16.mxu0 0
        %4836 = vmatpush1.bf16.msra.mxu0 %v4761
        %4837 = vmatprep.subr.bf16.mxu0 0
        %4838 = vmatpush1.bf16.msra.mxu0 %v4762
        %4839 = vmatprep.subr.bf16.mxu0 0
        %4840 = vmatpush1.bf16.msra.mxu0 %v4763
        %4841 = vmatprep.subr.bf16.mxu0 0
        %4842 = vmatpush1.bf16.msra.mxu0 %v4764
        %4843 = vmatprep.subr.bf16.mxu0 0
        %4844 = vmatpush1.bf16.msra.mxu0 %v4765
        %4845 = vmatprep.subr.bf16.mxu0 0
        %4846 = vmatpush1.bf16.msra.mxu0 %v4766
        %4847 = vmatprep.mubr.bf16.mxu0 %v4521
        %4848 = vmatmul.mubr.bf16.gmra.mrb[0].mxu0 %v4520
        %v4849 = vpop.f32.mrb[0].mxu0
        %v4850 = vadd.f32 %v4621, %v4849
        %v4851 = vpop.f32.mrb[0].mxu0
        %v4852 = vpop.f32.mrb[0].mxu0
        %v4853 = vadd.f32 %v4621, %v4852
        %v4854 = vpop.f32.mrb[0].mxu0
        %4855 = vmatprep.mubr.bf16.mxu0 %v4525
        %4856 = vmatmul.mubr.bf16.gmra.mrb[0].mxu0 %v4524
        %v4857 = vpop.f32.mrb[0].mxu0
        %v4858 = vadd.f32 %v4621, %v4857
        %v4859 = vpop.f32.mrb[0].mxu0
        %v4860 = vpop.f32.mrb[0].mxu0
        %v4861 = vadd.f32 %v4621, %v4860
        %v4862 = vpop.f32.mrb[0].mxu0
        %4863 = vmatprep.mubr.bf16.mxu0 %v4529
        %4864 = vmatmul.mubr.bf16.gmra.mrb[0].mxu0 %v4528
        %v4865 = vpop.f32.mrb[0].mxu0
        %v4866 = vadd.f32 %v4621, %v4865
        %v4867 = vpop.f32.mrb[0].mxu0
        %v4868 = vpop.f32.mrb[0].mxu0
        %v4869 = vadd.f32 %v4621, %v4868
        %v4870 = vpop.f32.mrb[0].mxu0
        %4871 = vmatprep.mubr.bf16.mxu0 %v4533
        %4872 = vmatmul.mubr.bf16.gmra.mrb[0].mxu0 %v4532
        %v4873 = vpop.f32.mrb[0].mxu0
        %v4874 = vadd.f32 %v4621, %v4873
        %v4875 = vpop.f32.mrb[0].mxu0
        %v4876 = vpop.f32.mrb[0].mxu0
        %v4877 = vadd.f32 %v4621, %v4876
        %v4878 = vpop.f32.mrb[0].mxu0
        %4879 = vmatprep.mubr.bf16.mxu0 %v4537
        %4880 = vmatmul.mubr.bf16.gmra.mrb[0].mxu0 %v4536
        %v4881 = vpop.f32.mrb[0].mxu0
        %v4882 = vadd.f32 %v4621, %v4881
        %v4883 = vpop.f32.mrb[0].mxu0
        %v4884 = vpop.f32.mrb[0].mxu0
        %v4885 = vadd.f32 %v4621, %v4884
        %v4886 = vpop.f32.mrb[0].mxu0
        %4887 = vmatprep.mubr.bf16.mxu0 %v4541
        %4888 = vmatmul.mubr.bf16.gmra.mrb[0].mxu0 %v4540
        %v4889 = vpop.f32.mrb[0].mxu0
        %v4890 = vadd.f32 %v4621, %v4889
        %v4891 = vpop.f32.mrb[0].mxu0
        %v4892 = vpop.f32.mrb[0].mxu0
        %v4893 = vadd.f32 %v4621, %v4892
        %v4894 = vpop.f32.mrb[0].mxu0
        %4895 = vmatprep.mubr.bf16.mxu0 %v4545
        %4896 = vmatmul.mubr.bf16.gmra.mrb[0].mxu0 %v4544
        %v4897 = vpop.f32.mrb[0].mxu0
        %v4898 = vadd.f32 %v4621, %v4897
        %v4899 = vpop.f32.mrb[0].mxu0
        %v4900 = vpop.f32.mrb[0].mxu0
        %v4901 = vadd.f32 %v4621, %v4900
        %v4902 = vpop.f32.mrb[0].mxu0
        %4903 = vmatprep.mubr.bf16.mxu0 %v4549
        %4904 = vmatmul.mubr.bf16.gmra.mrb[0].mxu0 %v4548
        %v4905 = vpop.f32.mrb[0].mxu0
        %v4906 = vadd.f32 %v4621, %v4905
        %v4907 = vpop.f32.mrb[0].mxu0
        %v4908 = vpop.f32.mrb[0].mxu0
        %v4909 = vadd.f32 %v4621, %v4908
        %v4910 = vpop.f32.mrb[0].mxu0
        %4911 = vdwg.mxu0
        %4912 = vmatprep.subr.bf16.mxu0 0
        %4913 = vmatpush1.bf16.msra.mxu0 %v4767
        %4914 = vmatprep.subr.bf16.mxu0 0
        %4915 = vmatpush1.bf16.msra.mxu0 %v4768
        %4916 = vmatprep.subr.bf16.mxu0 0
        %4917 = vmatpush1.bf16.msra.mxu0 %v4769
        %4918 = vmatprep.subr.bf16.mxu0 0
        %4919 = vmatpush1.bf16.msra.mxu0 %v4770
        %4920 = vmatprep.subr.bf16.mxu0 0
        %4921 = vmatpush1.bf16.msra.mxu0 %v4771
        %4922 = vmatprep.subr.bf16.mxu0 0
        %4923 = vmatpush1.bf16.msra.mxu0 %v4772
        %4924 = vmatprep.subr.bf16.mxu0 0
        %4925 = vmatpush1.bf16.msra.mxu0 %v4773
        %4926 = vmatprep.subr.bf16.mxu0 0
        %4927 = vmatpush1.bf16.msra.mxu0 %v4774
        %4928 = vmatprep.subr.bf16.mxu0 0
        %4929 = vmatpush1.bf16.msra.mxu0 %v4775
        %4930 = vmatprep.subr.bf16.mxu0 0
        %4931 = vmatpush1.bf16.msra.mxu0 %v4776
        %4932 = vmatprep.subr.bf16.mxu0 0
        %4933 = vmatpush1.bf16.msra.mxu0 %v4777
        %4934 = vmatprep.subr.bf16.mxu0 0
        %4935 = vmatpush1.bf16.msra.mxu0 %v4778
        %4936 = vmatprep.subr.bf16.mxu0 0
        %4937 = vmatpush1.bf16.msra.mxu0 %v4779
        %4938 = vmatprep.subr.bf16.mxu0 0
        %4939 = vmatpush1.bf16.msra.mxu0 %v4780
        %4940 = vmatprep.subr.bf16.mxu0 0
        %4941 = vmatpush1.bf16.msra.mxu0 %v4781
        %4942 = vmatprep.subr.bf16.mxu0 0
        %4943 = vmatpush1.bf16.msra.mxu0 %v4782
        %4944 = vmatprep.mubr.bf16.mxu0 %v4523
        %4945 = vmatmul.mubr.bf16.gmra.mrb[0].mxu0 %v4522
        %v4946 = vpop.f32.mrb[0].mxu0
        %v4947 = vadd.f32 %v4850, %v4946
        %v4948 = vpop.f32.mrb[0].mxu0
        %v4949 = vpop.f32.mrb[0].mxu0
        %v4950 = vadd.f32 %v4853, %v4949
        %v4951 = vpop.f32.mrb[0].mxu0
        %4952 = vmatprep.mubr.bf16.mxu0 %v4527
        %4953 = vmatmul.mubr.bf16.gmra.mrb[0].mxu0 %v4526
        %v4954 = vpop.f32.mrb[0].mxu0
        %v4955 = vadd.f32 %v4858, %v4954
        %v4956 = vpop.f32.mrb[0].mxu0
        %v4957 = vpop.f32.mrb[0].mxu0
        %v4958 = vadd.f32 %v4861, %v4957
        %v4959 = vpop.f32.mrb[0].mxu0
        %4960 = vmatprep.mubr.bf16.mxu0 %v4531
        %4961 = vmatmul.mubr.bf16.gmra.mrb[0].mxu0 %v4530
        %v4962 = vpop.f32.mrb[0].mxu0
        %v4963 = vadd.f32 %v4866, %v4962
        %v4964 = vpop.f32.mrb[0].mxu0
        %v4965 = vpop.f32.mrb[0].mxu0
        %v4966 = vadd.f32 %v4869, %v4965
        %v4967 = vpop.f32.mrb[0].mxu0
        %4968 = vmatprep.mubr.bf16.mxu0 %v4535
        %4969 = vmatmul.mubr.bf16.gmra.mrb[0].mxu0 %v4534
        %v4970 = vpop.f32.mrb[0].mxu0
        %v4971 = vadd.f32 %v4874, %v4970
        %v4972 = vpop.f32.mrb[0].mxu0
        %v4973 = vpop.f32.mrb[0].mxu0
        %v4974 = vadd.f32 %v4877, %v4973
        %v4975 = vpop.f32.mrb[0].mxu0
        %4976 = vmatprep.mubr.bf16.mxu0 %v4539
        %4977 = vmatmul.mubr.bf16.gmra.mrb[0].mxu0 %v4538
        %v4978 = vpop.f32.mrb[0].mxu0
        %v4979 = vadd.f32 %v4882, %v4978
        %v4980 = vpop.f32.mrb[0].mxu0
        %v4981 = vpop.f32.mrb[0].mxu0
        %v4982 = vadd.f32 %v4885, %v4981
        %v4983 = vpop.f32.mrb[0].mxu0
        %4984 = vmatprep.mubr.bf16.mxu0 %v4543
        %4985 = vmatmul.mubr.bf16.gmra.mrb[0].mxu0 %v4542
        %v4986 = vpop.f32.mrb[0].mxu0
        %v4987 = vadd.f32 %v4890, %v4986
        %v4988 = vpop.f32.mrb[0].mxu0
        %v4989 = vpop.f32.mrb[0].mxu0
        %v4990 = vadd.f32 %v4893, %v4989
        %v4991 = vpop.f32.mrb[0].mxu0
        %4992 = vmatprep.mubr.bf16.mxu0 %v4547
        %4993 = vmatmul.mubr.bf16.gmra.mrb[0].mxu0 %v4546
        %v4994 = vpop.f32.mrb[0].mxu0
        %v4995 = vadd.f32 %v4898, %v4994
        %v4996 = vpop.f32.mrb[0].mxu0
        %v4997 = vpop.f32.mrb[0].mxu0
        %v4998 = vadd.f32 %v4901, %v4997
        %v4999 = vpop.f32.mrb[0].mxu0
        %5000 = vmatprep.mubr.bf16.mxu0 %v4551
        %5001 = vmatmul.mubr.bf16.gmra.mrb[0].mxu0 %v4550
        %v5002 = vpop.f32.mrb[0].mxu0
        %v5003 = vadd.f32 %v4906, %v5002
        %v5004 = vpop.f32.mrb[0].mxu0
        %v5005 = vpop.f32.mrb[0].mxu0
        %v5006 = vadd.f32 %v4909, %v5005
        %v5007 = vpop.f32.mrb[0].mxu0
        %5008 = vdwg.mxu0
        %v5009 = vadd.f32 %v3770, %v4947
        %v5010 = vadd.f32 %v3771, %v4950
        %v5011 = vadd.f32 %v3772, %v4955
        %v5012 = vadd.f32 %v3773, %v4958
        %v5013 = vadd.f32 %v3774, %v4963
        %v5014 = vadd.f32 %v3775, %v4966
        %v5015 = vadd.f32 %v3776, %v4971
        %v5016 = vadd.f32 %v3777, %v4974
        %v5017 = vadd.f32 %v3778, %v4979
        %v5018 = vadd.f32 %v3779, %v4982
        %v5019 = vadd.f32 %v3780, %v4987
        %v5020 = vadd.f32 %v3781, %v4990
        %v5021 = vadd.f32 %v3782, %v4995
        %v5022 = vadd.f32 %v3783, %v4998
        %v5023 = vadd.f32 %v3784, %v5003
        %v5024 = vadd.f32 %v3785, %v5006
        %5025 = vst [vmem:[%s531] sm:$0xff] %v5009
        %5026 = vst [vmem:[%s531 + $0x8] sm:$0xff] %v5010
        %5027 = vst [vmem:[%s531 + $0x10] sm:$0xff] %v5011
        %5028 = vst [vmem:[%s531 + $0x18] sm:$0xff] %v5012
        %5029 = vst [vmem:[%s531 + $0x20] sm:$0xff] %v5013
        %5030 = vst [vmem:[%s531 + $0x28] sm:$0xff] %v5014
        %5031 = vst [vmem:[%s531 + $0x30] sm:$0xff] %v5015
        %5032 = vst [vmem:[%s531 + $0x38] sm:$0xff] %v5016
        %5033 = vst [vmem:[%s531 + $0x40] sm:$0xff] %v5017
        %5034 = vst [vmem:[%s531 + $0x48] sm:$0xff] %v5018
        %5035 = vst [vmem:[%s531 + $0x50] sm:$0xff] %v5019
        %5036 = vst [vmem:[%s531 + $0x58] sm:$0xff] %v5020
        %5037 = vst [vmem:[%s531 + $0x60] sm:$0xff] %v5021
        %5038 = vst [vmem:[%s531 + $0x68] sm:$0xff] %v5022
        %5039 = vst [vmem:[%s531 + $0x70] sm:$0xff] %v5023
        %5040 = vst [vmem:[%s531 + $0x78] sm:$0xff] %v5024
        %s5041 = sand.u32 %s319, 1
        %s5042 = scalar_lea.sflag [#allocation5], %s5041
        %s5043 = sand.u32 %s319, 1
        %s5044 = smul.addr %s5043, 128
        %s5045 = scalar_lea.vmem [#allocation14], %s5044
        // Predicated region
        $region97: #{transformer_block.1} parent=71 // pred_check
          %p5046 = pneg %p329
        $region98: #{transformer_block.1} parent=71 // pred_check_branch
          %5048 = sbr.rel (%p5046) target = $region100
        $region99: #{transformer_block.1} parent=71 // pred_region
          %s5050 = ssub.s32 2048, 2048
          %5051 = vsyncadd %s5042, %s5050
          %s5052 = smul.addr %s33, 16
          %s5053 = smul.addr %s5052, 128
          %s5054 = scalar_lea.hbm %s13, %s5053
          %s5055 = sshll.u32 %s5045, 4
          %s5056 = int_to_ptr.vmem [resolvable:$true] %s5055
          %5061 = dma.vmem_to_hbm [thread:$0]  %s5056, 2048, %s5054, %s5042, 128, 128, 8
        $region100: #{transformer_block.1} parent=71 // pred_fallthru
          _
      $region72: #{transformer_block.1} parent=5 // pred_fallthru
        _
      %p5062 = scmp.le.s32.totalorder 2, %s28
      // Predicated region
      $region101: #{transformer_block.1} parent=5 // pred_check
        %p5063 = pneg %p5062
      $region102: #{transformer_block.1} parent=5 // pred_check_branch
        %5065 = sbr.rel (%p5063) target = $region104
      $region103: #{transformer_block.1} parent=5 // pred_region
        %s5066 = ssub.s32 %s28, 2
        // Predicated region
        $region105: #{transformer_block.1} parent=103 // pred_check
          %p5067 = pneg %p335
        $region106: #{transformer_block.1} parent=103 // pred_check_branch
          %5069 = sbr.rel (%p5067) target = $region108
        $region107: #{transformer_block.1} parent=103 // pred_region
          %s5070 = sand.u32 %s320, 1
          %s5071 = scalar_lea.sflag [#allocation5], %s5070
          %s5072 = sand.u32 %s320, 1
          %s5073 = smul.addr %s5072, 128
          %s5074 = scalar_lea.vmem [#allocation14], %s5073
          %5075 = dma.done %s5071, 2048
        $region108: #{transformer_block.1} parent=103 // pred_fallthru
          _
      $region104: #{transformer_block.1} parent=5 // pred_fallthru
        _
    $region6: #{transformer_block.1} parent=1 // loop_footer
      %s32 = sadd.s32 1, %s28
    $region7: #{transformer_block.1} parent=1 // loop_footer_branch
      %27 = sbr.rel target = $region3
    $region8: #{transformer_block.1} parent=1 // loop_exit
      _
    %5076 = vsyncpa [#allocation4], 1
    %s5077 = scalar_lea.sflag [#allocation4], 1
    %5078 = vsyncpa %s5077, 1
    %5079 = vsyncpa [#allocation7], 1
    %5080 = vsyncpa [#allocation10], 1
    %5081 = vsyncpa [#allocation13], 1
    %5082 = vsyncpa [#allocation5], 1
    %s5083 = scalar_lea.sflag [#allocation5], 1
    %5084 = vsyncpa %s5083, 1

</llo_original>
